<compile_context>
chip_gen: v6e
topology: v6e:2x2x1
jax: 0.10.0
libtpu: 0.0.40
codegen_flags: <defaults>
</compile_context>

<pallas_src>
import math

import jax
import jax.numpy as jnp
import numpy as np
from jax.experimental import pallas as pl
from jax.experimental.pallas import tpu as pltpu

_LN_EPS = 1e-5                        # nn.LayerNorm default eps
_ATTN_SCALE = 1.0 / math.sqrt(64.0)   # ScaledDotProductAttention() default d_k=64


# ---------------------------------------------------------------------------
# Kernel
# ---------------------------------------------------------------------------
def _layernorm(x, gamma, beta):
    """LayerNorm over the last axis (gamma/beta shaped (1, D)), f32 math."""
    mean = jnp.mean(x, axis=-1, keepdims=True)
    var = jnp.mean(jnp.square(x - mean), axis=-1, keepdims=True)
    return (x - mean) * jax.lax.rsqrt(var + _LN_EPS) * gamma + beta


def _encoder_kernel(x_ref,
                    wq_ref, bq_ref, wk_ref, bk_ref, wv_ref, bv_ref,
                    wo_ref, bo_ref, g1_ref, beta1_ref,
                    w1_ref, bf1_ref, w2_ref, bf2_ref, g2_ref, beta2_ref,
                    out_ref, attn_ref):
    """One grid step = one (layer, batch-tile).

    x_ref:    (TB, S, D)   f32   batch tile (same block for every layer)
    w*_ref:   (1, ...)           this layer's weights (matmul weights bf16)
    out_ref:  (TB, S, D)   f32   final encoder output (written only for the
                                 last layer)
    attn_ref: (1, TB, H, S, S) f32  this layer's attention maps
    """
    TB, S, D = x_ref.shape
    H = attn_ref.shape[2]
    dk = wq_ref.shape[-1] // H
    dv = wv_ref.shape[-1] // H
    M = TB * S

    x = x_ref[...].astype(jnp.float32)            # (TB, S, D)
    xf = x.reshape(M, D)                          # batch folded into matmul M
    x16 = xf.astype(jnp.bfloat16)

    # --- Q/K projections on the whole (M, D) slab; bf16 in, f32 accumulate ---
    # 1/sqrt(64) score scale folded into q (bias included, matching PyTorch
    # which divides the full scores).
    q = (jnp.dot(x16, wq_ref[0], preferred_element_type=jnp.float32)
         + bq_ref[0]) * _ATTN_SCALE
    k = jnp.dot(x16, wk_ref[0], preferred_element_type=jnp.float32) + bk_ref[0]
    q3 = q.reshape(TB, S, H * dk)
    k3 = k.reshape(TB, S, H * dk)

    # --- per-head scores + softmax: observable for EVERY layer ---------------
    attn_heads = []
    for h in range(H):                            # static unrolled loop
        qh = q3[:, :, h * dk:(h + 1) * dk].astype(jnp.bfloat16)   # (TB, S, dk)
        kh = k3[:, :, h * dk:(h + 1) * dk].astype(jnp.bfloat16)
        s = jnp.einsum("bqd,bkd->bqk", qh, kh,
                       preferred_element_type=jnp.float32)        # (TB, S, S)
        s = s - jnp.max(s, axis=-1, keepdims=True)                # stable softmax
        e = jnp.exp(s)
        a = e * pl.reciprocal(jnp.sum(e, axis=-1, keepdims=True), approx=True)
        attn_ref[0, :, h] = a
        attn_heads.append(a)

    # --- everything past the attention maps is only observable for the LAST
    # layer (Encoder feeds the original input to every layer and returns only
    # the last layer's output) → gate the dead compute. ----------------------
    @pl.when(pl.program_id(0) == pl.num_programs(0) - 1)
    def _():
        v = jnp.dot(x16, wv_ref[0], preferred_element_type=jnp.float32) + bv_ref[0]
        v3 = v.reshape(TB, S, H * dv)
        wo = wo_ref[0]                                            # (H*dv, D) bf16

        # Per-head context, output projection accumulated per head (sublane
        # slice of wo) — no lane-axis concatenate needed.
        o = jnp.zeros((M, D), jnp.float32)
        for h in range(H):
            vh = v3[:, :, h * dv:(h + 1) * dv].astype(jnp.bfloat16)
            ctx = jnp.einsum("bqk,bkd->bqd",
                             attn_heads[h].astype(jnp.bfloat16), vh,
                             preferred_element_type=jnp.float32)  # (TB, S, dv)
            o = o + jnp.dot(ctx.reshape(M, dv).astype(jnp.bfloat16),
                            wo[h * dv:(h + 1) * dv, :],
                            preferred_element_type=jnp.float32)
        o = o + bo_ref[0]
        y = _layernorm(o + xf, g1_ref[0], beta1_ref[0])           # residual + LN1

        # position-wise FFN (1x1 convs == linears): Linear -> ReLU -> Linear
        hdn = jnp.maximum(
            jnp.dot(y.astype(jnp.bfloat16), w1_ref[0],
                    preferred_element_type=jnp.float32) + bf1_ref[0], 0.0)
        z = jnp.dot(hdn.astype(jnp.bfloat16), w2_ref[0],
                    preferred_element_type=jnp.float32) + bf2_ref[0]
        out_ref[...] = _layernorm(z + y, g2_ref[0], beta2_ref[0]).reshape(TB, S, D)


# ---------------------------------------------------------------------------
# Wrapper: whole Encoder in one pallas_call, grid over (layer, batch_tiles)
# ---------------------------------------------------------------------------
_WEIGHT_ORDER = ["wq", "bq", "wk", "bk", "wv", "bv", "wo", "bo",
                 "ln1_g", "ln1_b", "w1", "b1", "w2", "b2", "ln2_g", "ln2_b"]
_MATMUL_WEIGHTS = {"wq", "wk", "wv", "wo", "w1", "w2"}   # stored/streamed as bf16


def encoder_forward(x, p, n_heads, *, batch_tile=None):
    """x: (B, S, D) float32.  Returns (enc_outputs, [attn per layer])."""
    B, S, D = x.shape
    L = p["wq"].shape[0]
    H = n_heads
    TB = B if batch_tile is None else batch_tile
    assert B % TB == 0
    NB = B // TB

    # Matmul weights in bf16 (halves HBM/VMEM weight traffic, MXU bf16 path);
    # biases and LayerNorm affine params stay f32.
    weights = [p[n].astype(jnp.bfloat16) if n in _MATMUL_WEIGHTS else p[n]
               for n in _WEIGHT_ORDER]

    def _layer_spec(a):
        nd = a.ndim
        # One layer's weight slab, selected by the (outer) layer grid index.
        # Block index is constant across the inner batch axis -> no re-DMA.
        # NOTE(v7x, real sizes): single-buffer these specs / tile d_ff and set
        # an explicit 64 MiB-aware vmem_limit_bytes; unnecessary at toy sizes.
        return pl.BlockSpec((1,) + a.shape[1:],
                            lambda l, b, nd=nd: (l,) + (0,) * (nd - 1))

    in_specs = [pl.BlockSpec((TB, S, D), lambda l, b: (b, 0, 0))]
    in_specs += [_layer_spec(a) for a in weights]

    out_shape = (
        jax.ShapeDtypeStruct((B, S, D), jnp.float32),          # last layer only
        jax.ShapeDtypeStruct((L, B, H, S, S), jnp.float32),    # per-layer attn
    )
    out_specs = (
        # Depends only on the batch tile -> stays resident across layers and is
        # written back once (written by the kernel only at the last layer).
        pl.BlockSpec((TB, S, D), lambda l, b: (b, 0, 0)),
        pl.BlockSpec((1, TB, H, S, S), lambda l, b: (l, b, 0, 0, 0)),
    )

    out, attn = pl.pallas_call(
        _encoder_kernel,
        out_shape=out_shape,
        grid=(L, NB),                       # batch innermost: weights stay put
        in_specs=in_specs,
        out_specs=out_specs,
        compiler_params=pltpu.CompilerParams(
            # layer axis revisits the resident output block -> "arbitrary";
            # batch axis is independent -> "parallel" (v7x 2-TC split on B).
            dimension_semantics=("arbitrary", "parallel"),
            vmem_limit_bytes=32 * 1024 * 1024),
    )(x, *weights)

    # PyTorch Encoder returns the last layer's output plus the list of
    # per-layer attention maps.
    return out, [attn[l] for l in range(L)]


# ---------------------------------------------------------------------------
# Deterministic parameter init (weights stored pre-transposed for x @ W)
# ---------------------------------------------------------------------------
def init_params(key, n_layers, dim, n_heads, d_k, d_v, d_ff):
    ks = jax.random.split(key, 16)
    L = n_layers

    def nrm(k, shape, scale=0.1):
        return scale * jax.random.normal(k, shape, jnp.float32)

    return {
        # MultiHeadAttention
        "wq": nrm(ks[0], (L, dim, n_heads * d_k)),
        "bq": nrm(ks[1], (L, 1, n_heads * d_k)),
        "wk": nrm(ks[2], (L, dim, n_heads * d_k)),
        "bk": nrm(ks[3], (L, 1, n_heads * d_k)),
        "wv": nrm(ks[4], (L, dim, n_heads * d_v)),
        "bv": nrm(ks[5], (L, 1, n_heads * d_v)),
        "wo": nrm(ks[6], (L, n_heads * d_v, dim)),
        "bo": nrm(ks[7], (L, 1, dim)),
        "ln1_g": 1.0 + nrm(ks[8], (L, 1, dim)),
        "ln1_b": nrm(ks[9], (L, 1, dim)),
        # PoswiseFeedForwardNet (Conv1d kernel_size=1 == Linear)
        "w1": nrm(ks[10], (L, dim, d_ff)),
        "b1": nrm(ks[11], (L, 1, d_ff)),
        "w2": nrm(ks[12], (L, d_ff, dim)),
        "b2": nrm(ks[13], (L, 1, dim)),
        "ln2_g": 1.0 + nrm(ks[14], (L, 1, dim)),
        "ln2_b": nrm(ks[15], (L, 1, dim)),
    }


# ---------------------------------------------------------------------------
# Pure-JAX f32 reference (mirrors the PyTorch forward) for correctness check
# ---------------------------------------------------------------------------
def ref_forward(x, p, n_heads):
    L = p["wq"].shape[0]
    B, S, D = x.shape
    dk = p["wq"].shape[-1] // n_heads
    dv = p["wv"].shape[-1] // n_heads

    def layernorm(z, g, b):
        m = jnp.mean(z, -1, keepdims=True)
        v = jnp.mean((z - m) ** 2, -1, keepdims=True)
        return (z - m) / jnp.sqrt(v + _LN_EPS) * g + b

    attns, out = [], None
    for l in range(L):
        # every layer consumes the original x (as the PyTorch Encoder does)
        q = x @ p["wq"][l] + p["bq"][l]
        k = x @ p["wk"][l] + p["bk"][l]
        v = x @ p["wv"][l] + p["bv"][l]
        q = q.reshape(B, S, n_heads, dk).transpose(0, 2, 1, 3)
        k = k.reshape(B, S, n_heads, dk).transpose(0, 2, 1, 3)
        v = v.reshape(B, S, n_heads, dv).transpose(0, 2, 1, 3)
        sc = jnp.einsum("bhqd,bhkd->bhqk", q, k) * _ATTN_SCALE
        a = jax.nn.softmax(sc, axis=-1)
        attns.append(a)
        ctx = jnp.einsum("bhqk,bhkd->bhqd", a, v)
        ctx = ctx.transpose(0, 2, 1, 3).reshape(B, S, n_heads * dv)
        o = ctx @ p["wo"][l] + p["bo"][l]
        y = layernorm(o + x, p["ln1_g"][l], p["ln1_b"][l])
        h = jnp.maximum(y @ p["w1"][l] + p["b1"][l], 0.0)
        z = h @ p["w2"][l] + p["b2"][l]
        out = layernorm(z + y, p["ln2_g"][l], p["ln2_b"][l])
    return out, attns


# ---------------------------------------------------------------------------
if __name__ == "__main__":
    B, S, DIM = 2, 16, 32
    N_HEADS, D_K, D_V, D_FF, N_LAYERS = 4, 8, 8, 64, 2

    key = jax.random.PRNGKey(0)
    kx, kp = jax.random.split(key)
    x = jax.random.normal(kx, (B, S, DIM), jnp.float32)
    params = init_params(kp, N_LAYERS, DIM, N_HEADS, D_K, D_V, D_FF)

    out, attns = encoder_forward(x, params, N_HEADS)
    out = jax.block_until_ready(out)

    ref_out, ref_attns = ref_forward(x, params, N_HEADS)
    # bf16 matmul operands (f32 accumulation) -> loosened tolerance vs f32 ref.
    np.testing.assert_allclose(np.asarray(out), np.asarray(ref_out),
                               rtol=5e-2, atol=5e-2)
    for a, ra in zip(attns, ref_attns):
        np.testing.assert_allclose(np.asarray(a), np.asarray(ra),
                                   rtol=2e-2, atol=2e-2)

    print("KERNEL_OK")
</pallas_src>

<mosaic_0001>
module attributes {stable_mosaic.version = 11 : i64} {
  func.func @_encoder_kernel(%arg0: i32, %arg1: i32, %arg2: memref<2x16x32xf32, #tpu.memory_space<vmem>>, %arg3: memref<1x32x32xbf16, #tpu.memory_space<vmem>>, %arg4: memref<1x1x32xf32, #tpu.memory_space<vmem>>, %arg5: memref<1x32x32xbf16, #tpu.memory_space<vmem>>, %arg6: memref<1x1x32xf32, #tpu.memory_space<vmem>>, %arg7: memref<1x32x32xbf16, #tpu.memory_space<vmem>>, %arg8: memref<1x1x32xf32, #tpu.memory_space<vmem>>, %arg9: memref<1x32x32xbf16, #tpu.memory_space<vmem>>, %arg10: memref<1x1x32xf32, #tpu.memory_space<vmem>>, %arg11: memref<1x1x32xf32, #tpu.memory_space<vmem>>, %arg12: memref<1x1x32xf32, #tpu.memory_space<vmem>>, %arg13: memref<1x32x64xbf16, #tpu.memory_space<vmem>>, %arg14: memref<1x1x64xf32, #tpu.memory_space<vmem>>, %arg15: memref<1x64x32xbf16, #tpu.memory_space<vmem>>, %arg16: memref<1x1x32xf32, #tpu.memory_space<vmem>>, %arg17: memref<1x1x32xf32, #tpu.memory_space<vmem>>, %arg18: memref<1x1x32xf32, #tpu.memory_space<vmem>>, %arg19: memref<2x16x32xf32, #tpu.memory_space<vmem>>, %arg20: memref<1x2x4x16x16xf32, #tpu.memory_space<vmem>>) attributes {dimension_semantics = [#tpu.dimension_semantics<arbitrary>, #tpu.dimension_semantics<parallel>], iteration_bounds = array<i64: 2, 1>, scalar_prefetch = 0 : i64, scratch_operands = 0 : i64, tpu.core_type = #tpu.core_type<tc>, window_params = [{transform_indices = @transform_0, window_bounds = array<i64: 2, 16, 32>}, {transform_indices = @transform_1, window_bounds = array<i64: 1, 32, 32>}, {transform_indices = @transform_2, window_bounds = array<i64: 1, 1, 32>}, {transform_indices = @transform_3, window_bounds = array<i64: 1, 32, 32>}, {transform_indices = @transform_4, window_bounds = array<i64: 1, 1, 32>}, {transform_indices = @transform_5, window_bounds = array<i64: 1, 32, 32>}, {transform_indices = @transform_6, window_bounds = array<i64: 1, 1, 32>}, {transform_indices = @transform_7, window_bounds = array<i64: 1, 32, 32>}, {transform_indices = @transform_8, window_bounds = array<i64: 1, 1, 32>}, {transform_indices = @transform_9, window_bounds = array<i64: 1, 1, 32>}, {transform_indices = @transform_10, window_bounds = array<i64: 1, 1, 32>}, {transform_indices = @transform_11, window_bounds = array<i64: 1, 32, 64>}, {transform_indices = @transform_12, window_bounds = array<i64: 1, 1, 64>}, {transform_indices = @transform_13, window_bounds = array<i64: 1, 64, 32>}, {transform_indices = @transform_14, window_bounds = array<i64: 1, 1, 32>}, {transform_indices = @transform_15, window_bounds = array<i64: 1, 1, 32>}, {transform_indices = @transform_16, window_bounds = array<i64: 1, 1, 32>}, {transform_indices = @transform_17, window_bounds = array<i64: 2, 16, 32>}, {transform_indices = @transform_18, window_bounds = array<i64: 1, 2, 4, 16, 16>}]} {
    %c0 = arith.constant 0 : index
    %c0_0 = arith.constant 0 : index
    %c0_1 = arith.constant 0 : index
    %0 = vector.load %arg2[%c0, %c0_0, %c0_1] : memref<2x16x32xf32, #tpu.memory_space<vmem>>, vector<2x16x32xf32>
    %1 = vector.shape_cast %0 : vector<2x16x32xf32> to vector<32x32xf32>
    %2 = arith.truncf %1 : vector<32x32xf32> to vector<32x32xbf16>
    %c0_2 = arith.constant 0 : index
    %c0_3 = arith.constant 0 : index
    %c0_4 = arith.constant 0 : index
    %3 = vector.load %arg3[%c0_2, %c0_3, %c0_4] : memref<1x32x32xbf16, #tpu.memory_space<vmem>>, vector<1x32x32xbf16>
    %4 = vector.shape_cast %3 : vector<1x32x32xbf16> to vector<32x32xbf16>
    %cst = arith.constant dense<0.000000e+00> : vector<32x32xf32>
    %5 = tpu.matmul %2, %4, %cst {dimension_numbers = #tpu.dot_dimension_numbers<[1], [0], [0], [1], [0, 0, 1, 1], [], []>} : vector<32x32xbf16>, vector<32x32xbf16>, vector<32x32xf32> -> vector<32x32xf32>
    %c0_5 = arith.constant 0 : index
    %c0_6 = arith.constant 0 : index
    %c0_7 = arith.constant 0 : index
    %6 = vector.load %arg4[%c0_5, %c0_6, %c0_7] : memref<1x1x32xf32, #tpu.memory_space<vmem>>, vector<1x1x32xf32>
    %7 = vector.shape_cast %6 : vector<1x1x32xf32> to vector<1x32xf32>
    %8 = vector.broadcast %7 : vector<1x32xf32> to vector<32x32xf32>
    %9 = arith.addf %5, %8 : vector<32x32xf32>
    %cst_8 = arith.constant 1.250000e-01 : f32
    %10 = vector.broadcast %cst_8 : f32 to vector<32x32xf32>
    %11 = arith.mulf %9, %10 : vector<32x32xf32>
    %c0_9 = arith.constant 0 : index
    %c0_10 = arith.constant 0 : index
    %c0_11 = arith.constant 0 : index
    %12 = vector.load %arg5[%c0_9, %c0_10, %c0_11] : memref<1x32x32xbf16, #tpu.memory_space<vmem>>, vector<1x32x32xbf16>
    %13 = vector.shape_cast %12 : vector<1x32x32xbf16> to vector<32x32xbf16>
    %cst_12 = arith.constant dense<0.000000e+00> : vector<32x32xf32>
    %14 = tpu.matmul %2, %13, %cst_12 {dimension_numbers = #tpu.dot_dimension_numbers<[1], [0], [0], [1], [0, 0, 1, 1], [], []>} : vector<32x32xbf16>, vector<32x32xbf16>, vector<32x32xf32> -> vector<32x32xf32>
    %c0_13 = arith.constant 0 : index
    %c0_14 = arith.constant 0 : index
    %c0_15 = arith.constant 0 : index
    %15 = vector.load %arg6[%c0_13, %c0_14, %c0_15] : memref<1x1x32xf32, #tpu.memory_space<vmem>>, vector<1x1x32xf32>
    %16 = vector.shape_cast %15 : vector<1x1x32xf32> to vector<1x32xf32>
    %17 = vector.broadcast %16 : vector<1x32xf32> to vector<32x32xf32>
    %18 = arith.addf %14, %17 : vector<32x32xf32>
    %19 = vector.shape_cast %11 : vector<32x32xf32> to vector<2x16x32xf32>
    %20 = vector.shape_cast %18 : vector<32x32xf32> to vector<2x16x32xf32>
    %21 = vector.extract_strided_slice %19 {offsets = [0, 0, 0], sizes = [2, 16, 8], strides = [1, 1, 1]} : vector<2x16x32xf32> to vector<2x16x8xf32>
    %22 = arith.truncf %21 : vector<2x16x8xf32> to vector<2x16x8xbf16>
    %23 = vector.extract_strided_slice %20 {offsets = [0, 0, 0], sizes = [2, 16, 8], strides = [1, 1, 1]} : vector<2x16x32xf32> to vector<2x16x8xf32>
    %24 = arith.truncf %23 : vector<2x16x8xf32> to vector<2x16x8xbf16>
    "tpu.trace_start"() <{level = 10 : i32, message = "bqd,bkd->bqk"}> : () -> ()
    %cst_16 = arith.constant dense<0.000000e+00> : vector<2x16x16xf32>
    %25 = tpu.matmul %22, %24, %cst_16 {dimension_numbers = #tpu.dot_dimension_numbers<[2], [2], [1], [1], [0, 0, 0, 1, 1, 1], [0], [0]>} : vector<2x16x8xbf16>, vector<2x16x8xbf16>, vector<2x16x16xf32> -> vector<2x16x16xf32>
    "tpu.trace_stop"() : () -> ()
    %cst_17 = arith.constant dense<0xFF800000> : vector<2x16xf32>
    %26 = vector.multi_reduction <maximumf>, %25, %cst_17 [2] : vector<2x16x16xf32> to vector<2x16xf32>
    %27 = vector.shape_cast %26 : vector<2x16xf32> to vector<2x16x1xf32>
    %28 = vector.broadcast %27 : vector<2x16x1xf32> to vector<2x16x16xf32>
    %29 = arith.subf %25, %28 : vector<2x16x16xf32>
    %30 = math.exp %29 : vector<2x16x16xf32>
    %cst_18 = arith.constant dense<0.000000e+00> : vector<2x16xf32>
    %31 = vector.multi_reduction <add>, %30, %cst_18 [2] : vector<2x16x16xf32> to vector<2x16xf32>
    %32 = vector.shape_cast %31 : vector<2x16xf32> to vector<2x16x1xf32>
    %33 = tpu.reciprocal %32 {approx = true} : vector<2x16x1xf32> -> vector<2x16x1xf32>
    %34 = vector.broadcast %33 : vector<2x16x1xf32> to vector<2x16x16xf32>
    %35 = arith.mulf %30, %34 : vector<2x16x16xf32>
    %c0_19 = arith.constant 0 : index
    %c0_20 = arith.constant 0 : index
    %c0_21 = arith.constant 0 : index
    %c0_22 = arith.constant 0 : index
    %c0_23 = arith.constant 0 : index
    %36 = vector.load %arg20[%c0_19, %c0_20, %c0_21, %c0_22, %c0_23] : memref<1x2x4x16x16xf32, #tpu.memory_space<vmem>>, vector<1x2x1x16x16xf32>
    %37 = vector.shape_cast %36 : vector<1x2x1x16x16xf32> to vector<2x16x16xf32>
    %38 = vector.shape_cast %35 : vector<2x16x16xf32> to vector<1x2x1x16x16xf32>
    tpu.vector_store %arg20[%c0_19, %c0_20, %c0_21, %c0_22, %c0_23], %38 {strides = array<i32>} : memref<1x2x4x16x16xf32, #tpu.memory_space<vmem>>, vector<1x2x1x16x16xf32>,
    %39 = vector.extract_strided_slice %19 {offsets = [0, 0, 8], sizes = [2, 16, 8], strides = [1, 1, 1]} : vector<2x16x32xf32> to vector<2x16x8xf32>
    %40 = arith.truncf %39 : vector<2x16x8xf32> to vector<2x16x8xbf16>
    %41 = vector.extract_strided_slice %20 {offsets = [0, 0, 8], sizes = [2, 16, 8], strides = [1, 1, 1]} : vector<2x16x32xf32> to vector<2x16x8xf32>
    %42 = arith.truncf %41 : vector<2x16x8xf32> to vector<2x16x8xbf16>
    "tpu.trace_start"() <{level = 10 : i32, message = "bqd,bkd->bqk"}> : () -> ()
    %cst_24 = arith.constant dense<0.000000e+00> : vector<2x16x16xf32>
    %43 = tpu.matmul %40, %42, %cst_24 {dimension_numbers = #tpu.dot_dimension_numbers<[2], [2], [1], [1], [0, 0, 0, 1, 1, 1], [0], [0]>} : vector<2x16x8xbf16>, vector<2x16x8xbf16>, vector<2x16x16xf32> -> vector<2x16x16xf32>
    "tpu.trace_stop"() : () -> ()
    %cst_25 = arith.constant dense<0xFF800000> : vector<2x16xf32>
    %44 = vector.multi_reduction <maximumf>, %43, %cst_25 [2] : vector<2x16x16xf32> to vector<2x16xf32>
    %45 = vector.shape_cast %44 : vector<2x16xf32> to vector<2x16x1xf32>
    %46 = vector.broadcast %45 : vector<2x16x1xf32> to vector<2x16x16xf32>
    %47 = arith.subf %43, %46 : vector<2x16x16xf32>
    %48 = math.exp %47 : vector<2x16x16xf32>
    %cst_26 = arith.constant dense<0.000000e+00> : vector<2x16xf32>
    %49 = vector.multi_reduction <add>, %48, %cst_26 [2] : vector<2x16x16xf32> to vector<2x16xf32>
    %50 = vector.shape_cast %49 : vector<2x16xf32> to vector<2x16x1xf32>
    %51 = tpu.reciprocal %50 {approx = true} : vector<2x16x1xf32> -> vector<2x16x1xf32>
    %52 = vector.broadcast %51 : vector<2x16x1xf32> to vector<2x16x16xf32>
    %53 = arith.mulf %48, %52 : vector<2x16x16xf32>
    %c0_27 = arith.constant 0 : index
    %c0_28 = arith.constant 0 : index
    %c1 = arith.constant 1 : index
    %c0_29 = arith.constant 0 : index
    %c0_30 = arith.constant 0 : index
    %54 = vector.load %arg20[%c0_27, %c0_28, %c1, %c0_29, %c0_30] : memref<1x2x4x16x16xf32, #tpu.memory_space<vmem>>, vector<1x2x1x16x16xf32>
    %55 = vector.shape_cast %54 : vector<1x2x1x16x16xf32> to vector<2x16x16xf32>
    %56 = vector.shape_cast %53 : vector<2x16x16xf32> to vector<1x2x1x16x16xf32>
    tpu.vector_store %arg20[%c0_27, %c0_28, %c1, %c0_29, %c0_30], %56 {strides = array<i32>} : memref<1x2x4x16x16xf32, #tpu.memory_space<vmem>>, vector<1x2x1x16x16xf32>,
    %57 = vector.extract_strided_slice %19 {offsets = [0, 0, 16], sizes = [2, 16, 8], strides = [1, 1, 1]} : vector<2x16x32xf32> to vector<2x16x8xf32>
    %58 = arith.truncf %57 : vector<2x16x8xf32> to vector<2x16x8xbf16>
    %59 = vector.extract_strided_slice %20 {offsets = [0, 0, 16], sizes = [2, 16, 8], strides = [1, 1, 1]} : vector<2x16x32xf32> to vector<2x16x8xf32>
    %60 = arith.truncf %59 : vector<2x16x8xf32> to vector<2x16x8xbf16>
    "tpu.trace_start"() <{level = 10 : i32, message = "bqd,bkd->bqk"}> : () -> ()
    %cst_31 = arith.constant dense<0.000000e+00> : vector<2x16x16xf32>
    %61 = tpu.matmul %58, %60, %cst_31 {dimension_numbers = #tpu.dot_dimension_numbers<[2], [2], [1], [1], [0, 0, 0, 1, 1, 1], [0], [0]>} : vector<2x16x8xbf16>, vector<2x16x8xbf16>, vector<2x16x16xf32> -> vector<2x16x16xf32>
    "tpu.trace_stop"() : () -> ()
    %cst_32 = arith.constant dense<0xFF800000> : vector<2x16xf32>
    %62 = vector.multi_reduction <maximumf>, %61, %cst_32 [2] : vector<2x16x16xf32> to vector<2x16xf32>
    %63 = vector.shape_cast %62 : vector<2x16xf32> to vector<2x16x1xf32>
    %64 = vector.broadcast %63 : vector<2x16x1xf32> to vector<2x16x16xf32>
    %65 = arith.subf %61, %64 : vector<2x16x16xf32>
    %66 = math.exp %65 : vector<2x16x16xf32>
    %cst_33 = arith.constant dense<0.000000e+00> : vector<2x16xf32>
    %67 = vector.multi_reduction <add>, %66, %cst_33 [2] : vector<2x16x16xf32> to vector<2x16xf32>
    %68 = vector.shape_cast %67 : vector<2x16xf32> to vector<2x16x1xf32>
    %69 = tpu.reciprocal %68 {approx = true} : vector<2x16x1xf32> -> vector<2x16x1xf32>
    %70 = vector.broadcast %69 : vector<2x16x1xf32> to vector<2x16x16xf32>
    %71 = arith.mulf %66, %70 : vector<2x16x16xf32>
    %c0_34 = arith.constant 0 : index
    %c0_35 = arith.constant 0 : index
    %c2 = arith.constant 2 : index
    %c0_36 = arith.constant 0 : index
    %c0_37 = arith.constant 0 : index
    %72 = vector.load %arg20[%c0_34, %c0_35, %c2, %c0_36, %c0_37] : memref<1x2x4x16x16xf32, #tpu.memory_space<vmem>>, vector<1x2x1x16x16xf32>
    %73 = vector.shape_cast %72 : vector<1x2x1x16x16xf32> to vector<2x16x16xf32>
    %74 = vector.shape_cast %71 : vector<2x16x16xf32> to vector<1x2x1x16x16xf32>
    tpu.vector_store %arg20[%c0_34, %c0_35, %c2, %c0_36, %c0_37], %74 {strides = array<i32>} : memref<1x2x4x16x16xf32, #tpu.memory_space<vmem>>, vector<1x2x1x16x16xf32>,
    %75 = vector.extract_strided_slice %19 {offsets = [0, 0, 24], sizes = [2, 16, 8], strides = [1, 1, 1]} : vector<2x16x32xf32> to vector<2x16x8xf32>
    %76 = arith.truncf %75 : vector<2x16x8xf32> to vector<2x16x8xbf16>
    %77 = vector.extract_strided_slice %20 {offsets = [0, 0, 24], sizes = [2, 16, 8], strides = [1, 1, 1]} : vector<2x16x32xf32> to vector<2x16x8xf32>
    %78 = arith.truncf %77 : vector<2x16x8xf32> to vector<2x16x8xbf16>
    "tpu.trace_start"() <{level = 10 : i32, message = "bqd,bkd->bqk"}> : () -> ()
    %cst_38 = arith.constant dense<0.000000e+00> : vector<2x16x16xf32>
    %79 = tpu.matmul %76, %78, %cst_38 {dimension_numbers = #tpu.dot_dimension_numbers<[2], [2], [1], [1], [0, 0, 0, 1, 1, 1], [0], [0]>} : vector<2x16x8xbf16>, vector<2x16x8xbf16>, vector<2x16x16xf32> -> vector<2x16x16xf32>
    "tpu.trace_stop"() : () -> ()
    %cst_39 = arith.constant dense<0xFF800000> : vector<2x16xf32>
    %80 = vector.multi_reduction <maximumf>, %79, %cst_39 [2] : vector<2x16x16xf32> to vector<2x16xf32>
    %81 = vector.shape_cast %80 : vector<2x16xf32> to vector<2x16x1xf32>
    %82 = vector.broadcast %81 : vector<2x16x1xf32> to vector<2x16x16xf32>
    %83 = arith.subf %79, %82 : vector<2x16x16xf32>
    %84 = math.exp %83 : vector<2x16x16xf32>
    %cst_40 = arith.constant dense<0.000000e+00> : vector<2x16xf32>
    %85 = vector.multi_reduction <add>, %84, %cst_40 [2] : vector<2x16x16xf32> to vector<2x16xf32>
    %86 = vector.shape_cast %85 : vector<2x16xf32> to vector<2x16x1xf32>
    %87 = tpu.reciprocal %86 {approx = true} : vector<2x16x1xf32> -> vector<2x16x1xf32>
    %88 = vector.broadcast %87 : vector<2x16x1xf32> to vector<2x16x16xf32>
    %89 = arith.mulf %84, %88 : vector<2x16x16xf32>
    %c0_41 = arith.constant 0 : index
    %c0_42 = arith.constant 0 : index
    %c3 = arith.constant 3 : index
    %c0_43 = arith.constant 0 : index
    %c0_44 = arith.constant 0 : index
    %90 = vector.load %arg20[%c0_41, %c0_42, %c3, %c0_43, %c0_44] : memref<1x2x4x16x16xf32, #tpu.memory_space<vmem>>, vector<1x2x1x16x16xf32>
    %91 = vector.shape_cast %90 : vector<1x2x1x16x16xf32> to vector<2x16x16xf32>
    %92 = vector.shape_cast %89 : vector<2x16x16xf32> to vector<1x2x1x16x16xf32>
    tpu.vector_store %arg20[%c0_41, %c0_42, %c3, %c0_43, %c0_44], %92 {strides = array<i32>} : memref<1x2x4x16x16xf32, #tpu.memory_space<vmem>>, vector<1x2x1x16x16xf32>,
    %c1_i32 = arith.constant 1 : i32
    %93 = arith.cmpi eq, %arg0, %c1_i32 : i32
    %94 = arith.extui %93 : i1 to i32
    %c0_i32 = arith.constant 0 : i32
    %95 = arith.cmpi ne, %94, %c0_i32 : i32
    scf.if %95 {
      %c0_45 = arith.constant 0 : index
      %c0_46 = arith.constant 0 : index
      %c0_47 = arith.constant 0 : index
      %96 = vector.load %arg7[%c0_45, %c0_46, %c0_47] : memref<1x32x32xbf16, #tpu.memory_space<vmem>>, vector<1x32x32xbf16>
      %97 = vector.shape_cast %96 : vector<1x32x32xbf16> to vector<32x32xbf16>
      %cst_48 = arith.constant dense<0.000000e+00> : vector<32x32xf32>
      %98 = tpu.matmul %2, %97, %cst_48 {dimension_numbers = #tpu.dot_dimension_numbers<[1], [0], [0], [1], [0, 0, 1, 1], [], []>} : vector<32x32xbf16>, vector<32x32xbf16>, vector<32x32xf32> -> vector<32x32xf32>
      %c0_49 = arith.constant 0 : index
      %c0_50 = arith.constant 0 : index
      %c0_51 = arith.constant 0 : index
      %99 = vector.load %arg8[%c0_49, %c0_50, %c0_51] : memref<1x1x32xf32, #tpu.memory_space<vmem>>, vector<1x1x32xf32>
      %100 = vector.shape_cast %99 : vector<1x1x32xf32> to vector<1x32xf32>
      %101 = vector.broadcast %100 : vector<1x32xf32> to vector<32x32xf32>
      %102 = arith.addf %98, %101 : vector<32x32xf32>
      %103 = vector.shape_cast %102 : vector<32x32xf32> to vector<2x16x32xf32>
      %c0_52 = arith.constant 0 : index
      %c0_53 = arith.constant 0 : index
      %c0_54 = arith.constant 0 : index
      %104 = vector.load %arg9[%c0_52, %c0_53, %c0_54] : memref<1x32x32xbf16, #tpu.memory_space<vmem>>, vector<1x32x32xbf16>
      %105 = vector.shape_cast %104 : vector<1x32x32xbf16> to vector<32x32xbf16>
      %cst_55 = arith.constant 0.000000e+00 : f32
      %106 = vector.broadcast %cst_55 : f32 to vector<32x32xf32>
      %107 = vector.extract_strided_slice %103 {offsets = [0, 0, 0], sizes = [2, 16, 8], strides = [1, 1, 1]} : vector<2x16x32xf32> to vector<2x16x8xf32>
      %108 = arith.truncf %107 : vector<2x16x8xf32> to vector<2x16x8xbf16>
      %109 = arith.truncf %35 : vector<2x16x16xf32> to vector<2x16x16xbf16>
      "tpu.trace_start"() <{level = 10 : i32, message = "bqk,bkd->bqd"}> : () -> ()
      %cst_56 = arith.constant dense<0.000000e+00> : vector<2x16x8xf32>
      %110 = tpu.matmul %109, %108, %cst_56 {dimension_numbers = #tpu.dot_dimension_numbers<[2], [1], [1], [2], [0, 0, 0, 1, 1, 2], [0], [0]>} : vector<2x16x16xbf16>, vector<2x16x8xbf16>, vector<2x16x8xf32> -> vector<2x16x8xf32>
      "tpu.trace_stop"() : () -> ()
      %111 = vector.shape_cast %110 : vector<2x16x8xf32> to vector<32x8xf32>
      %112 = arith.truncf %111 : vector<32x8xf32> to vector<32x8xbf16>
      %113 = vector.extract_strided_slice %105 {offsets = [0, 0], sizes = [8, 32], strides = [1, 1]} : vector<32x32xbf16> to vector<8x32xbf16>
      %cst_57 = arith.constant dense<0.000000e+00> : vector<32x32xf32>
      %114 = tpu.matmul %112, %113, %cst_57 {dimension_numbers = #tpu.dot_dimension_numbers<[1], [0], [0], [1], [0, 0, 1, 1], [], []>} : vector<32x8xbf16>, vector<8x32xbf16>, vector<32x32xf32> -> vector<32x32xf32>
      %115 = arith.addf %106, %114 : vector<32x32xf32>
      %116 = vector.extract_strided_slice %103 {offsets = [0, 0, 8], sizes = [2, 16, 8], strides = [1, 1, 1]} : vector<2x16x32xf32> to vector<2x16x8xf32>
      %117 = arith.truncf %116 : vector<2x16x8xf32> to vector<2x16x8xbf16>
      %118 = arith.truncf %53 : vector<2x16x16xf32> to vector<2x16x16xbf16>
      "tpu.trace_start"() <{level = 10 : i32, message = "bqk,bkd->bqd"}> : () -> ()
      %cst_58 = arith.constant dense<0.000000e+00> : vector<2x16x8xf32>
      %119 = tpu.matmul %118, %117, %cst_58 {dimension_numbers = #tpu.dot_dimension_numbers<[2], [1], [1], [2], [0, 0, 0, 1, 1, 2], [0], [0]>} : vector<2x16x16xbf16>, vector<2x16x8xbf16>, vector<2x16x8xf32> -> vector<2x16x8xf32>
      "tpu.trace_stop"() : () -> ()
      %120 = vector.shape_cast %119 : vector<2x16x8xf32> to vector<32x8xf32>
      %121 = arith.truncf %120 : vector<32x8xf32> to vector<32x8xbf16>
      %122 = vector.extract_strided_slice %105 {offsets = [8, 0], sizes = [8, 32], strides = [1, 1]} : vector<32x32xbf16> to vector<8x32xbf16>
      %cst_59 = arith.constant dense<0.000000e+00> : vector<32x32xf32>
      %123 = tpu.matmul %121, %122, %cst_59 {dimension_numbers = #tpu.dot_dimension_numbers<[1], [0], [0], [1], [0, 0, 1, 1], [], []>} : vector<32x8xbf16>, vector<8x32xbf16>, vector<32x32xf32> -> vector<32x32xf32>
      %124 = arith.addf %115, %123 : vector<32x32xf32>
      %125 = vector.extract_strided_slice %103 {offsets = [0, 0, 16], sizes = [2, 16, 8], strides = [1, 1, 1]} : vector<2x16x32xf32> to vector<2x16x8xf32>
      %126 = arith.truncf %125 : vector<2x16x8xf32> to vector<2x16x8xbf16>
      %127 = arith.truncf %71 : vector<2x16x16xf32> to vector<2x16x16xbf16>
      "tpu.trace_start"() <{level = 10 : i32, message = "bqk,bkd->bqd"}> : () -> ()
      %cst_60 = arith.constant dense<0.000000e+00> : vector<2x16x8xf32>
      %128 = tpu.matmul %127, %126, %cst_60 {dimension_numbers = #tpu.dot_dimension_numbers<[2], [1], [1], [2], [0, 0, 0, 1, 1, 2], [0], [0]>} : vector<2x16x16xbf16>, vector<2x16x8xbf16>, vector<2x16x8xf32> -> vector<2x16x8xf32>
      "tpu.trace_stop"() : () -> ()
      %129 = vector.shape_cast %128 : vector<2x16x8xf32> to vector<32x8xf32>
      %130 = arith.truncf %129 : vector<32x8xf32> to vector<32x8xbf16>
      %131 = vector.extract_strided_slice %105 {offsets = [16, 0], sizes = [8, 32], strides = [1, 1]} : vector<32x32xbf16> to vector<8x32xbf16>
      %cst_61 = arith.constant dense<0.000000e+00> : vector<32x32xf32>
      %132 = tpu.matmul %130, %131, %cst_61 {dimension_numbers = #tpu.dot_dimension_numbers<[1], [0], [0], [1], [0, 0, 1, 1], [], []>} : vector<32x8xbf16>, vector<8x32xbf16>, vector<32x32xf32> -> vector<32x32xf32>
      %133 = arith.addf %124, %132 : vector<32x32xf32>
      %134 = vector.extract_strided_slice %103 {offsets = [0, 0, 24], sizes = [2, 16, 8], strides = [1, 1, 1]} : vector<2x16x32xf32> to vector<2x16x8xf32>
      %135 = arith.truncf %134 : vector<2x16x8xf32> to vector<2x16x8xbf16>
      %136 = arith.truncf %89 : vector<2x16x16xf32> to vector<2x16x16xbf16>
      "tpu.trace_start"() <{level = 10 : i32, message = "bqk,bkd->bqd"}> : () -> ()
      %cst_62 = arith.constant dense<0.000000e+00> : vector<2x16x8xf32>
      %137 = tpu.matmul %136, %135, %cst_62 {dimension_numbers = #tpu.dot_dimension_numbers<[2], [1], [1], [2], [0, 0, 0, 1, 1, 2], [0], [0]>} : vector<2x16x16xbf16>, vector<2x16x8xbf16>, vector<2x16x8xf32> -> vector<2x16x8xf32>
      "tpu.trace_stop"() : () -> ()
      %138 = vector.shape_cast %137 : vector<2x16x8xf32> to vector<32x8xf32>
      %139 = arith.truncf %138 : vector<32x8xf32> to vector<32x8xbf16>
      %140 = vector.extract_strided_slice %105 {offsets = [24, 0], sizes = [8, 32], strides = [1, 1]} : vector<32x32xbf16> to vector<8x32xbf16>
      %cst_63 = arith.constant dense<0.000000e+00> : vector<32x32xf32>
      %141 = tpu.matmul %139, %140, %cst_63 {dimension_numbers = #tpu.dot_dimension_numbers<[1], [0], [0], [1], [0, 0, 1, 1], [], []>} : vector<32x8xbf16>, vector<8x32xbf16>, vector<32x32xf32> -> vector<32x32xf32>
      %142 = arith.addf %133, %141 : vector<32x32xf32>
      %c0_64 = arith.constant 0 : index
      %c0_65 = arith.constant 0 : index
      %c0_66 = arith.constant 0 : index
      %143 = vector.load %arg10[%c0_64, %c0_65, %c0_66] : memref<1x1x32xf32, #tpu.memory_space<vmem>>, vector<1x1x32xf32>
      %144 = vector.shape_cast %143 : vector<1x1x32xf32> to vector<1x32xf32>
      %145 = vector.broadcast %144 : vector<1x32xf32> to vector<32x32xf32>
      %146 = arith.addf %142, %145 : vector<32x32xf32>
      %147 = arith.addf %146, %1 : vector<32x32xf32>
      %c0_67 = arith.constant 0 : index
      %c0_68 = arith.constant 0 : index
      %c0_69 = arith.constant 0 : index
      %148 = vector.load %arg11[%c0_67, %c0_68, %c0_69] : memref<1x1x32xf32, #tpu.memory_space<vmem>>, vector<1x1x32xf32>
      %149 = vector.shape_cast %148 : vector<1x1x32xf32> to vector<1x32xf32>
      %c0_70 = arith.constant 0 : index
      %c0_71 = arith.constant 0 : index
      %c0_72 = arith.constant 0 : index
      %150 = vector.load %arg12[%c0_70, %c0_71, %c0_72] : memref<1x1x32xf32, #tpu.memory_space<vmem>>, vector<1x1x32xf32>
      %151 = vector.shape_cast %150 : vector<1x1x32xf32> to vector<1x32xf32>
      %cst_73 = arith.constant dense<0.000000e+00> : vector<32xf32>
      %152 = vector.multi_reduction <add>, %147, %cst_73 [1] : vector<32x32xf32> to vector<32xf32>
      %153 = vector.shape_cast %152 : vector<32xf32> to vector<32x1xf32>
      %cst_74 = arith.constant 3.200000e+01 : f32
      %154 = vector.broadcast %cst_74 : f32 to vector<32x1xf32>
      %155 = arith.divf %153, %154 : vector<32x1xf32>
      %156 = vector.broadcast %155 : vector<32x1xf32> to vector<32x32xf32>
      %157 = arith.subf %147, %156 : vector<32x32xf32>
      %158 = arith.mulf %157, %157 : vector<32x32xf32>
      %cst_75 = arith.constant dense<0.000000e+00> : vector<32xf32>
      %159 = vector.multi_reduction <add>, %158, %cst_75 [1] : vector<32x32xf32> to vector<32xf32>
      %160 = vector.shape_cast %159 : vector<32xf32> to vector<32x1xf32>
      %cst_76 = arith.constant 3.200000e+01 : f32
      %161 = vector.broadcast %cst_76 : f32 to vector<32x1xf32>
      %162 = arith.divf %160, %161 : vector<32x1xf32>
      %163 = vector.broadcast %155 : vector<32x1xf32> to vector<32x32xf32>
      %164 = arith.subf %147, %163 : vector<32x32xf32>
      %cst_77 = arith.constant 9.99999974E-6 : f32
      %165 = vector.broadcast %cst_77 : f32 to vector<32x1xf32>
      %166 = arith.addf %162, %165 : vector<32x1xf32>
      %167 = math.rsqrt %166 : vector<32x1xf32>
      %168 = vector.broadcast %167 : vector<32x1xf32> to vector<32x32xf32>
      %169 = arith.mulf %164, %168 : vector<32x32xf32>
      %170 = vector.broadcast %149 : vector<1x32xf32> to vector<32x32xf32>
      %171 = arith.mulf %169, %170 : vector<32x32xf32>
      %172 = vector.broadcast %151 : vector<1x32xf32> to vector<32x32xf32>
      %173 = arith.addf %171, %172 : vector<32x32xf32>
      %174 = arith.truncf %173 : vector<32x32xf32> to vector<32x32xbf16>
      %c0_78 = arith.constant 0 : index
      %c0_79 = arith.constant 0 : index
      %c0_80 = arith.constant 0 : index
      %175 = vector.load %arg13[%c0_78, %c0_79, %c0_80] : memref<1x32x64xbf16, #tpu.memory_space<vmem>>, vector<1x32x64xbf16>
      %176 = vector.shape_cast %175 : vector<1x32x64xbf16> to vector<32x64xbf16>
      %cst_81 = arith.constant dense<0.000000e+00> : vector<32x64xf32>
      %177 = tpu.matmul %174, %176, %cst_81 {dimension_numbers = #tpu.dot_dimension_numbers<[1], [0], [0], [1], [0, 0, 1, 1], [], []>} : vector<32x32xbf16>, vector<32x64xbf16>, vector<32x64xf32> -> vector<32x64xf32>
      %c0_82 = arith.constant 0 : index
      %c0_83 = arith.constant 0 : index
      %c0_84 = arith.constant 0 : index
      %178 = vector.load %arg14[%c0_82, %c0_83, %c0_84] : memref<1x1x64xf32, #tpu.memory_space<vmem>>, vector<1x1x64xf32>
      %179 = vector.shape_cast %178 : vector<1x1x64xf32> to vector<1x64xf32>
      %180 = vector.broadcast %179 : vector<1x64xf32> to vector<32x64xf32>
      %181 = arith.addf %177, %180 : vector<32x64xf32>
      %cst_85 = arith.constant 0.000000e+00 : f32
      %182 = vector.broadcast %cst_85 : f32 to vector<32x64xf32>
      %183 = arith.maximumf %181, %182 : vector<32x64xf32>
      %184 = arith.truncf %183 : vector<32x64xf32> to vector<32x64xbf16>
      %c0_86 = arith.constant 0 : index
      %c0_87 = arith.constant 0 : index
      %c0_88 = arith.constant 0 : index
      %185 = vector.load %arg15[%c0_86, %c0_87, %c0_88] : memref<1x64x32xbf16, #tpu.memory_space<vmem>>, vector<1x64x32xbf16>
      %186 = vector.shape_cast %185 : vector<1x64x32xbf16> to vector<64x32xbf16>
      %cst_89 = arith.constant dense<0.000000e+00> : vector<32x32xf32>
      %187 = tpu.matmul %184, %186, %cst_89 {dimension_numbers = #tpu.dot_dimension_numbers<[1], [0], [0], [1], [0, 0, 1, 1], [], []>} : vector<32x64xbf16>, vector<64x32xbf16>, vector<32x32xf32> -> vector<32x32xf32>
      %c0_90 = arith.constant 0 : index
      %c0_91 = arith.constant 0 : index
      %c0_92 = arith.constant 0 : index
      %188 = vector.load %arg16[%c0_90, %c0_91, %c0_92] : memref<1x1x32xf32, #tpu.memory_space<vmem>>, vector<1x1x32xf32>
      %189 = vector.shape_cast %188 : vector<1x1x32xf32> to vector<1x32xf32>
      %190 = vector.broadcast %189 : vector<1x32xf32> to vector<32x32xf32>
      %191 = arith.addf %187, %190 : vector<32x32xf32>
      %192 = arith.addf %191, %173 : vector<32x32xf32>
      %c0_93 = arith.constant 0 : index
      %c0_94 = arith.constant 0 : index
      %c0_95 = arith.constant 0 : index
      %193 = vector.load %arg17[%c0_93, %c0_94, %c0_95] : memref<1x1x32xf32, #tpu.memory_space<vmem>>, vector<1x1x32xf32>
      %194 = vector.shape_cast %193 : vector<1x1x32xf32> to vector<1x32xf32>
      %c0_96 = arith.constant 0 : index
      %c0_97 = arith.constant 0 : index
      %c0_98 = arith.constant 0 : index
      %195 = vector.load %arg18[%c0_96, %c0_97, %c0_98] : memref<1x1x32xf32, #tpu.memory_space<vmem>>, vector<1x1x32xf32>
      %196 = vector.shape_cast %195 : vector<1x1x32xf32> to vector<1x32xf32>
      %cst_99 = arith.constant dense<0.000000e+00> : vector<32xf32>
      %197 = vector.multi_reduction <add>, %192, %cst_99 [1] : vector<32x32xf32> to vector<32xf32>
      %198 = vector.shape_cast %197 : vector<32xf32> to vector<32x1xf32>
      %cst_100 = arith.constant 3.200000e+01 : f32
      %199 = vector.broadcast %cst_100 : f32 to vector<32x1xf32>
      %200 = arith.divf %198, %199 : vector<32x1xf32>
      %201 = vector.broadcast %200 : vector<32x1xf32> to vector<32x32xf32>
      %202 = arith.subf %192, %201 : vector<32x32xf32>
      %203 = arith.mulf %202, %202 : vector<32x32xf32>
      %cst_101 = arith.constant dense<0.000000e+00> : vector<32xf32>
      %204 = vector.multi_reduction <add>, %203, %cst_101 [1] : vector<32x32xf32> to vector<32xf32>
      %205 = vector.shape_cast %204 : vector<32xf32> to vector<32x1xf32>
      %cst_102 = arith.constant 3.200000e+01 : f32
      %206 = vector.broadcast %cst_102 : f32 to vector<32x1xf32>
      %207 = arith.divf %205, %206 : vector<32x1xf32>
      %208 = vector.broadcast %200 : vector<32x1xf32> to vector<32x32xf32>
      %209 = arith.subf %192, %208 : vector<32x32xf32>
      %cst_103 = arith.constant 9.99999974E-6 : f32
      %210 = vector.broadcast %cst_103 : f32 to vector<32x1xf32>
      %211 = arith.addf %207, %210 : vector<32x1xf32>
      %212 = math.rsqrt %211 : vector<32x1xf32>
      %213 = vector.broadcast %212 : vector<32x1xf32> to vector<32x32xf32>
      %214 = arith.mulf %209, %213 : vector<32x32xf32>
      %215 = vector.broadcast %194 : vector<1x32xf32> to vector<32x32xf32>
      %216 = arith.mulf %214, %215 : vector<32x32xf32>
      %217 = vector.broadcast %196 : vector<1x32xf32> to vector<32x32xf32>
      %218 = arith.addf %216, %217 : vector<32x32xf32>
      %219 = vector.shape_cast %218 : vector<32x32xf32> to vector<2x16x32xf32>
      %c0_104 = arith.constant 0 : index
      %c0_105 = arith.constant 0 : index
      %c0_106 = arith.constant 0 : index
      %220 = vector.load %arg19[%c0_104, %c0_105, %c0_106] : memref<2x16x32xf32, #tpu.memory_space<vmem>>, vector<2x16x32xf32>
      tpu.vector_store %arg19[%c0_104, %c0_105, %c0_106], %219 {strides = array<i32>} : memref<2x16x32xf32, #tpu.memory_space<vmem>>, vector<2x16x32xf32>,
    } else {
    }
    return
  }
  func.func @transform_0(%arg0: i32, %arg1: i32) -> (i32, i32, i32) {
    %c0_i32 = arith.constant 0 : i32
    %c0_i32_0 = arith.constant 0 : i32
    %c0_i32_1 = arith.constant 0 : i32
    return %arg1, %c0_i32, %c0_i32_0 : i32, i32, i32
  }
  func.func @transform_1(%arg0: i32, %arg1: i32) -> (i32, i32, i32) {
    %c0_i32 = arith.constant 0 : i32
    %c0_i32_0 = arith.constant 0 : i32
    %c0_i32_1 = arith.constant 0 : i32
    return %arg0, %c0_i32, %c0_i32_0 : i32, i32, i32
  }
  func.func @transform_2(%arg0: i32, %arg1: i32) -> (i32, i32, i32) {
    %c0_i32 = arith.constant 0 : i32
    %c0_i32_0 = arith.constant 0 : i32
    %c0_i32_1 = arith.constant 0 : i32
    return %arg0, %c0_i32, %c0_i32_0 : i32, i32, i32
  }
  func.func @transform_3(%arg0: i32, %arg1: i32) -> (i32, i32, i32) {
    %c0_i32 = arith.constant 0 : i32
    %c0_i32_0 = arith.constant 0 : i32
    %c0_i32_1 = arith.constant 0 : i32
    return %arg0, %c0_i32, %c0_i32_0 : i32, i32, i32
  }
  func.func @transform_4(%arg0: i32, %arg1: i32) -> (i32, i32, i32) {
    %c0_i32 = arith.constant 0 : i32
    %c0_i32_0 = arith.constant 0 : i32
    %c0_i32_1 = arith.constant 0 : i32
    return %arg0, %c0_i32, %c0_i32_0 : i32, i32, i32
  }
  func.func @transform_5(%arg0: i32, %arg1: i32) -> (i32, i32, i32) {
    %c0_i32 = arith.constant 0 : i32
    %c0_i32_0 = arith.constant 0 : i32
    %c0_i32_1 = arith.constant 0 : i32
    return %arg0, %c0_i32, %c0_i32_0 : i32, i32, i32
  }
  func.func @transform_6(%arg0: i32, %arg1: i32) -> (i32, i32, i32) {
    %c0_i32 = arith.constant 0 : i32
    %c0_i32_0 = arith.constant 0 : i32
    %c0_i32_1 = arith.constant 0 : i32
    return %arg0, %c0_i32, %c0_i32_0 : i32, i32, i32
  }
  func.func @transform_7(%arg0: i32, %arg1: i32) -> (i32, i32, i32) {
    %c0_i32 = arith.constant 0 : i32
    %c0_i32_0 = arith.constant 0 : i32
    %c0_i32_1 = arith.constant 0 : i32
    return %arg0, %c0_i32, %c0_i32_0 : i32, i32, i32
  }
  func.func @transform_8(%arg0: i32, %arg1: i32) -> (i32, i32, i32) {
    %c0_i32 = arith.constant 0 : i32
    %c0_i32_0 = arith.constant 0 : i32
    %c0_i32_1 = arith.constant 0 : i32
    return %arg0, %c0_i32, %c0_i32_0 : i32, i32, i32
  }
  func.func @transform_9(%arg0: i32, %arg1: i32) -> (i32, i32, i32) {
    %c0_i32 = arith.constant 0 : i32
    %c0_i32_0 = arith.constant 0 : i32
    %c0_i32_1 = arith.constant 0 : i32
    return %arg0, %c0_i32, %c0_i32_0 : i32, i32, i32
  }
  func.func @transform_10(%arg0: i32, %arg1: i32) -> (i32, i32, i32) {
    %c0_i32 = arith.constant 0 : i32
    %c0_i32_0 = arith.constant 0 : i32
    %c0_i32_1 = arith.constant 0 : i32
    return %arg0, %c0_i32, %c0_i32_0 : i32, i32, i32
  }
  func.func @transform_11(%arg0: i32, %arg1: i32) -> (i32, i32, i32) {
    %c0_i32 = arith.constant 0 : i32
    %c0_i32_0 = arith.constant 0 : i32
    %c0_i32_1 = arith.constant 0 : i32
    return %arg0, %c0_i32, %c0_i32_0 : i32, i32, i32
  }
  func.func @transform_12(%arg0: i32, %arg1: i32) -> (i32, i32, i32) {
    %c0_i32 = arith.constant 0 : i32
    %c0_i32_0 = arith.constant 0 : i32
    %c0_i32_1 = arith.constant 0 : i32
    return %arg0, %c0_i32, %c0_i32_0 : i32, i32, i32
  }
  func.func @transform_13(%arg0: i32, %arg1: i32) -> (i32, i32, i32) {
    %c0_i32 = arith.constant 0 : i32
    %c0_i32_0 = arith.constant 0 : i32
    %c0_i32_1 = arith.constant 0 : i32
    return %arg0, %c0_i32, %c0_i32_0 : i32, i32, i32
  }
  func.func @transform_14(%arg0: i32, %arg1: i32) -> (i32, i32, i32) {
    %c0_i32 = arith.constant 0 : i32
    %c0_i32_0 = arith.constant 0 : i32
    %c0_i32_1 = arith.constant 0 : i32
    return %arg0, %c0_i32, %c0_i32_0 : i32, i32, i32
  }
  func.func @transform_15(%arg0: i32, %arg1: i32) -> (i32, i32, i32) {
    %c0_i32 = arith.constant 0 : i32
    %c0_i32_0 = arith.constant 0 : i32
    %c0_i32_1 = arith.constant 0 : i32
    return %arg0, %c0_i32, %c0_i32_0 : i32, i32, i32
  }
  func.func @transform_16(%arg0: i32, %arg1: i32) -> (i32, i32, i32) {
    %c0_i32 = arith.constant 0 : i32
    %c0_i32_0 = arith.constant 0 : i32
    %c0_i32_1 = arith.constant 0 : i32
    return %arg0, %c0_i32, %c0_i32_0 : i32, i32, i32
  }
  func.func @transform_17(%arg0: i32, %arg1: i32) -> (i32, i32, i32) {
    %c0_i32 = arith.constant 0 : i32
    %c0_i32_0 = arith.constant 0 : i32
    %c0_i32_1 = arith.constant 0 : i32
    return %arg1, %c0_i32, %c0_i32_0 : i32, i32, i32
  }
  func.func @transform_18(%arg0: i32, %arg1: i32) -> (i32, i32, i32, i32, i32) {
    %c0_i32 = arith.constant 0 : i32
    %c0_i32_0 = arith.constant 0 : i32
    %c0_i32_1 = arith.constant 0 : i32
    %c0_i32_2 = arith.constant 0 : i32
    return %arg0, %arg1, %c0_i32, %c0_i32_0, %c0_i32_1 : i32, i32, i32, i32, i32
  }
}

</mosaic_0001>

<llo_original>
// kernel: tpu_custom_call.1
$region0: #{tpu_custom_call.1}
  #allocation0 [shape = 'u32[]', space=smem, size = 0x4, offset = 0x4, fixed_abs, tag = 'smem constant byte address 0x4 - core index']
  #allocation1 [shape = 'u32[144,128]{1,0:T(1,128)}', space=vmem, size = 0x12000, scoped, tag = 'internal scratch']
  %s0 = inlined_call_operand.vmem [shape: f32[2,16,32], index: 0, kind: input, shape index: {}]
  %s1 = inlined_call_operand.vmem [shape: bf16[2,32,32], index: 1, kind: input, shape index: {}]
  %s2 = inlined_call_operand.vmem [shape: f32[2,1,32], index: 2, kind: input, shape index: {}]
  %s3 = inlined_call_operand.vmem [shape: bf16[2,32,32], index: 3, kind: input, shape index: {}]
  %s4 = inlined_call_operand.vmem [shape: f32[2,1,32], index: 4, kind: input, shape index: {}]
  %s5 = inlined_call_operand.hbm [shape: bf16[2,32,32], index: 5, kind: input, shape index: {}]
  %s6 = inlined_call_operand.vmem [shape: f32[2,1,32], index: 6, kind: input, shape index: {}]
  %s7 = inlined_call_operand.hbm [shape: bf16[2,32,32], index: 7, kind: input, shape index: {}]
  %s8 = inlined_call_operand.vmem [shape: f32[2,1,32], index: 8, kind: input, shape index: {}]
  %s9 = inlined_call_operand.vmem [shape: f32[2,1,32], index: 9, kind: input, shape index: {}]
  %s10 = inlined_call_operand.vmem [shape: f32[2,1,32], index: 10, kind: input, shape index: {}]
  %s11 = inlined_call_operand.hbm [shape: bf16[2,32,64], index: 11, kind: input, shape index: {}]
  %s12 = inlined_call_operand.vmem [shape: f32[2,1,64], index: 12, kind: input, shape index: {}]
  %s13 = inlined_call_operand.vmem [shape: bf16[2,64,32], index: 13, kind: input, shape index: {}]
  %s14 = inlined_call_operand.vmem [shape: f32[2,1,32], index: 14, kind: input, shape index: {}]
  %s15 = inlined_call_operand.vmem [shape: f32[2,1,32], index: 15, kind: input, shape index: {}]
  %s16 = inlined_call_operand.vmem [shape: f32[2,1,32], index: 16, kind: input, shape index: {}]
  %s17 = inlined_call_operand.hbm [shape: f32[2,16,32], index: 17, kind: output, shape index: {0}]
  %s18 = inlined_call_operand.hbm [shape: f32[2,2,4,16,16], index: 18, kind: output, shape index: {1}]
  %19 = xla_tuple %s17, %s18
  %s20 = sld [smem:[#allocation0]]
  $region125: #{tpu_custom_call.1} parent=0
    _
  %s22 = ssub.s32 1, %s20
  %s23 = scalar_select 0, %s22, %s20
  $region1: #{tpu_custom_call.1} parent=0
    #allocation2 [shape = 'u8[16384]{0}', space=vmem, size = 0x4000, scoped, tag = 'input window, operand 5']
    #allocation3 [shape = 's32[2]{0}', space=sflag, size = 0x8, scoped, tag = 'scoped memory for tpu_custom_call.1']
    #allocation4 [shape = 's32[2]{0}', space=sflag, size = 0x8, scoped, tag = 'scoped memory for tpu_custom_call.1']
    #allocation5 [shape = 'u8[16384]{0}', space=vmem, size = 0x4000, scoped, tag = 'input window, operand 7']
    #allocation6 [shape = 's32[2]{0}', space=sflag, size = 0x8, scoped, tag = 'scoped memory for tpu_custom_call.1']
    #allocation7 [shape = 'u8[16384]{0}', space=vmem, size = 0x4000, scoped, tag = 'input window, operand 11']
    #allocation8 [shape = 'u8[16384]{0}', space=vmem, size = 0x4000, scoped, tag = 'output window, operand 0, single buffered']
    #allocation9 [shape = 'u8[131072]{0}', space=vmem, size = 0x20000, scoped, tag = 'output window, operand 1']
    #allocation10 [shape = 's32[2]{0}', space=sflag, size = 0x8, scoped, tag = 'scoped memory for tpu_custom_call.1']
    %24 = vsyncpa [#allocation3], 0
    %s25 = scalar_lea.sflag [#allocation3], 1
    %26 = vsyncpa %s25, 0
    %27 = vsyncpa [#allocation6], 0
    %s28 = scalar_lea.sflag [#allocation6], 1
    %29 = vsyncpa %s28, 0
    %30 = vsyncpa [#allocation4], 0
    %31 = vsyncpa [#allocation10], 0
    %s32 = scalar_lea.sflag [#allocation10], 1
    %33 = vsyncpa %s32, 0
    loop: start=0, step=1, limit=4
    $region2: #{tpu_custom_call.1} parent=1 // loop_pre_header
      _
    $region3: #{tpu_custom_call.1} parent=1 // loop_header
      %s35 = sphi 0, %s39
      %p36 = scmp.ge.s32.totalorder %s35, 4
      %s42 = sphi 0, %s54
      %s43 = sphi 0, %s50
      %s44 = sphi 0, %s42
      %s45 = sphi 0, %s43
      %s46 = sphi 0, %s44
      %s47 = sphi 0, %s45
      %s57 = sphi 0, %s59
      %s60 = sphi 0, %s57
      %s61 = sphi 0, %s60
      %s77 = sphi 0, %s61
      %s83 = sphi 0, %s85
      %s86 = sphi 0, %s83
      %s87 = sphi 0, %s86
      %s103 = sphi 0, %s87
      %s109 = sphi 0, %s111
      %s112 = sphi 0, %s109
      %s113 = sphi 0, %s112
      %s129 = sphi 0, %s113
      %s135 = sphi 0, %s137
      %s138 = sphi 0, %s135
      %s139 = sphi 0, %s138
      %s155 = sphi 0, %s139
      %s161 = sphi 0, %s163
      %s164 = sphi 0, %s161
      %s165 = sphi 0, %s164
      %s181 = sphi 0, %s165
      %s187 = sphi 0, %s189
      %s190 = sphi 0, %s187
      %s191 = sphi 0, %s190
      %s207 = sphi 0, %s191
      %s213 = sphi 0, %s215
      %s216 = sphi 0, %s213
      %s217 = sphi 0, %s216
      %s233 = sphi 0, %s217
      %s239 = sphi 0, %s241
      %s242 = sphi 0, %s239
      %s243 = sphi 0, %s242
      %s259 = sphi 0, %s243
      %s265 = sphi 0, %s267
      %s268 = sphi 0, %s265
      %s269 = sphi 0, %s268
      %s285 = sphi 0, %s269
      %s291 = sphi 0, %s293
      %s294 = sphi 0, %s291
      %s295 = sphi 0, %s294
      %s311 = sphi 0, %s295
      %s317 = sphi 0, %s319
      %s320 = sphi 0, %s317
      %s321 = sphi 0, %s320
      %s337 = sphi 0, %s321
      %s343 = sphi 0, %s345
      %s346 = sphi 0, %s343
      %s347 = sphi 0, %s346
      %s363 = sphi 0, %s347
      %s369 = sphi 0, %s371
      %s372 = sphi 0, %s369
      %s373 = sphi 0, %s372
      %s389 = sphi 0, %s373
      %s395 = sphi 0, %s397
      %s398 = sphi 0, %s395
      %s399 = sphi 0, %s398
      %s415 = sphi 0, %s399
      %s421 = sphi 0, %s423
      %s424 = sphi 0, %s421
      %s425 = sphi 0, %s424
      %s441 = sphi 0, %s425
      %s447 = sphi 0, %s449
      %s450 = sphi 0, %s447
      %s451 = sphi 0, %s450
      %s467 = sphi 0, %s451
      %s473 = sphi 0, %s475
      %s476 = sphi 0, %s473
      %s477 = sphi 0, %s476
      %s493 = sphi 0, %s477
      %s499 = sphi 0, %s501
      %s502 = sphi 0, %s499
      %s503 = sphi 0, %s502
      %s519 = sphi 0, %s503
      %s527 = sphi 0, %s529
      %s530 = sphi 0, %s527
      %s531 = sphi 0, %s530
      %s547 = sphi 0, %s531
    $region4: #{tpu_custom_call.1} parent=1 // loop_header_branch
      %38 = sbr.rel (%p36) target = $region8
    $region5: #{tpu_custom_call.1} parent=1 // loop_body
      %s40 = ssub.s32 %s35, 1
      %s41 = ssub.s32 %s35, 2
      %s48 = sadd.s32 1, %s43
      %p49 = scmp.ge.s32.totalorder %s48, 1
      %s50 = scalar_select %p49, 0, %s48
      %s51 = sadd.s32 1, %s42
      %s52 = scalar_select %p49, %s51, %s42
      %p53 = scmp.ge.s32.totalorder %s52, 2
      %s54 = scalar_select %p53, 0, %s52
      %s55 = ssub.s32 %s43, %s50
      %p56 = scmp.eq.s32.totalorder %s55, 0
      %s58 = sadd.s32 %s57, 1
      %s59 = scalar_select %p56, %s57, %s58
      %p62 = pneg %p56
      %p63 = scmp.eq.s32.totalorder %s35, 1
      %p64 = por %p62, %p63
      %p65 = scmp.ne.s32.totalorder %s57, %s60
      %p66 = scmp.eq.s32.totalorder %s35, 0
      %p67 = por %p65, %p66
      %p68 = scmp.ne.s32.totalorder %s57, %s60
      %p69 = scmp.eq.s32.totalorder %s40, 1
      %p70 = por %p68, %p69
      %p71 = scmp.ne.s32.totalorder %s60, %s61
      %p72 = scmp.eq.s32.totalorder %s40, 0
      %p73 = por %p71, %p72
      %p74 = scmp.ne.s32.totalorder %s60, %s61
      %p75 = scmp.eq.s32.totalorder %s41, 1
      %p76 = por %p74, %p75
      %p78 = scmp.ne.s32.totalorder %s61, %s77
      %p79 = scmp.eq.s32.totalorder %s41, 0
      %p80 = por %p78, %p79
      %s81 = ssub.s32 %s42, %s54
      %p82 = scmp.eq.s32.totalorder %s81, 0
      %s84 = sadd.s32 %s83, 1
      %s85 = scalar_select %p82, %s83, %s84
      %p88 = pneg %p82
      %p89 = scmp.eq.s32.totalorder %s35, 1
      %p90 = por %p88, %p89
      %p91 = scmp.ne.s32.totalorder %s83, %s86
      %p92 = scmp.eq.s32.totalorder %s35, 0
      %p93 = por %p91, %p92
      %p94 = scmp.ne.s32.totalorder %s83, %s86
      %p95 = scmp.eq.s32.totalorder %s40, 1
      %p96 = por %p94, %p95
      %p97 = scmp.ne.s32.totalorder %s86, %s87
      %p98 = scmp.eq.s32.totalorder %s40, 0
      %p99 = por %p97, %p98
      %p100 = scmp.ne.s32.totalorder %s86, %s87
      %p101 = scmp.eq.s32.totalorder %s41, 1
      %p102 = por %p100, %p101
      %p104 = scmp.ne.s32.totalorder %s87, %s103
      %p105 = scmp.eq.s32.totalorder %s41, 0
      %p106 = por %p104, %p105
      %s107 = ssub.s32 %s42, %s54
      %p108 = scmp.eq.s32.totalorder %s107, 0
      %s110 = sadd.s32 %s109, 1
      %s111 = scalar_select %p108, %s109, %s110
      %p114 = pneg %p108
      %p115 = scmp.eq.s32.totalorder %s35, 1
      %p116 = por %p114, %p115
      %p117 = scmp.ne.s32.totalorder %s109, %s112
      %p118 = scmp.eq.s32.totalorder %s35, 0
      %p119 = por %p117, %p118
      %p120 = scmp.ne.s32.totalorder %s109, %s112
      %p121 = scmp.eq.s32.totalorder %s40, 1
      %p122 = por %p120, %p121
      %p123 = scmp.ne.s32.totalorder %s112, %s113
      %p124 = scmp.eq.s32.totalorder %s40, 0
      %p125 = por %p123, %p124
      %p126 = scmp.ne.s32.totalorder %s112, %s113
      %p127 = scmp.eq.s32.totalorder %s41, 1
      %p128 = por %p126, %p127
      %p130 = scmp.ne.s32.totalorder %s113, %s129
      %p131 = scmp.eq.s32.totalorder %s41, 0
      %p132 = por %p130, %p131
      %s133 = ssub.s32 %s42, %s54
      %p134 = scmp.eq.s32.totalorder %s133, 0
      %s136 = sadd.s32 %s135, 1
      %s137 = scalar_select %p134, %s135, %s136
      %p140 = pneg %p134
      %p141 = scmp.eq.s32.totalorder %s35, 1
      %p142 = por %p140, %p141
      %p143 = scmp.ne.s32.totalorder %s135, %s138
      %p144 = scmp.eq.s32.totalorder %s35, 0
      %p145 = por %p143, %p144
      %p146 = scmp.ne.s32.totalorder %s135, %s138
      %p147 = scmp.eq.s32.totalorder %s40, 1
      %p148 = por %p146, %p147
      %p149 = scmp.ne.s32.totalorder %s138, %s139
      %p150 = scmp.eq.s32.totalorder %s40, 0
      %p151 = por %p149, %p150
      %p152 = scmp.ne.s32.totalorder %s138, %s139
      %p153 = scmp.eq.s32.totalorder %s41, 1
      %p154 = por %p152, %p153
      %p156 = scmp.ne.s32.totalorder %s139, %s155
      %p157 = scmp.eq.s32.totalorder %s41, 0
      %p158 = por %p156, %p157
      %s159 = ssub.s32 %s42, %s54
      %p160 = scmp.eq.s32.totalorder %s159, 0
      %s162 = sadd.s32 %s161, 1
      %s163 = scalar_select %p160, %s161, %s162
      %p166 = pneg %p160
      %p167 = scmp.eq.s32.totalorder %s35, 1
      %p168 = por %p166, %p167
      %p169 = scmp.ne.s32.totalorder %s161, %s164
      %p170 = scmp.eq.s32.totalorder %s35, 0
      %p171 = por %p169, %p170
      %p172 = scmp.ne.s32.totalorder %s161, %s164
      %p173 = scmp.eq.s32.totalorder %s40, 1
      %p174 = por %p172, %p173
      %p175 = scmp.ne.s32.totalorder %s164, %s165
      %p176 = scmp.eq.s32.totalorder %s40, 0
      %p177 = por %p175, %p176
      %p178 = scmp.ne.s32.totalorder %s164, %s165
      %p179 = scmp.eq.s32.totalorder %s41, 1
      %p180 = por %p178, %p179
      %p182 = scmp.ne.s32.totalorder %s165, %s181
      %p183 = scmp.eq.s32.totalorder %s41, 0
      %p184 = por %p182, %p183
      %s185 = ssub.s32 %s42, %s54
      %p186 = scmp.eq.s32.totalorder %s185, 0
      %s188 = sadd.s32 %s187, 1
      %s189 = scalar_select %p186, %s187, %s188
      %p192 = pneg %p186
      %p193 = scmp.eq.s32.totalorder %s35, 1
      %p194 = por %p192, %p193
      %p195 = scmp.ne.s32.totalorder %s187, %s190
      %p196 = scmp.eq.s32.totalorder %s35, 0
      %p197 = por %p195, %p196
      %p198 = scmp.ne.s32.totalorder %s187, %s190
      %p199 = scmp.eq.s32.totalorder %s40, 1
      %p200 = por %p198, %p199
      %p201 = scmp.ne.s32.totalorder %s190, %s191
      %p202 = scmp.eq.s32.totalorder %s40, 0
      %p203 = por %p201, %p202
      %p204 = scmp.ne.s32.totalorder %s190, %s191
      %p205 = scmp.eq.s32.totalorder %s41, 1
      %p206 = por %p204, %p205
      %p208 = scmp.ne.s32.totalorder %s191, %s207
      %p209 = scmp.eq.s32.totalorder %s41, 0
      %p210 = por %p208, %p209
      %s211 = ssub.s32 %s42, %s54
      %p212 = scmp.eq.s32.totalorder %s211, 0
      %s214 = sadd.s32 %s213, 1
      %s215 = scalar_select %p212, %s213, %s214
      %p218 = pneg %p212
      %p219 = scmp.eq.s32.totalorder %s35, 1
      %p220 = por %p218, %p219
      %p221 = scmp.ne.s32.totalorder %s213, %s216
      %p222 = scmp.eq.s32.totalorder %s35, 0
      %p223 = por %p221, %p222
      %p224 = scmp.ne.s32.totalorder %s213, %s216
      %p225 = scmp.eq.s32.totalorder %s40, 1
      %p226 = por %p224, %p225
      %p227 = scmp.ne.s32.totalorder %s216, %s217
      %p228 = scmp.eq.s32.totalorder %s40, 0
      %p229 = por %p227, %p228
      %p230 = scmp.ne.s32.totalorder %s216, %s217
      %p231 = scmp.eq.s32.totalorder %s41, 1
      %p232 = por %p230, %p231
      %p234 = scmp.ne.s32.totalorder %s217, %s233
      %p235 = scmp.eq.s32.totalorder %s41, 0
      %p236 = por %p234, %p235
      %s237 = ssub.s32 %s42, %s54
      %p238 = scmp.eq.s32.totalorder %s237, 0
      %s240 = sadd.s32 %s239, 1
      %s241 = scalar_select %p238, %s239, %s240
      %p244 = pneg %p238
      %p245 = scmp.eq.s32.totalorder %s35, 1
      %p246 = por %p244, %p245
      %p247 = scmp.ne.s32.totalorder %s239, %s242
      %p248 = scmp.eq.s32.totalorder %s35, 0
      %p249 = por %p247, %p248
      %p250 = scmp.ne.s32.totalorder %s239, %s242
      %p251 = scmp.eq.s32.totalorder %s40, 1
      %p252 = por %p250, %p251
      %p253 = scmp.ne.s32.totalorder %s242, %s243
      %p254 = scmp.eq.s32.totalorder %s40, 0
      %p255 = por %p253, %p254
      %p256 = scmp.ne.s32.totalorder %s242, %s243
      %p257 = scmp.eq.s32.totalorder %s41, 1
      %p258 = por %p256, %p257
      %p260 = scmp.ne.s32.totalorder %s243, %s259
      %p261 = scmp.eq.s32.totalorder %s41, 0
      %p262 = por %p260, %p261
      %s263 = ssub.s32 %s42, %s54
      %p264 = scmp.eq.s32.totalorder %s263, 0
      %s266 = sadd.s32 %s265, 1
      %s267 = scalar_select %p264, %s265, %s266
      %p270 = pneg %p264
      %p271 = scmp.eq.s32.totalorder %s35, 1
      %p272 = por %p270, %p271
      %p273 = scmp.ne.s32.totalorder %s265, %s268
      %p274 = scmp.eq.s32.totalorder %s35, 0
      %p275 = por %p273, %p274
      %p276 = scmp.ne.s32.totalorder %s265, %s268
      %p277 = scmp.eq.s32.totalorder %s40, 1
      %p278 = por %p276, %p277
      %p279 = scmp.ne.s32.totalorder %s268, %s269
      %p280 = scmp.eq.s32.totalorder %s40, 0
      %p281 = por %p279, %p280
      %p282 = scmp.ne.s32.totalorder %s268, %s269
      %p283 = scmp.eq.s32.totalorder %s41, 1
      %p284 = por %p282, %p283
      %p286 = scmp.ne.s32.totalorder %s269, %s285
      %p287 = scmp.eq.s32.totalorder %s41, 0
      %p288 = por %p286, %p287
      %s289 = ssub.s32 %s42, %s54
      %p290 = scmp.eq.s32.totalorder %s289, 0
      %s292 = sadd.s32 %s291, 1
      %s293 = scalar_select %p290, %s291, %s292
      %p296 = pneg %p290
      %p297 = scmp.eq.s32.totalorder %s35, 1
      %p298 = por %p296, %p297
      %p299 = scmp.ne.s32.totalorder %s291, %s294
      %p300 = scmp.eq.s32.totalorder %s35, 0
      %p301 = por %p299, %p300
      %p302 = scmp.ne.s32.totalorder %s291, %s294
      %p303 = scmp.eq.s32.totalorder %s40, 1
      %p304 = por %p302, %p303
      %p305 = scmp.ne.s32.totalorder %s294, %s295
      %p306 = scmp.eq.s32.totalorder %s40, 0
      %p307 = por %p305, %p306
      %p308 = scmp.ne.s32.totalorder %s294, %s295
      %p309 = scmp.eq.s32.totalorder %s41, 1
      %p310 = por %p308, %p309
      %p312 = scmp.ne.s32.totalorder %s295, %s311
      %p313 = scmp.eq.s32.totalorder %s41, 0
      %p314 = por %p312, %p313
      %s315 = ssub.s32 %s42, %s54
      %p316 = scmp.eq.s32.totalorder %s315, 0
      %s318 = sadd.s32 %s317, 1
      %s319 = scalar_select %p316, %s317, %s318
      %p322 = pneg %p316
      %p323 = scmp.eq.s32.totalorder %s35, 1
      %p324 = por %p322, %p323
      %p325 = scmp.ne.s32.totalorder %s317, %s320
      %p326 = scmp.eq.s32.totalorder %s35, 0
      %p327 = por %p325, %p326
      %p328 = scmp.ne.s32.totalorder %s317, %s320
      %p329 = scmp.eq.s32.totalorder %s40, 1
      %p330 = por %p328, %p329
      %p331 = scmp.ne.s32.totalorder %s320, %s321
      %p332 = scmp.eq.s32.totalorder %s40, 0
      %p333 = por %p331, %p332
      %p334 = scmp.ne.s32.totalorder %s320, %s321
      %p335 = scmp.eq.s32.totalorder %s41, 1
      %p336 = por %p334, %p335
      %p338 = scmp.ne.s32.totalorder %s321, %s337
      %p339 = scmp.eq.s32.totalorder %s41, 0
      %p340 = por %p338, %p339
      %s341 = ssub.s32 %s42, %s54
      %p342 = scmp.eq.s32.totalorder %s341, 0
      %s344 = sadd.s32 %s343, 1
      %s345 = scalar_select %p342, %s343, %s344
      %p348 = pneg %p342
      %p349 = scmp.eq.s32.totalorder %s35, 1
      %p350 = por %p348, %p349
      %p351 = scmp.ne.s32.totalorder %s343, %s346
      %p352 = scmp.eq.s32.totalorder %s35, 0
      %p353 = por %p351, %p352
      %p354 = scmp.ne.s32.totalorder %s343, %s346
      %p355 = scmp.eq.s32.totalorder %s40, 1
      %p356 = por %p354, %p355
      %p357 = scmp.ne.s32.totalorder %s346, %s347
      %p358 = scmp.eq.s32.totalorder %s40, 0
      %p359 = por %p357, %p358
      %p360 = scmp.ne.s32.totalorder %s346, %s347
      %p361 = scmp.eq.s32.totalorder %s41, 1
      %p362 = por %p360, %p361
      %p364 = scmp.ne.s32.totalorder %s347, %s363
      %p365 = scmp.eq.s32.totalorder %s41, 0
      %p366 = por %p364, %p365
      %s367 = ssub.s32 %s42, %s54
      %p368 = scmp.eq.s32.totalorder %s367, 0
      %s370 = sadd.s32 %s369, 1
      %s371 = scalar_select %p368, %s369, %s370
      %p374 = pneg %p368
      %p375 = scmp.eq.s32.totalorder %s35, 1
      %p376 = por %p374, %p375
      %p377 = scmp.ne.s32.totalorder %s369, %s372
      %p378 = scmp.eq.s32.totalorder %s35, 0
      %p379 = por %p377, %p378
      %p380 = scmp.ne.s32.totalorder %s369, %s372
      %p381 = scmp.eq.s32.totalorder %s40, 1
      %p382 = por %p380, %p381
      %p383 = scmp.ne.s32.totalorder %s372, %s373
      %p384 = scmp.eq.s32.totalorder %s40, 0
      %p385 = por %p383, %p384
      %p386 = scmp.ne.s32.totalorder %s372, %s373
      %p387 = scmp.eq.s32.totalorder %s41, 1
      %p388 = por %p386, %p387
      %p390 = scmp.ne.s32.totalorder %s373, %s389
      %p391 = scmp.eq.s32.totalorder %s41, 0
      %p392 = por %p390, %p391
      %s393 = ssub.s32 %s42, %s54
      %p394 = scmp.eq.s32.totalorder %s393, 0
      %s396 = sadd.s32 %s395, 1
      %s397 = scalar_select %p394, %s395, %s396
      %p400 = pneg %p394
      %p401 = scmp.eq.s32.totalorder %s35, 1
      %p402 = por %p400, %p401
      %p403 = scmp.ne.s32.totalorder %s395, %s398
      %p404 = scmp.eq.s32.totalorder %s35, 0
      %p405 = por %p403, %p404
      %p406 = scmp.ne.s32.totalorder %s395, %s398
      %p407 = scmp.eq.s32.totalorder %s40, 1
      %p408 = por %p406, %p407
      %p409 = scmp.ne.s32.totalorder %s398, %s399
      %p410 = scmp.eq.s32.totalorder %s40, 0
      %p411 = por %p409, %p410
      %p412 = scmp.ne.s32.totalorder %s398, %s399
      %p413 = scmp.eq.s32.totalorder %s41, 1
      %p414 = por %p412, %p413
      %p416 = scmp.ne.s32.totalorder %s399, %s415
      %p417 = scmp.eq.s32.totalorder %s41, 0
      %p418 = por %p416, %p417
      %s419 = ssub.s32 %s42, %s54
      %p420 = scmp.eq.s32.totalorder %s419, 0
      %s422 = sadd.s32 %s421, 1
      %s423 = scalar_select %p420, %s421, %s422
      %p426 = pneg %p420
      %p427 = scmp.eq.s32.totalorder %s35, 1
      %p428 = por %p426, %p427
      %p429 = scmp.ne.s32.totalorder %s421, %s424
      %p430 = scmp.eq.s32.totalorder %s35, 0
      %p431 = por %p429, %p430
      %p432 = scmp.ne.s32.totalorder %s421, %s424
      %p433 = scmp.eq.s32.totalorder %s40, 1
      %p434 = por %p432, %p433
      %p435 = scmp.ne.s32.totalorder %s424, %s425
      %p436 = scmp.eq.s32.totalorder %s40, 0
      %p437 = por %p435, %p436
      %p438 = scmp.ne.s32.totalorder %s424, %s425
      %p439 = scmp.eq.s32.totalorder %s41, 1
      %p440 = por %p438, %p439
      %p442 = scmp.ne.s32.totalorder %s425, %s441
      %p443 = scmp.eq.s32.totalorder %s41, 0
      %p444 = por %p442, %p443
      %s445 = ssub.s32 %s42, %s54
      %p446 = scmp.eq.s32.totalorder %s445, 0
      %s448 = sadd.s32 %s447, 1
      %s449 = scalar_select %p446, %s447, %s448
      %p452 = pneg %p446
      %p453 = scmp.eq.s32.totalorder %s35, 1
      %p454 = por %p452, %p453
      %p455 = scmp.ne.s32.totalorder %s447, %s450
      %p456 = scmp.eq.s32.totalorder %s35, 0
      %p457 = por %p455, %p456
      %p458 = scmp.ne.s32.totalorder %s447, %s450
      %p459 = scmp.eq.s32.totalorder %s40, 1
      %p460 = por %p458, %p459
      %p461 = scmp.ne.s32.totalorder %s450, %s451
      %p462 = scmp.eq.s32.totalorder %s40, 0
      %p463 = por %p461, %p462
      %p464 = scmp.ne.s32.totalorder %s450, %s451
      %p465 = scmp.eq.s32.totalorder %s41, 1
      %p466 = por %p464, %p465
      %p468 = scmp.ne.s32.totalorder %s451, %s467
      %p469 = scmp.eq.s32.totalorder %s41, 0
      %p470 = por %p468, %p469
      %s471 = ssub.s32 %s42, %s54
      %p472 = scmp.eq.s32.totalorder %s471, 0
      %s474 = sadd.s32 %s473, 1
      %s475 = scalar_select %p472, %s473, %s474
      %p478 = pneg %p472
      %p479 = scmp.eq.s32.totalorder %s35, 1
      %p480 = por %p478, %p479
      %p481 = scmp.ne.s32.totalorder %s473, %s476
      %p482 = scmp.eq.s32.totalorder %s35, 0
      %p483 = por %p481, %p482
      %p484 = scmp.ne.s32.totalorder %s473, %s476
      %p485 = scmp.eq.s32.totalorder %s40, 1
      %p486 = por %p484, %p485
      %p487 = scmp.ne.s32.totalorder %s476, %s477
      %p488 = scmp.eq.s32.totalorder %s40, 0
      %p489 = por %p487, %p488
      %p490 = scmp.ne.s32.totalorder %s476, %s477
      %p491 = scmp.eq.s32.totalorder %s41, 1
      %p492 = por %p490, %p491
      %p494 = scmp.ne.s32.totalorder %s477, %s493
      %p495 = scmp.eq.s32.totalorder %s41, 0
      %p496 = por %p494, %p495
      %s497 = ssub.s32 %s43, %s50
      %p498 = scmp.eq.s32.totalorder %s497, 0
      %s500 = sadd.s32 %s499, 1
      %s501 = scalar_select %p498, %s499, %s500
      %p504 = pneg %p498
      %p505 = scmp.eq.s32.totalorder %s35, 1
      %p506 = por %p504, %p505
      %p507 = scmp.ne.s32.totalorder %s499, %s502
      %p508 = scmp.eq.s32.totalorder %s35, 0
      %p509 = por %p507, %p508
      %p510 = scmp.ne.s32.totalorder %s499, %s502
      %p511 = scmp.eq.s32.totalorder %s40, 1
      %p512 = por %p510, %p511
      %p513 = scmp.ne.s32.totalorder %s502, %s503
      %p514 = scmp.eq.s32.totalorder %s40, 0
      %p515 = por %p513, %p514
      %p516 = scmp.ne.s32.totalorder %s502, %s503
      %p517 = scmp.eq.s32.totalorder %s41, 1
      %p518 = por %p516, %p517
      %p520 = scmp.ne.s32.totalorder %s503, %s519
      %p521 = scmp.eq.s32.totalorder %s41, 0
      %p522 = por %p520, %p521
      %s523 = ssub.s32 %s42, %s54
      %s524 = ssub.s32 %s43, %s50
      %s525 = sor.u32 %s523, %s524
      %p526 = scmp.eq.s32.totalorder %s525, 0
      %s528 = sadd.s32 %s527, 1
      %s529 = scalar_select %p526, %s527, %s528
      %p532 = pneg %p526
      %p533 = scmp.eq.s32.totalorder %s35, 1
      %p534 = por %p532, %p533
      %p535 = scmp.ne.s32.totalorder %s527, %s530
      %p536 = scmp.eq.s32.totalorder %s35, 0
      %p537 = por %p535, %p536
      %p538 = scmp.ne.s32.totalorder %s527, %s530
      %p539 = scmp.eq.s32.totalorder %s40, 1
      %p540 = por %p538, %p539
      %p541 = scmp.ne.s32.totalorder %s530, %s531
      %p542 = scmp.eq.s32.totalorder %s40, 0
      %p543 = por %p541, %p542
      %p544 = scmp.ne.s32.totalorder %s530, %s531
      %p545 = scmp.eq.s32.totalorder %s41, 1
      %p546 = por %p544, %p545
      %p548 = scmp.ne.s32.totalorder %s531, %s547
      %p549 = scmp.eq.s32.totalorder %s41, 0
      %p550 = por %p548, %p549
      %p551 = scmp.le.s32.totalorder 1, %s35
      %p552 = scmp.lt.s32.totalorder %s35, 3
      %p553 = pnand %p551, %p552
      %p554 = pneg %p553
      // Predicated region
      $region9: #{tpu_custom_call.1} parent=5 // pred_check
        _
      $region10: #{tpu_custom_call.1} parent=5 // pred_check_branch
        %556 = sbr.rel (%p553) target = $region12
      $region11: #{tpu_custom_call.1} parent=5 // pred_region
        %s557 = ssub.s32 %s35, 1
        // Predicated region
        $region13: #{tpu_custom_call.1} parent=11 // pred_check
          %p558 = pneg %p73
        $region14: #{tpu_custom_call.1} parent=11 // pred_check_branch
          %560 = sbr.rel (%p558) target = $region16
        $region15: #{tpu_custom_call.1} parent=11 // pred_region
          %s561 = smul.u32 2, %s45
          %p562 = scmp.lt.s32.totalorder %s561, 1
          %s563 = scalar_select %p562, %s561, 1
          %s564 = smul.addr %s563, 2
          %s565 = smul.addr %s564, 8
          %s566 = scalar_lea.vmem %s0, %s565
          %s567 = smul.u32 2, %s45
        $region16: #{tpu_custom_call.1} parent=11 // pred_fallthru
          _
      $region12: #{tpu_custom_call.1} parent=5 // pred_fallthru
        _
      %p568 = scmp.lt.s32.totalorder %s35, 2
      // Predicated region
      $region17: #{tpu_custom_call.1} parent=5 // pred_check
        %p569 = pneg %p568
      $region18: #{tpu_custom_call.1} parent=5 // pred_check_branch
        %571 = sbr.rel (%p569) target = $region20
      $region19: #{tpu_custom_call.1} parent=5 // pred_region
        // Predicated region
        $region21: #{tpu_custom_call.1} parent=19 // pred_check
          %p572 = pneg %p93
        $region22: #{tpu_custom_call.1} parent=19 // pred_check_branch
          %574 = sbr.rel (%p572) target = $region24
        $region23: #{tpu_custom_call.1} parent=19 // pred_region
          %p575 = scmp.lt.s32.totalorder %s42, 1
          %s576 = scalar_select %p575, %s42, 1
          %s577 = smul.addr %s576, 4
          %s578 = smul.addr %s577, 4
          %s579 = scalar_lea.vmem %s1, %s578
        $region24: #{tpu_custom_call.1} parent=19 // pred_fallthru
          _
        // Predicated region
        $region25: #{tpu_custom_call.1} parent=19 // pred_check
          %p580 = pneg %p119
        $region26: #{tpu_custom_call.1} parent=19 // pred_check_branch
          %582 = sbr.rel (%p580) target = $region28
        $region27: #{tpu_custom_call.1} parent=19 // pred_region
          %p583 = scmp.lt.s32.totalorder %s42, 1
          %s584 = scalar_select %p583, %s42, 1
          %s585 = scalar_lea.vmem %s2, %s584
        $region28: #{tpu_custom_call.1} parent=19 // pred_fallthru
          _
        // Predicated region
        $region29: #{tpu_custom_call.1} parent=19 // pred_check
          %p586 = pneg %p145
        $region30: #{tpu_custom_call.1} parent=19 // pred_check_branch
          %588 = sbr.rel (%p586) target = $region32
        $region31: #{tpu_custom_call.1} parent=19 // pred_region
          %p589 = scmp.lt.s32.totalorder %s42, 1
          %s590 = scalar_select %p589, %s42, 1
          %s591 = smul.addr %s590, 4
          %s592 = smul.addr %s591, 4
          %s593 = scalar_lea.vmem %s3, %s592
        $region32: #{tpu_custom_call.1} parent=19 // pred_fallthru
          _
        // Predicated region
        $region33: #{tpu_custom_call.1} parent=19 // pred_check
          %p594 = pneg %p171
        $region34: #{tpu_custom_call.1} parent=19 // pred_check_branch
          %596 = sbr.rel (%p594) target = $region36
        $region35: #{tpu_custom_call.1} parent=19 // pred_region
          %p597 = scmp.lt.s32.totalorder %s42, 1
          %s598 = scalar_select %p597, %s42, 1
          %s599 = scalar_lea.vmem %s4, %s598
        $region36: #{tpu_custom_call.1} parent=19 // pred_fallthru
          _
        // Predicated region
        $region37: #{tpu_custom_call.1} parent=19 // pred_check
          %p600 = pneg %p197
        $region38: #{tpu_custom_call.1} parent=19 // pred_check_branch
          %602 = sbr.rel (%p600) target = $region40
        $region39: #{tpu_custom_call.1} parent=19 // pred_region
          %s603 = sand.u32 %s187, 1
          %s604 = scalar_lea.sflag [#allocation3], %s603
          %s605 = sand.u32 %s187, 1
          %s606 = smul.addr %s605, 16
          %s607 = scalar_lea.vmem [#allocation2], %s606
          %s609 = ssub.s32 256, 256
          %610 = vsyncadd %s604, %s609
          %s611 = smul.addr %s42, 4
          %s612 = smul.addr %s611, 64
          %s613 = scalar_lea.hbm %s5, %s612
          %s614 = sshll.u32 %s607, 4
          %s615 = int_to_ptr.vmem [resolvable:$true] %s614
          %620 = dma.hbm_to_vmem [thread:$0]  %s613, 256, %s615, %s604, 64, 64, 4
        $region40: #{tpu_custom_call.1} parent=19 // pred_fallthru
          _
        // Predicated region
        $region41: #{tpu_custom_call.1} parent=19 // pred_check
          %p621 = pneg %p223
        $region42: #{tpu_custom_call.1} parent=19 // pred_check_branch
          %623 = sbr.rel (%p621) target = $region44
        $region43: #{tpu_custom_call.1} parent=19 // pred_region
          %p624 = scmp.lt.s32.totalorder %s42, 1
          %s625 = scalar_select %p624, %s42, 1
          %s626 = scalar_lea.vmem %s6, %s625
        $region44: #{tpu_custom_call.1} parent=19 // pred_fallthru
          _
        // Predicated region
        $region45: #{tpu_custom_call.1} parent=19 // pred_check
          %p627 = pneg %p249
        $region46: #{tpu_custom_call.1} parent=19 // pred_check_branch
          %629 = sbr.rel (%p627) target = $region48
        $region47: #{tpu_custom_call.1} parent=19 // pred_region
          %s630 = sand.u32 %s35, 1
          %s631 = scalar_lea.sflag [#allocation6], %s630
          %s632 = sand.u32 %s239, 1
          %s633 = smul.addr %s632, 16
          %s634 = scalar_lea.vmem [#allocation5], %s633
          %s636 = ssub.s32 256, 256
          %637 = vsyncadd %s631, %s636
          %s638 = smul.addr %s42, 4
          %s639 = smul.addr %s638, 64
          %s640 = scalar_lea.hbm %s7, %s639
          %s641 = sshll.u32 %s634, 4
          %s642 = int_to_ptr.vmem [resolvable:$true] %s641
          %647 = dma.hbm_to_vmem [thread:$0]  %s640, 256, %s642, %s631, 64, 64, 4
        $region48: #{tpu_custom_call.1} parent=19 // pred_fallthru
          _
        // Predicated region
        $region49: #{tpu_custom_call.1} parent=19 // pred_check
          %p648 = pneg %p275
        $region50: #{tpu_custom_call.1} parent=19 // pred_check_branch
          %650 = sbr.rel (%p648) target = $region52
        $region51: #{tpu_custom_call.1} parent=19 // pred_region
          %p651 = scmp.lt.s32.totalorder %s42, 1
          %s652 = scalar_select %p651, %s42, 1
          %s653 = scalar_lea.vmem %s8, %s652
        $region52: #{tpu_custom_call.1} parent=19 // pred_fallthru
          _
        // Predicated region
        $region53: #{tpu_custom_call.1} parent=19 // pred_check
          %p654 = pneg %p301
        $region54: #{tpu_custom_call.1} parent=19 // pred_check_branch
          %656 = sbr.rel (%p654) target = $region56
        $region55: #{tpu_custom_call.1} parent=19 // pred_region
          %p657 = scmp.lt.s32.totalorder %s42, 1
          %s658 = scalar_select %p657, %s42, 1
          %s659 = scalar_lea.vmem %s9, %s658
        $region56: #{tpu_custom_call.1} parent=19 // pred_fallthru
          _
        // Predicated region
        $region57: #{tpu_custom_call.1} parent=19 // pred_check
          %p660 = pneg %p327
        $region58: #{tpu_custom_call.1} parent=19 // pred_check_branch
          %662 = sbr.rel (%p660) target = $region60
        $region59: #{tpu_custom_call.1} parent=19 // pred_region
          %p663 = scmp.lt.s32.totalorder %s42, 1
          %s664 = scalar_select %p663, %s42, 1
          %s665 = scalar_lea.vmem %s10, %s664
        $region60: #{tpu_custom_call.1} parent=19 // pred_fallthru
          _
        // Predicated region
        $region61: #{tpu_custom_call.1} parent=19 // pred_check
          %p666 = pneg %p353
        $region62: #{tpu_custom_call.1} parent=19 // pred_check_branch
          %668 = sbr.rel (%p666) target = $region64
        $region63: #{tpu_custom_call.1} parent=19 // pred_region
          %s669 = sand.u32 %s35, 1
          %s670 = scalar_lea.sflag [#allocation6], %s669
          %s671 = sand.u32 %s343, 1
          %s672 = smul.addr %s671, 16
          %s673 = scalar_lea.vmem [#allocation7], %s672
          %s675 = ssub.s32 256, 256
          %676 = vsyncadd %s670, %s675
          %s677 = smul.addr %s42, 4
          %s678 = smul.addr %s677, 64
          %s679 = scalar_lea.hbm %s11, %s678
          %s680 = sshll.u32 %s673, 4
          %s681 = int_to_ptr.vmem [resolvable:$true] %s680
          %686 = dma.hbm_to_vmem [thread:$0]  %s679, 256, %s681, %s670, 64, 64, 4
        $region64: #{tpu_custom_call.1} parent=19 // pred_fallthru
          _
        // Predicated region
        $region65: #{tpu_custom_call.1} parent=19 // pred_check
          %p687 = pneg %p379
        $region66: #{tpu_custom_call.1} parent=19 // pred_check_branch
          %689 = sbr.rel (%p687) target = $region68
        $region67: #{tpu_custom_call.1} parent=19 // pred_region
          %p690 = scmp.lt.s32.totalorder %s42, 1
          %s691 = scalar_select %p690, %s42, 1
          %s692 = scalar_lea.vmem %s12, %s691
        $region68: #{tpu_custom_call.1} parent=19 // pred_fallthru
          _
        // Predicated region
        $region69: #{tpu_custom_call.1} parent=19 // pred_check
          %p693 = pneg %p405
        $region70: #{tpu_custom_call.1} parent=19 // pred_check_branch
          %695 = sbr.rel (%p693) target = $region72
        $region71: #{tpu_custom_call.1} parent=19 // pred_region
          %p696 = scmp.lt.s32.totalorder %s42, 1
          %s697 = scalar_select %p696, %s42, 1
          %s698 = smul.addr %s697, 8
          %s699 = smul.addr %s698, 4
          %s700 = scalar_lea.vmem %s13, %s699
        $region72: #{tpu_custom_call.1} parent=19 // pred_fallthru
          _
        // Predicated region
        $region73: #{tpu_custom_call.1} parent=19 // pred_check
          %p701 = pneg %p431
        $region74: #{tpu_custom_call.1} parent=19 // pred_check_branch
          %703 = sbr.rel (%p701) target = $region76
        $region75: #{tpu_custom_call.1} parent=19 // pred_region
          %p704 = scmp.lt.s32.totalorder %s42, 1
          %s705 = scalar_select %p704, %s42, 1
          %s706 = scalar_lea.vmem %s14, %s705
        $region76: #{tpu_custom_call.1} parent=19 // pred_fallthru
          _
        // Predicated region
        $region77: #{tpu_custom_call.1} parent=19 // pred_check
          %p707 = pneg %p457
        $region78: #{tpu_custom_call.1} parent=19 // pred_check_branch
          %709 = sbr.rel (%p707) target = $region80
        $region79: #{tpu_custom_call.1} parent=19 // pred_region
          %p710 = scmp.lt.s32.totalorder %s42, 1
          %s711 = scalar_select %p710, %s42, 1
          %s712 = scalar_lea.vmem %s15, %s711
        $region80: #{tpu_custom_call.1} parent=19 // pred_fallthru
          _
        // Predicated region
        $region81: #{tpu_custom_call.1} parent=19 // pred_check
          %p713 = pneg %p483
        $region82: #{tpu_custom_call.1} parent=19 // pred_check_branch
          %715 = sbr.rel (%p713) target = $region84
        $region83: #{tpu_custom_call.1} parent=19 // pred_region
          %p716 = scmp.lt.s32.totalorder %s42, 1
          %s717 = scalar_select %p716, %s42, 1
          %s718 = scalar_lea.vmem %s16, %s717
        $region84: #{tpu_custom_call.1} parent=19 // pred_fallthru
          _
      $region20: #{tpu_custom_call.1} parent=5 // pred_fallthru
        _
      %p719 = scmp.le.s32.totalorder 1, %s35
      %p720 = scmp.lt.s32.totalorder %s35, 3
      %p721 = pnand %p719, %p720
      %p722 = pneg %p721
      // Predicated region
      $region85: #{tpu_custom_call.1} parent=5 // pred_check
        _
      $region86: #{tpu_custom_call.1} parent=5 // pred_check_branch
        %724 = sbr.rel (%p721) target = $region88
      $region87: #{tpu_custom_call.1} parent=5 // pred_region
        %s725 = ssub.s32 %s35, 1
        %s726 = sand.u32 %s190, 1
        %s727 = scalar_lea.sflag [#allocation3], %s726
        %s728 = sand.u32 %s190, 1
        %s729 = smul.addr %s728, 16
        %s730 = scalar_lea.vmem [#allocation2], %s729
        // Predicated region
        $region89: #{tpu_custom_call.1} parent=87 // pred_check
          %p731 = pneg %p203
        $region90: #{tpu_custom_call.1} parent=87 // pred_check_branch
          %733 = sbr.rel (%p731) target = $region92
        $region91: #{tpu_custom_call.1} parent=87 // pred_region
          %734 = dma.done %s727, 256
        $region92: #{tpu_custom_call.1} parent=87 // pred_fallthru
          _
        %s735 = sand.u32 %s40, 1
        %s736 = scalar_lea.sflag [#allocation6], %s735
        %s737 = sand.u32 %s242, 1
        %s738 = smul.addr %s737, 16
        %s739 = scalar_lea.vmem [#allocation5], %s738
        // Predicated region
        $region93: #{tpu_custom_call.1} parent=87 // pred_check
          %p740 = pneg %p255
        $region94: #{tpu_custom_call.1} parent=87 // pred_check_branch
          %742 = sbr.rel (%p740) target = $region96
        $region95: #{tpu_custom_call.1} parent=87 // pred_region
          %743 = dma.done %s736, 256
        $region96: #{tpu_custom_call.1} parent=87 // pred_fallthru
          _
        %s744 = sand.u32 %s40, 1
        %s745 = scalar_lea.sflag [#allocation6], %s744
        %s746 = sand.u32 %s346, 1
        %s747 = smul.addr %s746, 16
        %s748 = scalar_lea.vmem [#allocation7], %s747
        // Predicated region
        $region97: #{tpu_custom_call.1} parent=87 // pred_check
          %p749 = pneg %p359
        $region98: #{tpu_custom_call.1} parent=87 // pred_check_branch
          %751 = sbr.rel (%p749) target = $region100
        $region99: #{tpu_custom_call.1} parent=87 // pred_region
          %752 = dma.done %s745, 256
        $region100: #{tpu_custom_call.1} parent=87 // pred_fallthru
          _
        %s753 = smul.u32 2, %s45
        %p754 = scmp.lt.s32.totalorder %s753, 1
        %s755 = scalar_select %p754, %s753, 1
        %s756 = smul.addr %s755, 2
        %s757 = smul.addr %s756, 8
        %s758 = scalar_lea.vmem %s0, %s757
        %p759 = pneg %p73
        %p760 = pneg %p70
        %p761 = scmp.lt.s32.totalorder %s44, 1
        %s762 = scalar_select %p761, %s44, 1
        %s763 = smul.addr %s762, 4
        %s764 = smul.addr %s763, 4
        %s765 = scalar_lea.vmem %s1, %s764
        %p766 = pneg %p99
        %p767 = pneg %p96
        %p768 = scmp.lt.s32.totalorder %s44, 1
        %s769 = scalar_select %p768, %s44, 1
        %s770 = scalar_lea.vmem %s2, %s769
        %p771 = pneg %p125
        %p772 = pneg %p122
        %p773 = scmp.lt.s32.totalorder %s44, 1
        %s774 = scalar_select %p773, %s44, 1
        %s775 = smul.addr %s774, 4
        %s776 = smul.addr %s775, 4
        %s777 = scalar_lea.vmem %s3, %s776
        %p778 = pneg %p151
        %p779 = pneg %p148
        %p780 = scmp.lt.s32.totalorder %s44, 1
        %s781 = scalar_select %p780, %s44, 1
        %s782 = scalar_lea.vmem %s4, %s781
        %p783 = pneg %p177
        %p784 = pneg %p174
        %s785 = sand.u32 %s190, 1
        %s786 = scalar_lea.sflag [#allocation3], %s785
        %s787 = sand.u32 %s190, 1
        %s788 = smul.addr %s787, 16
        %s789 = scalar_lea.vmem [#allocation2], %s788
        %p790 = pneg %p203
        %p791 = pneg %p200
        %p792 = scmp.lt.s32.totalorder %s44, 1
        %s793 = scalar_select %p792, %s44, 1
        %s794 = scalar_lea.vmem %s6, %s793
        %p795 = pneg %p229
        %p796 = pneg %p226
        %s797 = sand.u32 %s40, 1
        %s798 = scalar_lea.sflag [#allocation6], %s797
        %s799 = sand.u32 %s242, 1
        %s800 = smul.addr %s799, 16
        %s801 = scalar_lea.vmem [#allocation5], %s800
        %p802 = pneg %p255
        %p803 = pneg %p252
        %p804 = scmp.lt.s32.totalorder %s44, 1
        %s805 = scalar_select %p804, %s44, 1
        %s806 = scalar_lea.vmem %s8, %s805
        %p807 = pneg %p281
        %p808 = pneg %p278
        %p809 = scmp.lt.s32.totalorder %s44, 1
        %s810 = scalar_select %p809, %s44, 1
        %s811 = scalar_lea.vmem %s9, %s810
        %p812 = pneg %p307
        %p813 = pneg %p304
        %p814 = scmp.lt.s32.totalorder %s44, 1
        %s815 = scalar_select %p814, %s44, 1
        %s816 = scalar_lea.vmem %s10, %s815
        %p817 = pneg %p333
        %p818 = pneg %p330
        %s819 = sand.u32 %s40, 1
        %s820 = scalar_lea.sflag [#allocation6], %s819
        %s821 = sand.u32 %s346, 1
        %s822 = smul.addr %s821, 16
        %s823 = scalar_lea.vmem [#allocation7], %s822
        %p824 = pneg %p359
        %p825 = pneg %p356
        %p826 = scmp.lt.s32.totalorder %s44, 1
        %s827 = scalar_select %p826, %s44, 1
        %s828 = scalar_lea.vmem %s12, %s827
        %p829 = pneg %p385
        %p830 = pneg %p382
        %p831 = scmp.lt.s32.totalorder %s44, 1
        %s832 = scalar_select %p831, %s44, 1
        %s833 = smul.addr %s832, 8
        %s834 = smul.addr %s833, 4
        %s835 = scalar_lea.vmem %s13, %s834
        %p836 = pneg %p411
        %p837 = pneg %p408
        %p838 = scmp.lt.s32.totalorder %s44, 1
        %s839 = scalar_select %p838, %s44, 1
        %s840 = scalar_lea.vmem %s14, %s839
        %p841 = pneg %p437
        %p842 = pneg %p434
        %p843 = scmp.lt.s32.totalorder %s44, 1
        %s844 = scalar_select %p843, %s44, 1
        %s845 = scalar_lea.vmem %s15, %s844
        %p846 = pneg %p463
        %p847 = pneg %p460
        %p848 = scmp.lt.s32.totalorder %s44, 1
        %s849 = scalar_select %p848, %s44, 1
        %s850 = scalar_lea.vmem %s16, %s849
        %p851 = pneg %p489
        %p852 = pneg %p486
        %p853 = pneg %p515
        %p854 = pneg %p512
        %p855 = pneg %p543
        %p856 = pneg %p540
        %s857 = sand.u32 %s530, 1
        %s858 = scalar_lea.sflag [#allocation10], %s857
        %s859 = sand.u32 %s530, 1
        %s860 = smul.addr %s859, 128
        %s861 = scalar_lea.vmem [#allocation9], %s860
        %s862 = smul.u32 2, %s45
        %p863 = scmp.lt.s32.totalorder %s862, 1
        %s864 = scalar_select %p863, %s862, 1
        %s865 = smul.addr %s864, 2
        %s866 = smul.addr %s865, 8
        %s867 = scalar_lea.vmem %s0, %s866
        %s868 = smul.u32 2, %s45
        %p869 = scmp.lt.s32.totalorder %s44, 1
        %s870 = scalar_select %p869, %s44, 1
        %s871 = smul.addr %s870, 4
        %s872 = smul.addr %s871, 4
        %s873 = scalar_lea.vmem %s1, %s872
        %p874 = scmp.lt.s32.totalorder %s44, 1
        %s875 = scalar_select %p874, %s44, 1
        %s876 = scalar_lea.vmem %s2, %s875
        %p877 = scmp.lt.s32.totalorder %s44, 1
        %s878 = scalar_select %p877, %s44, 1
        %s879 = smul.addr %s878, 4
        %s880 = smul.addr %s879, 4
        %s881 = scalar_lea.vmem %s3, %s880
        %p882 = scmp.lt.s32.totalorder %s44, 1
        %s883 = scalar_select %p882, %s44, 1
        %s884 = scalar_lea.vmem %s4, %s883
        %p885 = scmp.lt.s32.totalorder %s44, 1
        %s886 = scalar_select %p885, %s44, 1
        %s887 = scalar_lea.vmem %s6, %s886
        %p888 = scmp.lt.s32.totalorder %s44, 1
        %s889 = scalar_select %p888, %s44, 1
        %s890 = scalar_lea.vmem %s8, %s889
        %p891 = scmp.lt.s32.totalorder %s44, 1
        %s892 = scalar_select %p891, %s44, 1
        %s893 = scalar_lea.vmem %s9, %s892
        %p894 = scmp.lt.s32.totalorder %s44, 1
        %s895 = scalar_select %p894, %s44, 1
        %s896 = scalar_lea.vmem %s10, %s895
        %p897 = scmp.lt.s32.totalorder %s44, 1
        %s898 = scalar_select %p897, %s44, 1
        %s899 = scalar_lea.vmem %s12, %s898
        %p900 = scmp.lt.s32.totalorder %s44, 1
        %s901 = scalar_select %p900, %s44, 1
        %s902 = smul.addr %s901, 8
        %s903 = smul.addr %s902, 4
        %s904 = scalar_lea.vmem %s13, %s903
        %p905 = scmp.lt.s32.totalorder %s44, 1
        %s906 = scalar_select %p905, %s44, 1
        %s907 = scalar_lea.vmem %s14, %s906
        %p908 = scmp.lt.s32.totalorder %s44, 1
        %s909 = scalar_select %p908, %s44, 1
        %s910 = scalar_lea.vmem %s15, %s909
        %p911 = scmp.lt.s32.totalorder %s44, 1
        %s912 = scalar_select %p911, %s44, 1
        %s913 = scalar_lea.vmem %s16, %s912
        %s914 = smul.u32 2, %s45
        %s915 = smul.u32 2, %s45
        %v917 = vld [vmem:[%s867] sm:$0xff]
        %v918 = vld [vmem:[%s867 + $0x8] sm:$0xff]
        %v919 = vld [vmem:[%s867 + $0x10] sm:$0xff]
        %v920 = vld [vmem:[%s867 + $0x18] sm:$0xff]
        %v921 = vpack.c.bf16 %v918, %v917
        %v922 = vpack.c.bf16 %v920, %v919
        %v923 = vld [vmem:[%s873] sm:$0xf]
        %v924 = vld [vmem:[%s873 + $0x4] sm:$0xf]
        %v925 = vld [vmem:[%s873 + $0x8] sm:$0xf]
        %v926 = vld [vmem:[%s873 + $0xc] sm:$0xf]
        %v927 = vld [vmem:[%s876] sm:$0x1]
        %v929 = vlaneseq
        %v930 = vshrl.u32 %v929, 7
        %v931 = vsub.s32 0, %v930
        %v932 = vrot.slane %v927, %v931
        %v938 = vunpack.c.l.b16 %v923
        %v939 = vunpack.c.l.b16 %v924
        %v940 = vunpack.c.l.b16 %v925
        %v941 = vunpack.c.l.b16 %v926
        %v942 = vpack.c.b16 %v939, %v938
        %v943 = vpack.c.b16 %v941, %v940
        %vm946 = vcmask 261120
        %v948 = vsel %vm946, %v921, 0
        %v951 = vsel %vm946, %v922, 0
        %953 = vmatprep.subr.bf16.mxu0 0
        %954 = vmatpush1.bf16.msra.mxu0 0
        %955 = vmatprep.subr.bf16.mxu0 0
        %956 = vmatpush1.bf16.msra.mxu0 0
        %957 = vmatprep.subr.bf16.mxu0 0
        %958 = vmatpush1.bf16.msra.mxu0 0
        %959 = vmatprep.subr.bf16.mxu0 0
        %960 = vmatpush1.bf16.msra.mxu0 0
        %961 = vmatprep.subr.bf16.mxu0 0
        %962 = vmatpush1.bf16.msra.mxu0 0
        %963 = vmatprep.subr.bf16.mxu0 0
        %964 = vmatpush1.bf16.msra.mxu0 0
        %965 = vmatprep.subr.bf16.mxu0 0
        %966 = vmatpush1.bf16.msra.mxu0 %v943
        %967 = vmatprep.subr.bf16.mxu0 0
        %968 = vmatpush1.bf16.msra.mxu0 %v942
        %969 = vmatprep.subr.bf16.mxu0 0
        %970 = vmatpush2.bf16.msra.mxu0 0
        %971 = vmatprep.subr.bf16.mxu0 0
        %972 = vmatpush2.bf16.msra.mxu0 0
        %973 = vmatprep.subr.bf16.mxu0 0
        %974 = vmatpush2.bf16.msra.mxu0 0
        %975 = vmatprep.subr.bf16.mxu0 0
        %976 = vmatpush2.bf16.msra.mxu0 0
        %977 = vmatprep.subr.bf16.mxu0 0
        %978 = vmatpush2.bf16.msra.mxu0 0
        %979 = vmatprep.subr.bf16.mxu0 0
        %980 = vmatpush2.bf16.msra.mxu0 0
        %981 = vmatprep.subr.bf16.mxu0 0
        %982 = vmatpush2.bf16.msra.mxu0 0
        %983 = vmatprep.subr.bf16.mxu0 0
        %984 = vmatpush2.bf16.msra.mxu0 0
        %985 = vmatprep.mubr.bf16.mxu0 0
        %986 = vmatmul.mubr.bf16.gmra.mxu0 %v948
        %v987 = vpop.f32.mrf.mxu0
        %v988 = vadd.f32 %v932, %v987
        %v989 = vpop.f32.mrf.mxu0
        %v990 = vpop.f32.mrf.mxu0
        %v991 = vadd.f32 %v932, %v990
        %v992 = vpop.f32.mrf.mxu0
        %993 = vmatprep.mubr.bf16.mxu0 0
        %994 = vmatmul.mubr.bf16.gmra.mxu0 %v951
        %v995 = vpop.f32.mrf.mxu0
        %v996 = vadd.f32 %v932, %v995
        %v997 = vpop.f32.mrf.mxu0
        %v998 = vpop.f32.mrf.mxu0
        %v999 = vadd.f32 %v932, %v998
        %v1000 = vpop.f32.mrf.mxu0
        %1001 = vdwg.mxu0
        %v1002 = vmul.f32 %v988, 0.125
        %v1003 = vmul.f32 %v991, 0.125
        %v1004 = vmul.f32 %v996, 0.125
        %v1005 = vmul.f32 %v999, 0.125
        %v1006 = vld [vmem:[%s881] sm:$0xf]
        %v1007 = vld [vmem:[%s881 + $0x4] sm:$0xf]
        %v1008 = vld [vmem:[%s881 + $0x8] sm:$0xf]
        %v1009 = vld [vmem:[%s881 + $0xc] sm:$0xf]
        %v1010 = vld [vmem:[%s884] sm:$0x1]
        %v1012 = vlaneseq
        %v1013 = vshrl.u32 %v1012, 7
        %v1014 = vsub.s32 0, %v1013
        %v1015 = vrot.slane %v1010, %v1014
        %v1021 = vunpack.c.l.b16 %v1006
        %v1022 = vunpack.c.l.b16 %v1007
        %v1023 = vunpack.c.l.b16 %v1008
        %v1024 = vunpack.c.l.b16 %v1009
        %v1025 = vpack.c.b16 %v1022, %v1021
        %v1026 = vpack.c.b16 %v1024, %v1023
        %1029 = vmatprep.subr.bf16.mxu0 0
        %1030 = vmatpush1.bf16.msra.mxu0 0
        %1031 = vmatprep.subr.bf16.mxu0 0
        %1032 = vmatpush1.bf16.msra.mxu0 0
        %1033 = vmatprep.subr.bf16.mxu0 0
        %1034 = vmatpush1.bf16.msra.mxu0 0
        %1035 = vmatprep.subr.bf16.mxu0 0
        %1036 = vmatpush1.bf16.msra.mxu0 0
        %1037 = vmatprep.subr.bf16.mxu0 0
        %1038 = vmatpush1.bf16.msra.mxu0 0
        %1039 = vmatprep.subr.bf16.mxu0 0
        %1040 = vmatpush1.bf16.msra.mxu0 0
        %1041 = vmatprep.subr.bf16.mxu0 0
        %1042 = vmatpush1.bf16.msra.mxu0 %v1026
        %1043 = vmatprep.subr.bf16.mxu0 0
        %1044 = vmatpush1.bf16.msra.mxu0 %v1025
        %1045 = vmatprep.subr.bf16.mxu0 0
        %1046 = vmatpush2.bf16.msra.mxu0 0
        %1047 = vmatprep.subr.bf16.mxu0 0
        %1048 = vmatpush2.bf16.msra.mxu0 0
        %1049 = vmatprep.subr.bf16.mxu0 0
        %1050 = vmatpush2.bf16.msra.mxu0 0
        %1051 = vmatprep.subr.bf16.mxu0 0
        %1052 = vmatpush2.bf16.msra.mxu0 0
        %1053 = vmatprep.subr.bf16.mxu0 0
        %1054 = vmatpush2.bf16.msra.mxu0 0
        %1055 = vmatprep.subr.bf16.mxu0 0
        %1056 = vmatpush2.bf16.msra.mxu0 0
        %1057 = vmatprep.subr.bf16.mxu0 0
        %1058 = vmatpush2.bf16.msra.mxu0 0
        %1059 = vmatprep.subr.bf16.mxu0 0
        %1060 = vmatpush2.bf16.msra.mxu0 0
        %1061 = vmatprep.mubr.bf16.mxu0 0
        %1062 = vmatmul.mubr.bf16.gmra.mxu0 %v948
        %v1063 = vpop.f32.mrf.mxu0
        %v1064 = vadd.f32 %v1015, %v1063
        %v1065 = vpop.f32.mrf.mxu0
        %v1066 = vpop.f32.mrf.mxu0
        %v1067 = vadd.f32 %v1015, %v1066
        %v1068 = vpop.f32.mrf.mxu0
        %1069 = vmatprep.mubr.bf16.mxu0 0
        %1070 = vmatmul.mubr.bf16.gmra.mxu0 %v951
        %v1071 = vpop.f32.mrf.mxu0
        %v1072 = vadd.f32 %v1015, %v1071
        %v1073 = vpop.f32.mrf.mxu0
        %v1074 = vpop.f32.mrf.mxu0
        %v1075 = vadd.f32 %v1015, %v1074
        %v1076 = vpop.f32.mrf.mxu0
        %1077 = vdwg.mxu0
        %v1078 = vpack.c.bf16 %v1003, %v1002
        %v1079 = vpack.c.bf16 %v1005, %v1004
        %v1080 = vpack.c.bf16 %v1067, %v1064
        %v1081 = vpack.c.bf16 %v1075, %v1072
        %vm1082 = vcmask 64512
        %v1084 = vsel %vm1082, %v1078, 0
        %v1087 = vsel %vm1082, %v1080, 0
        %1089 = vmatprep.subr.bf16.mxu0 0
        %1090 = vmatpush1.bf16.xpose.msra.mxu0 0
        %1091 = vmatprep.subr.bf16.mxu0 0
        %1092 = vmatpush1.bf16.xpose.msra.mxu0 0
        %1093 = vmatprep.subr.bf16.mxu0 0
        %1094 = vmatpush1.bf16.xpose.msra.mxu0 0
        %1095 = vmatprep.subr.bf16.mxu0 0
        %1096 = vmatpush1.bf16.xpose.msra.mxu0 0
        %1097 = vmatprep.subr.bf16.mxu0 0
        %1098 = vmatpush1.bf16.xpose.msra.mxu0 0
        %1099 = vmatprep.subr.bf16.mxu0 0
        %1100 = vmatpush1.bf16.xpose.msra.mxu0 0
        %1101 = vmatprep.subr.bf16.mxu0 0
        %1102 = vmatpush1.bf16.xpose.msra.mxu0 0
        %1103 = vmatprep.subr.bf16.mxu0 0
        %1104 = vmatpush1.bf16.xpose.msra.mxu0 %v1087
        %1105 = vmatprep.subr.bf16.mxu0 0
        %1106 = vmatpush2.bf16.xpose.msra.mxu0 0
        %1107 = vmatprep.subr.bf16.mxu0 0
        %1108 = vmatpush2.bf16.xpose.msra.mxu0 0
        %1109 = vmatprep.subr.bf16.mxu0 0
        %1110 = vmatpush2.bf16.xpose.msra.mxu0 0
        %1111 = vmatprep.subr.bf16.mxu0 0
        %1112 = vmatpush2.bf16.xpose.msra.mxu0 0
        %1113 = vmatprep.subr.bf16.mxu0 0
        %1114 = vmatpush2.bf16.xpose.msra.mxu0 0
        %1115 = vmatprep.subr.bf16.mxu0 0
        %1116 = vmatpush2.bf16.xpose.msra.mxu0 0
        %1117 = vmatprep.subr.bf16.mxu0 0
        %1118 = vmatpush2.bf16.xpose.msra.mxu0 0
        %1119 = vmatprep.subr.bf16.mxu0 0
        %1120 = vmatpush2.bf16.xpose.msra.mxu0 0
        %1121 = vmatprep.mubr.bf16.mxu0 0
        %1122 = vmatmul.mubr.bf16.gmra.mxu0 %v1084
        %v1123 = vpop.f32.mrf.mxu0
        %v1124 = vadd.f32 0.0, %v1123
        %v1125 = vpop.f32.mrf.mxu0
        %v1126 = vpop.f32.mrf.mxu0
        %v1127 = vadd.f32 0.0, %v1126
        %v1128 = vpop.f32.mrf.mxu0
        %1129 = vdwg.mxu0
        %v1131 = vsel %vm1082, %v1079, 0
        %v1134 = vsel %vm1082, %v1081, 0
        %1136 = vmatprep.subr.bf16.mxu0 0
        %1137 = vmatpush1.bf16.xpose.msra.mxu0 0
        %1138 = vmatprep.subr.bf16.mxu0 0
        %1139 = vmatpush1.bf16.xpose.msra.mxu0 0
        %1140 = vmatprep.subr.bf16.mxu0 0
        %1141 = vmatpush1.bf16.xpose.msra.mxu0 0
        %1142 = vmatprep.subr.bf16.mxu0 0
        %1143 = vmatpush1.bf16.xpose.msra.mxu0 0
        %1144 = vmatprep.subr.bf16.mxu0 0
        %1145 = vmatpush1.bf16.xpose.msra.mxu0 0
        %1146 = vmatprep.subr.bf16.mxu0 0
        %1147 = vmatpush1.bf16.xpose.msra.mxu0 0
        %1148 = vmatprep.subr.bf16.mxu0 0
        %1149 = vmatpush1.bf16.xpose.msra.mxu0 0
        %1150 = vmatprep.subr.bf16.mxu0 0
        %1151 = vmatpush1.bf16.xpose.msra.mxu0 %v1134
        %1152 = vmatprep.subr.bf16.mxu0 0
        %1153 = vmatpush2.bf16.xpose.msra.mxu0 0
        %1154 = vmatprep.subr.bf16.mxu0 0
        %1155 = vmatpush2.bf16.xpose.msra.mxu0 0
        %1156 = vmatprep.subr.bf16.mxu0 0
        %1157 = vmatpush2.bf16.xpose.msra.mxu0 0
        %1158 = vmatprep.subr.bf16.mxu0 0
        %1159 = vmatpush2.bf16.xpose.msra.mxu0 0
        %1160 = vmatprep.subr.bf16.mxu0 0
        %1161 = vmatpush2.bf16.xpose.msra.mxu0 0
        %1162 = vmatprep.subr.bf16.mxu0 0
        %1163 = vmatpush2.bf16.xpose.msra.mxu0 0
        %1164 = vmatprep.subr.bf16.mxu0 0
        %1165 = vmatpush2.bf16.xpose.msra.mxu0 0
        %1166 = vmatprep.subr.bf16.mxu0 0
        %1167 = vmatpush2.bf16.xpose.msra.mxu0 0
        %1168 = vmatprep.mubr.bf16.mxu0 0
        %1169 = vmatmul.mubr.bf16.gmra.mxu0 %v1131
        %v1170 = vpop.f32.mrf.mxu0
        %v1171 = vadd.f32 0.0, %v1170
        %v1172 = vpop.f32.mrf.mxu0
        %v1173 = vpop.f32.mrf.mxu0
        %v1174 = vadd.f32 0.0, %v1173
        %v1175 = vpop.f32.mrf.mxu0
        %1176 = vdwg.mxu0
        %vm1177 = vcmask 130048
        %v1178 = vsel %vm1177, %v1124, -inf
        %1179 = vmax.xlane.f32.xlu0 %v1178
        %v1180 = vpop.xlane.xlu0 %1179
        %v1181 = vsel %vm1177, %v1127, -inf
        %1182 = vmax.xlane.f32.xlu0 %v1181
        %v1183 = vpop.xlane.xlu0 %1182
        %v1184 = vsel %vm1177, %v1171, -inf
        %1185 = vmax.xlane.f32.xlu0 %v1184
        %v1186 = vpop.xlane.xlu0 %1185
        %v1187 = vsel %vm1177, %v1174, -inf
        %1188 = vmax.xlane.f32.xlu0 %v1187
        %v1189 = vpop.xlane.xlu0 %1188
        %v1190 = vsub.f32 %v1124, %v1180
        %v1191 = vsub.f32 %v1127, %v1183
        %v1192 = vsub.f32 %v1171, %v1186
        %v1193 = vsub.f32 %v1174, %v1189
        %v1194 = vmul.f32 %v1190, 1.442695
        %v1195 = vpow.pop %v1194
        %v1196 = vmul.f32 %v1191, 1.442695
        %v1197 = vpow.pop %v1196
        %v1198 = vmul.f32 %v1192, 1.442695
        %v1199 = vpow.pop %v1198
        %v1200 = vmul.f32 %v1193, 1.442695
        %v1201 = vpow.pop %v1200
        %v1202 = vsel %vm1177, %v1195, 0.0
        %1203 = vadd.xlane.f32.xlu0 %v1202
        %v1204 = vpop.xlane.xlu0 %1203
        %v1205 = vsel %vm1177, %v1197, 0.0
        %1206 = vadd.xlane.f32.xlu0 %v1205
        %v1207 = vpop.xlane.xlu0 %1206
        %v1208 = vsel %vm1177, %v1199, 0.0
        %1209 = vadd.xlane.f32.xlu0 %v1208
        %v1210 = vpop.xlane.xlu0 %1209
        %v1211 = vsel %vm1177, %v1201, 0.0
        %1212 = vadd.xlane.f32.xlu0 %v1211
        %v1213 = vpop.xlane.xlu0 %1212
        %v1214 = vrcp.pop %v1204
        %v1215 = vrcp.pop %v1207
        %v1216 = vrcp.pop %v1210
        %v1217 = vrcp.pop %v1213
        %v1218 = vmul.f32 %v1195, %v1214
        %v1219 = vmul.f32 %v1197, %v1215
        %v1220 = vmul.f32 %v1199, %v1216
        %v1221 = vmul.f32 %v1201, %v1217
        %1222 = vst.msk [vmem:[%s861] sm:$0xff] %vm1177, %v1218
        %1223 = vst.msk [vmem:[%s861 + $0x8] sm:$0xff] %vm1177, %v1219
        %1224 = vst.msk [vmem:[%s861 + $0x40] sm:$0xff] %vm1177, %v1220
        %1225 = vst.msk [vmem:[%s861 + $0x48] sm:$0xff] %vm1177, %v1221
        %1227 = vrot.lane.b32.xlu0 %v1078, 120
        %v1228 = vpop.permute.xlu0 %1227
        %1230 = vrot.lane.b32.xlu0 %v1080, 120
        %v1231 = vpop.permute.xlu0 %1230
        %v1233 = vsel %vm1082, %v1228, 0
        %v1236 = vsel %vm1082, %v1231, 0
        %1238 = vmatprep.subr.bf16.mxu0 0
        %1239 = vmatpush1.bf16.xpose.msra.mxu0 0
        %1240 = vmatprep.subr.bf16.mxu0 0
        %1241 = vmatpush1.bf16.xpose.msra.mxu0 0
        %1242 = vmatprep.subr.bf16.mxu0 0
        %1243 = vmatpush1.bf16.xpose.msra.mxu0 0
        %1244 = vmatprep.subr.bf16.mxu0 0
        %1245 = vmatpush1.bf16.xpose.msra.mxu0 0
        %1246 = vmatprep.subr.bf16.mxu0 0
        %1247 = vmatpush1.bf16.xpose.msra.mxu0 0
        %1248 = vmatprep.subr.bf16.mxu0 0
        %1249 = vmatpush1.bf16.xpose.msra.mxu0 0
        %1250 = vmatprep.subr.bf16.mxu0 0
        %1251 = vmatpush1.bf16.xpose.msra.mxu0 0
        %1252 = vmatprep.subr.bf16.mxu0 0
        %1253 = vmatpush1.bf16.xpose.msra.mxu0 %v1236
        %1254 = vmatprep.subr.bf16.mxu0 0
        %1255 = vmatpush2.bf16.xpose.msra.mxu0 0
        %1256 = vmatprep.subr.bf16.mxu0 0
        %1257 = vmatpush2.bf16.xpose.msra.mxu0 0
        %1258 = vmatprep.subr.bf16.mxu0 0
        %1259 = vmatpush2.bf16.xpose.msra.mxu0 0
        %1260 = vmatprep.subr.bf16.mxu0 0
        %1261 = vmatpush2.bf16.xpose.msra.mxu0 0
        %1262 = vmatprep.subr.bf16.mxu0 0
        %1263 = vmatpush2.bf16.xpose.msra.mxu0 0
        %1264 = vmatprep.subr.bf16.mxu0 0
        %1265 = vmatpush2.bf16.xpose.msra.mxu0 0
        %1266 = vmatprep.subr.bf16.mxu0 0
        %1267 = vmatpush2.bf16.xpose.msra.mxu0 0
        %1268 = vmatprep.subr.bf16.mxu0 0
        %1269 = vmatpush2.bf16.xpose.msra.mxu0 0
        %1270 = vmatprep.mubr.bf16.mxu0 0
        %1271 = vmatmul.mubr.bf16.gmra.mxu0 %v1233
        %v1272 = vpop.f32.mrf.mxu0
        %v1273 = vadd.f32 0.0, %v1272
        %v1274 = vpop.f32.mrf.mxu0
        %v1275 = vpop.f32.mrf.mxu0
        %v1276 = vadd.f32 0.0, %v1275
        %v1277 = vpop.f32.mrf.mxu0
        %1278 = vdwg.mxu0
        %1280 = vrot.lane.b32.xlu0 %v1079, 120
        %v1281 = vpop.permute.xlu0 %1280
        %1283 = vrot.lane.b32.xlu0 %v1081, 120
        %v1284 = vpop.permute.xlu0 %1283
        %v1286 = vsel %vm1082, %v1281, 0
        %v1289 = vsel %vm1082, %v1284, 0
        %1291 = vmatprep.subr.bf16.mxu0 0
        %1292 = vmatpush1.bf16.xpose.msra.mxu0 0
        %1293 = vmatprep.subr.bf16.mxu0 0
        %1294 = vmatpush1.bf16.xpose.msra.mxu0 0
        %1295 = vmatprep.subr.bf16.mxu0 0
        %1296 = vmatpush1.bf16.xpose.msra.mxu0 0
        %1297 = vmatprep.subr.bf16.mxu0 0
        %1298 = vmatpush1.bf16.xpose.msra.mxu0 0
        %1299 = vmatprep.subr.bf16.mxu0 0
        %1300 = vmatpush1.bf16.xpose.msra.mxu0 0
        %1301 = vmatprep.subr.bf16.mxu0 0
        %1302 = vmatpush1.bf16.xpose.msra.mxu0 0
        %1303 = vmatprep.subr.bf16.mxu0 0
        %1304 = vmatpush1.bf16.xpose.msra.mxu0 0
        %1305 = vmatprep.subr.bf16.mxu0 0
        %1306 = vmatpush1.bf16.xpose.msra.mxu0 %v1289
        %1307 = vmatprep.subr.bf16.mxu0 0
        %1308 = vmatpush2.bf16.xpose.msra.mxu0 0
        %1309 = vmatprep.subr.bf16.mxu0 0
        %1310 = vmatpush2.bf16.xpose.msra.mxu0 0
        %1311 = vmatprep.subr.bf16.mxu0 0
        %1312 = vmatpush2.bf16.xpose.msra.mxu0 0
        %1313 = vmatprep.subr.bf16.mxu0 0
        %1314 = vmatpush2.bf16.xpose.msra.mxu0 0
        %1315 = vmatprep.subr.bf16.mxu0 0
        %1316 = vmatpush2.bf16.xpose.msra.mxu0 0
        %1317 = vmatprep.subr.bf16.mxu0 0
        %1318 = vmatpush2.bf16.xpose.msra.mxu0 0
        %1319 = vmatprep.subr.bf16.mxu0 0
        %1320 = vmatpush2.bf16.xpose.msra.mxu0 0
        %1321 = vmatprep.subr.bf16.mxu0 0
        %1322 = vmatpush2.bf16.xpose.msra.mxu0 0
        %1323 = vmatprep.mubr.bf16.mxu0 0
        %1324 = vmatmul.mubr.bf16.gmra.mxu0 %v1286
        %v1325 = vpop.f32.mrf.mxu0
        %v1326 = vadd.f32 0.0, %v1325
        %v1327 = vpop.f32.mrf.mxu0
        %v1328 = vpop.f32.mrf.mxu0
        %v1329 = vadd.f32 0.0, %v1328
        %v1330 = vpop.f32.mrf.mxu0
        %1331 = vdwg.mxu0
        %v1332 = vsel %vm1177, %v1273, -inf
        %1333 = vmax.xlane.f32.xlu0 %v1332
        %v1334 = vpop.xlane.xlu0 %1333
        %v1335 = vsel %vm1177, %v1276, -inf
        %1336 = vmax.xlane.f32.xlu0 %v1335
        %v1337 = vpop.xlane.xlu0 %1336
        %v1338 = vsel %vm1177, %v1326, -inf
        %1339 = vmax.xlane.f32.xlu0 %v1338
        %v1340 = vpop.xlane.xlu0 %1339
        %v1341 = vsel %vm1177, %v1329, -inf
        %1342 = vmax.xlane.f32.xlu0 %v1341
        %v1343 = vpop.xlane.xlu0 %1342
        %v1344 = vsub.f32 %v1273, %v1334
        %v1345 = vsub.f32 %v1276, %v1337
        %v1346 = vsub.f32 %v1326, %v1340
        %v1347 = vsub.f32 %v1329, %v1343
        %v1348 = vmul.f32 %v1344, 1.442695
        %v1349 = vpow.pop %v1348
        %v1350 = vmul.f32 %v1345, 1.442695
        %v1351 = vpow.pop %v1350
        %v1352 = vmul.f32 %v1346, 1.442695
        %v1353 = vpow.pop %v1352
        %v1354 = vmul.f32 %v1347, 1.442695
        %v1355 = vpow.pop %v1354
        %v1356 = vsel %vm1177, %v1349, 0.0
        %1357 = vadd.xlane.f32.xlu0 %v1356
        %v1358 = vpop.xlane.xlu0 %1357
        %v1359 = vsel %vm1177, %v1351, 0.0
        %1360 = vadd.xlane.f32.xlu0 %v1359
        %v1361 = vpop.xlane.xlu0 %1360
        %v1362 = vsel %vm1177, %v1353, 0.0
        %1363 = vadd.xlane.f32.xlu0 %v1362
        %v1364 = vpop.xlane.xlu0 %1363
        %v1365 = vsel %vm1177, %v1355, 0.0
        %1366 = vadd.xlane.f32.xlu0 %v1365
        %v1367 = vpop.xlane.xlu0 %1366
        %v1368 = vrcp.pop %v1358
        %v1369 = vrcp.pop %v1361
        %v1370 = vrcp.pop %v1364
        %v1371 = vrcp.pop %v1367
        %v1372 = vmul.f32 %v1349, %v1368
        %v1373 = vmul.f32 %v1351, %v1369
        %v1374 = vmul.f32 %v1353, %v1370
        %v1375 = vmul.f32 %v1355, %v1371
        %s1376 = scalar_lea.vmem %s861, 16 [#allocation9]
        %1377 = vst.msk [vmem:[%s1376] sm:$0xff] %vm1177, %v1372
        %1378 = vst.msk [vmem:[%s1376 + $0x8] sm:$0xff] %vm1177, %v1373
        %1379 = vst.msk [vmem:[%s1376 + $0x40] sm:$0xff] %vm1177, %v1374
        %1380 = vst.msk [vmem:[%s1376 + $0x48] sm:$0xff] %vm1177, %v1375
        %1381 = vrot.lane.b32.xlu0 %v1078, 112
        %v1382 = vpop.permute.xlu0 %1381
        %1383 = vrot.lane.b32.xlu0 %v1080, 112
        %v1384 = vpop.permute.xlu0 %1383
        %v1386 = vsel %vm1082, %v1382, 0
        %v1389 = vsel %vm1082, %v1384, 0
        %1391 = vmatprep.subr.bf16.mxu0 0
        %1392 = vmatpush1.bf16.xpose.msra.mxu0 0
        %1393 = vmatprep.subr.bf16.mxu0 0
        %1394 = vmatpush1.bf16.xpose.msra.mxu0 0
        %1395 = vmatprep.subr.bf16.mxu0 0
        %1396 = vmatpush1.bf16.xpose.msra.mxu0 0
        %1397 = vmatprep.subr.bf16.mxu0 0
        %1398 = vmatpush1.bf16.xpose.msra.mxu0 0
        %1399 = vmatprep.subr.bf16.mxu0 0
        %1400 = vmatpush1.bf16.xpose.msra.mxu0 0
        %1401 = vmatprep.subr.bf16.mxu0 0
        %1402 = vmatpush1.bf16.xpose.msra.mxu0 0
        %1403 = vmatprep.subr.bf16.mxu0 0
        %1404 = vmatpush1.bf16.xpose.msra.mxu0 0
        %1405 = vmatprep.subr.bf16.mxu0 0
        %1406 = vmatpush1.bf16.xpose.msra.mxu0 %v1389
        %1407 = vmatprep.subr.bf16.mxu0 0
        %1408 = vmatpush2.bf16.xpose.msra.mxu0 0
        %1409 = vmatprep.subr.bf16.mxu0 0
        %1410 = vmatpush2.bf16.xpose.msra.mxu0 0
        %1411 = vmatprep.subr.bf16.mxu0 0
        %1412 = vmatpush2.bf16.xpose.msra.mxu0 0
        %1413 = vmatprep.subr.bf16.mxu0 0
        %1414 = vmatpush2.bf16.xpose.msra.mxu0 0
        %1415 = vmatprep.subr.bf16.mxu0 0
        %1416 = vmatpush2.bf16.xpose.msra.mxu0 0
        %1417 = vmatprep.subr.bf16.mxu0 0
        %1418 = vmatpush2.bf16.xpose.msra.mxu0 0
        %1419 = vmatprep.subr.bf16.mxu0 0
        %1420 = vmatpush2.bf16.xpose.msra.mxu0 0
        %1421 = vmatprep.subr.bf16.mxu0 0
        %1422 = vmatpush2.bf16.xpose.msra.mxu0 0
        %1423 = vmatprep.mubr.bf16.mxu0 0
        %1424 = vmatmul.mubr.bf16.gmra.mxu0 %v1386
        %v1425 = vpop.f32.mrf.mxu0
        %v1426 = vadd.f32 0.0, %v1425
        %v1427 = vpop.f32.mrf.mxu0
        %v1428 = vpop.f32.mrf.mxu0
        %v1429 = vadd.f32 0.0, %v1428
        %v1430 = vpop.f32.mrf.mxu0
        %1431 = vdwg.mxu0
        %1432 = vrot.lane.b32.xlu0 %v1079, 112
        %v1433 = vpop.permute.xlu0 %1432
        %1434 = vrot.lane.b32.xlu0 %v1081, 112
        %v1435 = vpop.permute.xlu0 %1434
        %v1437 = vsel %vm1082, %v1433, 0
        %v1440 = vsel %vm1082, %v1435, 0
        %1442 = vmatprep.subr.bf16.mxu0 0
        %1443 = vmatpush1.bf16.xpose.msra.mxu0 0
        %1444 = vmatprep.subr.bf16.mxu0 0
        %1445 = vmatpush1.bf16.xpose.msra.mxu0 0
        %1446 = vmatprep.subr.bf16.mxu0 0
        %1447 = vmatpush1.bf16.xpose.msra.mxu0 0
        %1448 = vmatprep.subr.bf16.mxu0 0
        %1449 = vmatpush1.bf16.xpose.msra.mxu0 0
        %1450 = vmatprep.subr.bf16.mxu0 0
        %1451 = vmatpush1.bf16.xpose.msra.mxu0 0
        %1452 = vmatprep.subr.bf16.mxu0 0
        %1453 = vmatpush1.bf16.xpose.msra.mxu0 0
        %1454 = vmatprep.subr.bf16.mxu0 0
        %1455 = vmatpush1.bf16.xpose.msra.mxu0 0
        %1456 = vmatprep.subr.bf16.mxu0 0
        %1457 = vmatpush1.bf16.xpose.msra.mxu0 %v1440
        %1458 = vmatprep.subr.bf16.mxu0 0
        %1459 = vmatpush2.bf16.xpose.msra.mxu0 0
        %1460 = vmatprep.subr.bf16.mxu0 0
        %1461 = vmatpush2.bf16.xpose.msra.mxu0 0
        %1462 = vmatprep.subr.bf16.mxu0 0
        %1463 = vmatpush2.bf16.xpose.msra.mxu0 0
        %1464 = vmatprep.subr.bf16.mxu0 0
        %1465 = vmatpush2.bf16.xpose.msra.mxu0 0
        %1466 = vmatprep.subr.bf16.mxu0 0
        %1467 = vmatpush2.bf16.xpose.msra.mxu0 0
        %1468 = vmatprep.subr.bf16.mxu0 0
        %1469 = vmatpush2.bf16.xpose.msra.mxu0 0
        %1470 = vmatprep.subr.bf16.mxu0 0
        %1471 = vmatpush2.bf16.xpose.msra.mxu0 0
        %1472 = vmatprep.subr.bf16.mxu0 0
        %1473 = vmatpush2.bf16.xpose.msra.mxu0 0
        %1474 = vmatprep.mubr.bf16.mxu0 0
        %1475 = vmatmul.mubr.bf16.gmra.mxu0 %v1437
        %v1476 = vpop.f32.mrf.mxu0
        %v1477 = vadd.f32 0.0, %v1476
        %v1478 = vpop.f32.mrf.mxu0
        %v1479 = vpop.f32.mrf.mxu0
        %v1480 = vadd.f32 0.0, %v1479
        %v1481 = vpop.f32.mrf.mxu0
        %1482 = vdwg.mxu0
        %v1483 = vsel %vm1177, %v1426, -inf
        %1484 = vmax.xlane.f32.xlu0 %v1483
        %v1485 = vpop.xlane.xlu0 %1484
        %v1486 = vsel %vm1177, %v1429, -inf
        %1487 = vmax.xlane.f32.xlu0 %v1486
        %v1488 = vpop.xlane.xlu0 %1487
        %v1489 = vsel %vm1177, %v1477, -inf
        %1490 = vmax.xlane.f32.xlu0 %v1489
        %v1491 = vpop.xlane.xlu0 %1490
        %v1492 = vsel %vm1177, %v1480, -inf
        %1493 = vmax.xlane.f32.xlu0 %v1492
        %v1494 = vpop.xlane.xlu0 %1493
        %v1495 = vsub.f32 %v1426, %v1485
        %v1496 = vsub.f32 %v1429, %v1488
        %v1497 = vsub.f32 %v1477, %v1491
        %v1498 = vsub.f32 %v1480, %v1494
        %v1499 = vmul.f32 %v1495, 1.442695
        %v1500 = vpow.pop %v1499
        %v1501 = vmul.f32 %v1496, 1.442695
        %v1502 = vpow.pop %v1501
        %v1503 = vmul.f32 %v1497, 1.442695
        %v1504 = vpow.pop %v1503
        %v1505 = vmul.f32 %v1498, 1.442695
        %v1506 = vpow.pop %v1505
        %v1507 = vsel %vm1177, %v1500, 0.0
        %1508 = vadd.xlane.f32.xlu0 %v1507
        %v1509 = vpop.xlane.xlu0 %1508
        %v1510 = vsel %vm1177, %v1502, 0.0
        %1511 = vadd.xlane.f32.xlu0 %v1510
        %v1512 = vpop.xlane.xlu0 %1511
        %v1513 = vsel %vm1177, %v1504, 0.0
        %1514 = vadd.xlane.f32.xlu0 %v1513
        %v1515 = vpop.xlane.xlu0 %1514
        %v1516 = vsel %vm1177, %v1506, 0.0
        %1517 = vadd.xlane.f32.xlu0 %v1516
        %v1518 = vpop.xlane.xlu0 %1517
        %v1519 = vrcp.pop %v1509
        %v1520 = vrcp.pop %v1512
        %v1521 = vrcp.pop %v1515
        %v1522 = vrcp.pop %v1518
        %v1523 = vmul.f32 %v1500, %v1519
        %v1524 = vmul.f32 %v1502, %v1520
        %v1525 = vmul.f32 %v1504, %v1521
        %v1526 = vmul.f32 %v1506, %v1522
        %s1527 = scalar_lea.vmem %s861, 32 [#allocation9]
        %1528 = vst.msk [vmem:[%s1527] sm:$0xff] %vm1177, %v1523
        %1529 = vst.msk [vmem:[%s1527 + $0x8] sm:$0xff] %vm1177, %v1524
        %1530 = vst.msk [vmem:[%s1527 + $0x40] sm:$0xff] %vm1177, %v1525
        %1531 = vst.msk [vmem:[%s1527 + $0x48] sm:$0xff] %vm1177, %v1526
        %1532 = vrot.lane.b32.xlu0 %v1078, 104
        %v1533 = vpop.permute.xlu0 %1532
        %1534 = vrot.lane.b32.xlu0 %v1080, 104
        %v1535 = vpop.permute.xlu0 %1534
        %v1537 = vsel %vm1082, %v1533, 0
        %v1540 = vsel %vm1082, %v1535, 0
        %1542 = vmatprep.subr.bf16.mxu0 0
        %1543 = vmatpush1.bf16.xpose.msra.mxu0 0
        %1544 = vmatprep.subr.bf16.mxu0 0
        %1545 = vmatpush1.bf16.xpose.msra.mxu0 0
        %1546 = vmatprep.subr.bf16.mxu0 0
        %1547 = vmatpush1.bf16.xpose.msra.mxu0 0
        %1548 = vmatprep.subr.bf16.mxu0 0
        %1549 = vmatpush1.bf16.xpose.msra.mxu0 0
        %1550 = vmatprep.subr.bf16.mxu0 0
        %1551 = vmatpush1.bf16.xpose.msra.mxu0 0
        %1552 = vmatprep.subr.bf16.mxu0 0
        %1553 = vmatpush1.bf16.xpose.msra.mxu0 0
        %1554 = vmatprep.subr.bf16.mxu0 0
        %1555 = vmatpush1.bf16.xpose.msra.mxu0 0
        %1556 = vmatprep.subr.bf16.mxu0 0
        %1557 = vmatpush1.bf16.xpose.msra.mxu0 %v1540
        %1558 = vmatprep.subr.bf16.mxu0 0
        %1559 = vmatpush2.bf16.xpose.msra.mxu0 0
        %1560 = vmatprep.subr.bf16.mxu0 0
        %1561 = vmatpush2.bf16.xpose.msra.mxu0 0
        %1562 = vmatprep.subr.bf16.mxu0 0
        %1563 = vmatpush2.bf16.xpose.msra.mxu0 0
        %1564 = vmatprep.subr.bf16.mxu0 0
        %1565 = vmatpush2.bf16.xpose.msra.mxu0 0
        %1566 = vmatprep.subr.bf16.mxu0 0
        %1567 = vmatpush2.bf16.xpose.msra.mxu0 0
        %1568 = vmatprep.subr.bf16.mxu0 0
        %1569 = vmatpush2.bf16.xpose.msra.mxu0 0
        %1570 = vmatprep.subr.bf16.mxu0 0
        %1571 = vmatpush2.bf16.xpose.msra.mxu0 0
        %1572 = vmatprep.subr.bf16.mxu0 0
        %1573 = vmatpush2.bf16.xpose.msra.mxu0 0
        %1574 = vmatprep.mubr.bf16.mxu0 0
        %1575 = vmatmul.mubr.bf16.gmra.mxu0 %v1537
        %v1576 = vpop.f32.mrf.mxu0
        %v1577 = vadd.f32 0.0, %v1576
        %v1578 = vpop.f32.mrf.mxu0
        %v1579 = vpop.f32.mrf.mxu0
        %v1580 = vadd.f32 0.0, %v1579
        %v1581 = vpop.f32.mrf.mxu0
        %1582 = vdwg.mxu0
        %1583 = vrot.lane.b32.xlu0 %v1079, 104
        %v1584 = vpop.permute.xlu0 %1583
        %1585 = vrot.lane.b32.xlu0 %v1081, 104
        %v1586 = vpop.permute.xlu0 %1585
        %v1588 = vsel %vm1082, %v1584, 0
        %v1591 = vsel %vm1082, %v1586, 0
        %1593 = vmatprep.subr.bf16.mxu0 0
        %1594 = vmatpush1.bf16.xpose.msra.mxu0 0
        %1595 = vmatprep.subr.bf16.mxu0 0
        %1596 = vmatpush1.bf16.xpose.msra.mxu0 0
        %1597 = vmatprep.subr.bf16.mxu0 0
        %1598 = vmatpush1.bf16.xpose.msra.mxu0 0
        %1599 = vmatprep.subr.bf16.mxu0 0
        %1600 = vmatpush1.bf16.xpose.msra.mxu0 0
        %1601 = vmatprep.subr.bf16.mxu0 0
        %1602 = vmatpush1.bf16.xpose.msra.mxu0 0
        %1603 = vmatprep.subr.bf16.mxu0 0
        %1604 = vmatpush1.bf16.xpose.msra.mxu0 0
        %1605 = vmatprep.subr.bf16.mxu0 0
        %1606 = vmatpush1.bf16.xpose.msra.mxu0 0
        %1607 = vmatprep.subr.bf16.mxu0 0
        %1608 = vmatpush1.bf16.xpose.msra.mxu0 %v1591
        %1609 = vmatprep.subr.bf16.mxu0 0
        %1610 = vmatpush2.bf16.xpose.msra.mxu0 0
        %1611 = vmatprep.subr.bf16.mxu0 0
        %1612 = vmatpush2.bf16.xpose.msra.mxu0 0
        %1613 = vmatprep.subr.bf16.mxu0 0
        %1614 = vmatpush2.bf16.xpose.msra.mxu0 0
        %1615 = vmatprep.subr.bf16.mxu0 0
        %1616 = vmatpush2.bf16.xpose.msra.mxu0 0
        %1617 = vmatprep.subr.bf16.mxu0 0
        %1618 = vmatpush2.bf16.xpose.msra.mxu0 0
        %1619 = vmatprep.subr.bf16.mxu0 0
        %1620 = vmatpush2.bf16.xpose.msra.mxu0 0
        %1621 = vmatprep.subr.bf16.mxu0 0
        %1622 = vmatpush2.bf16.xpose.msra.mxu0 0
        %1623 = vmatprep.subr.bf16.mxu0 0
        %1624 = vmatpush2.bf16.xpose.msra.mxu0 0
        %1625 = vmatprep.mubr.bf16.mxu0 0
        %1626 = vmatmul.mubr.bf16.gmra.mxu0 %v1588
        %v1627 = vpop.f32.mrf.mxu0
        %v1628 = vadd.f32 0.0, %v1627
        %v1629 = vpop.f32.mrf.mxu0
        %v1630 = vpop.f32.mrf.mxu0
        %v1631 = vadd.f32 0.0, %v1630
        %v1632 = vpop.f32.mrf.mxu0
        %1633 = vdwg.mxu0
        %v1634 = vsel %vm1177, %v1577, -inf
        %1635 = vmax.xlane.f32.xlu0 %v1634
        %v1636 = vpop.xlane.xlu0 %1635
        %v1637 = vsel %vm1177, %v1580, -inf
        %1638 = vmax.xlane.f32.xlu0 %v1637
        %v1639 = vpop.xlane.xlu0 %1638
        %v1640 = vsel %vm1177, %v1628, -inf
        %1641 = vmax.xlane.f32.xlu0 %v1640
        %v1642 = vpop.xlane.xlu0 %1641
        %v1643 = vsel %vm1177, %v1631, -inf
        %1644 = vmax.xlane.f32.xlu0 %v1643
        %v1645 = vpop.xlane.xlu0 %1644
        %v1646 = vsub.f32 %v1577, %v1636
        %v1647 = vsub.f32 %v1580, %v1639
        %v1648 = vsub.f32 %v1628, %v1642
        %v1649 = vsub.f32 %v1631, %v1645
        %v1650 = vmul.f32 %v1646, 1.442695
        %v1651 = vpow.pop %v1650
        %v1652 = vmul.f32 %v1647, 1.442695
        %v1653 = vpow.pop %v1652
        %v1654 = vmul.f32 %v1648, 1.442695
        %v1655 = vpow.pop %v1654
        %v1656 = vmul.f32 %v1649, 1.442695
        %v1657 = vpow.pop %v1656
        %v1658 = vsel %vm1177, %v1651, 0.0
        %1659 = vadd.xlane.f32.xlu0 %v1658
        %v1660 = vpop.xlane.xlu0 %1659
        %v1661 = vsel %vm1177, %v1653, 0.0
        %1662 = vadd.xlane.f32.xlu0 %v1661
        %v1663 = vpop.xlane.xlu0 %1662
        %v1664 = vsel %vm1177, %v1655, 0.0
        %1665 = vadd.xlane.f32.xlu0 %v1664
        %v1666 = vpop.xlane.xlu0 %1665
        %v1667 = vsel %vm1177, %v1657, 0.0
        %1668 = vadd.xlane.f32.xlu0 %v1667
        %v1669 = vpop.xlane.xlu0 %1668
        %v1670 = vrcp.pop %v1660
        %v1671 = vrcp.pop %v1663
        %v1672 = vrcp.pop %v1666
        %v1673 = vrcp.pop %v1669
        %v1674 = vmul.f32 %v1651, %v1670
        %v1675 = vmul.f32 %v1653, %v1671
        %v1676 = vmul.f32 %v1655, %v1672
        %v1677 = vmul.f32 %v1657, %v1673
        %s1678 = scalar_lea.vmem %s861, 48 [#allocation9]
        %1679 = vst.msk [vmem:[%s1678] sm:$0xff] %vm1177, %v1674
        %1680 = vst.msk [vmem:[%s1678 + $0x8] sm:$0xff] %vm1177, %v1675
        %1681 = vst.msk [vmem:[%s1678 + $0x40] sm:$0xff] %vm1177, %v1676
        %1682 = vst.msk [vmem:[%s1678 + $0x48] sm:$0xff] %vm1177, %v1677
        %p1683 = scmp.eq.s32.totalorder %s44, 1
        // Predicated region
        $region101: #{tpu_custom_call.1} parent=87 // pred_check
          %p1684 = pneg %p1683
        $region102: #{tpu_custom_call.1} parent=87 // pred_check_branch
          %1686 = sbr.rel (%p1684) target = $region104
        $region103: #{tpu_custom_call.1} parent=87 // pred_region
          %v1687 = vld [vmem:[%s730] sm:$0xf]
          %v1688 = vld [vmem:[%s730 + $0x4] sm:$0xf]
          %v1689 = vld [vmem:[%s730 + $0x8] sm:$0xf]
          %v1690 = vld [vmem:[%s730 + $0xc] sm:$0xf]
          %v1691 = vld [vmem:[%s887] sm:$0x1]
          %v1693 = vlaneseq
          %v1694 = vshrl.u32 %v1693, 7
          %v1695 = vsub.s32 0, %v1694
          %v1696 = vrot.slane %v1691, %v1695
          %v1702 = vunpack.c.l.b16 %v1687
          %v1703 = vunpack.c.l.b16 %v1688
          %v1704 = vunpack.c.l.b16 %v1689
          %v1705 = vunpack.c.l.b16 %v1690
          %v1706 = vpack.c.b16 %v1703, %v1702
          %v1707 = vpack.c.b16 %v1705, %v1704
          %1710 = vmatprep.subr.bf16.mxu0 0
          %1711 = vmatpush1.bf16.msra.mxu0 0
          %1712 = vmatprep.subr.bf16.mxu0 0
          %1713 = vmatpush1.bf16.msra.mxu0 0
          %1714 = vmatprep.subr.bf16.mxu0 0
          %1715 = vmatpush1.bf16.msra.mxu0 0
          %1716 = vmatprep.subr.bf16.mxu0 0
          %1717 = vmatpush1.bf16.msra.mxu0 0
          %1718 = vmatprep.subr.bf16.mxu0 0
          %1719 = vmatpush1.bf16.msra.mxu0 0
          %1720 = vmatprep.subr.bf16.mxu0 0
          %1721 = vmatpush1.bf16.msra.mxu0 0
          %1722 = vmatprep.subr.bf16.mxu0 0
          %1723 = vmatpush1.bf16.msra.mxu0 %v1707
          %1724 = vmatprep.subr.bf16.mxu0 0
          %1725 = vmatpush1.bf16.msra.mxu0 %v1706
          %1726 = vmatprep.subr.bf16.mxu0 0
          %1727 = vmatpush2.bf16.msra.mxu0 0
          %1728 = vmatprep.subr.bf16.mxu0 0
          %1729 = vmatpush2.bf16.msra.mxu0 0
          %1730 = vmatprep.subr.bf16.mxu0 0
          %1731 = vmatpush2.bf16.msra.mxu0 0
          %1732 = vmatprep.subr.bf16.mxu0 0
          %1733 = vmatpush2.bf16.msra.mxu0 0
          %1734 = vmatprep.subr.bf16.mxu0 0
          %1735 = vmatpush2.bf16.msra.mxu0 0
          %1736 = vmatprep.subr.bf16.mxu0 0
          %1737 = vmatpush2.bf16.msra.mxu0 0
          %1738 = vmatprep.subr.bf16.mxu0 0
          %1739 = vmatpush2.bf16.msra.mxu0 0
          %1740 = vmatprep.subr.bf16.mxu0 0
          %1741 = vmatpush2.bf16.msra.mxu0 0
          %1742 = vmatprep.mubr.bf16.mxu0 0
          %1743 = vmatmul.mubr.bf16.gmra.mxu0 %v948
          %v1744 = vpop.f32.mrf.mxu0
          %v1745 = vadd.f32 %v1696, %v1744
          %v1746 = vpop.f32.mrf.mxu0
          %v1747 = vpop.f32.mrf.mxu0
          %v1748 = vadd.f32 %v1696, %v1747
          %v1749 = vpop.f32.mrf.mxu0
          %1750 = vmatprep.mubr.bf16.mxu0 0
          %1751 = vmatmul.mubr.bf16.gmra.mxu0 %v951
          %v1752 = vpop.f32.mrf.mxu0
          %v1753 = vadd.f32 %v1696, %v1752
          %v1754 = vpop.f32.mrf.mxu0
          %v1755 = vpop.f32.mrf.mxu0
          %v1756 = vadd.f32 %v1696, %v1755
          %v1757 = vpop.f32.mrf.mxu0
          %1758 = vdwg.mxu0
          %v1759 = vld [vmem:[%s739] sm:$0xf]
          %v1760 = vld [vmem:[%s739 + $0x4] sm:$0xf]
          %v1761 = vld [vmem:[%s739 + $0x8] sm:$0xf]
          %v1762 = vld [vmem:[%s739 + $0xc] sm:$0xf]
          %v1763 = vpack.c.bf16 %v1748, %v1745
          %v1764 = vpack.c.bf16 %v1756, %v1753
          %v1765 = vpack.c.bf16 %v1219, %v1218
          %v1766 = vpack.c.bf16 %v1221, %v1220
          %v1768 = vsel %vm1177, %v1765, 0
          %1770 = vmatprep.subr.bf16.mxu0 0
          %1771 = vmatpush1.bf16.msra.mxu0 0
          %1772 = vmatprep.subr.bf16.mxu0 0
          %1773 = vmatpush1.bf16.msra.mxu0 0
          %1774 = vmatprep.subr.bf16.mxu0 0
          %1775 = vmatpush1.bf16.msra.mxu0 0
          %1776 = vmatprep.subr.bf16.mxu0 0
          %1777 = vmatpush1.bf16.msra.mxu0 0
          %1778 = vmatprep.subr.bf16.mxu0 0
          %1779 = vmatpush1.bf16.msra.mxu0 0
          %1780 = vmatprep.subr.bf16.mxu0 0
          %1781 = vmatpush1.bf16.msra.mxu0 0
          %1782 = vmatprep.subr.bf16.mxu0 0
          %1783 = vmatpush1.bf16.msra.mxu0 0
          %1784 = vmatprep.subr.bf16.mxu0 0
          %1785 = vmatpush1.bf16.msra.mxu0 %v1763
          %1786 = vmatprep.subr.bf16.mxu0 0
          %1787 = vmatpush2.bf16.msra.mxu0 0
          %1788 = vmatprep.subr.bf16.mxu0 0
          %1789 = vmatpush2.bf16.msra.mxu0 0
          %1790 = vmatprep.subr.bf16.mxu0 0
          %1791 = vmatpush2.bf16.msra.mxu0 0
          %1792 = vmatprep.subr.bf16.mxu0 0
          %1793 = vmatpush2.bf16.msra.mxu0 0
          %1794 = vmatprep.subr.bf16.mxu0 0
          %1795 = vmatpush2.bf16.msra.mxu0 0
          %1796 = vmatprep.subr.bf16.mxu0 0
          %1797 = vmatpush2.bf16.msra.mxu0 0
          %1798 = vmatprep.subr.bf16.mxu0 0
          %1799 = vmatpush2.bf16.msra.mxu0 0
          %1800 = vmatprep.subr.bf16.mxu0 0
          %1801 = vmatpush2.bf16.msra.mxu0 0
          %1802 = vmatprep.mubr.bf16.mxu0 0
          %1803 = vmatmul.mubr.bf16.gmra.mxu0 %v1768
          %v1804 = vpop.f32.mrf.mxu0
          %v1805 = vadd.f32 0.0, %v1804
          %v1806 = vpop.f32.mrf.mxu0
          %v1807 = vpop.f32.mrf.mxu0
          %v1808 = vadd.f32 0.0, %v1807
          %v1809 = vpop.f32.mrf.mxu0
          %1810 = vdwg.mxu0
          %v1812 = vsel %vm1177, %v1766, 0
          %1814 = vmatprep.subr.bf16.mxu0 0
          %1815 = vmatpush1.bf16.msra.mxu0 0
          %1816 = vmatprep.subr.bf16.mxu0 0
          %1817 = vmatpush1.bf16.msra.mxu0 0
          %1818 = vmatprep.subr.bf16.mxu0 0
          %1819 = vmatpush1.bf16.msra.mxu0 0
          %1820 = vmatprep.subr.bf16.mxu0 0
          %1821 = vmatpush1.bf16.msra.mxu0 0
          %1822 = vmatprep.subr.bf16.mxu0 0
          %1823 = vmatpush1.bf16.msra.mxu0 0
          %1824 = vmatprep.subr.bf16.mxu0 0
          %1825 = vmatpush1.bf16.msra.mxu0 0
          %1826 = vmatprep.subr.bf16.mxu0 0
          %1827 = vmatpush1.bf16.msra.mxu0 0
          %1828 = vmatprep.subr.bf16.mxu0 0
          %1829 = vmatpush1.bf16.msra.mxu0 %v1764
          %1830 = vmatprep.subr.bf16.mxu0 0
          %1831 = vmatpush2.bf16.msra.mxu0 0
          %1832 = vmatprep.subr.bf16.mxu0 0
          %1833 = vmatpush2.bf16.msra.mxu0 0
          %1834 = vmatprep.subr.bf16.mxu0 0
          %1835 = vmatpush2.bf16.msra.mxu0 0
          %1836 = vmatprep.subr.bf16.mxu0 0
          %1837 = vmatpush2.bf16.msra.mxu0 0
          %1838 = vmatprep.subr.bf16.mxu0 0
          %1839 = vmatpush2.bf16.msra.mxu0 0
          %1840 = vmatprep.subr.bf16.mxu0 0
          %1841 = vmatpush2.bf16.msra.mxu0 0
          %1842 = vmatprep.subr.bf16.mxu0 0
          %1843 = vmatpush2.bf16.msra.mxu0 0
          %1844 = vmatprep.subr.bf16.mxu0 0
          %1845 = vmatpush2.bf16.msra.mxu0 0
          %1846 = vmatprep.mubr.bf16.mxu0 0
          %1847 = vmatmul.mubr.bf16.gmra.mxu0 %v1812
          %v1848 = vpop.f32.mrf.mxu0
          %v1849 = vadd.f32 0.0, %v1848
          %v1850 = vpop.f32.mrf.mxu0
          %v1851 = vpop.f32.mrf.mxu0
          %v1852 = vadd.f32 0.0, %v1851
          %v1853 = vpop.f32.mrf.mxu0
          %1854 = vdwg.mxu0
          %v1855 = vpack.c.bf16 %v1808, %v1805
          %v1856 = vpack.c.bf16 %v1852, %v1849
          %v1857 = vpack.c.bf16 %v1373, %v1372
          %v1858 = vpack.c.bf16 %v1375, %v1374
          %1860 = vrot.lane.b32.xlu0 %v1763, 120
          %v1861 = vpop.permute.xlu0 %1860
          %v1864 = vsel %vm1177, %v1857, 0
          %1866 = vmatprep.subr.bf16.mxu0 0
          %1867 = vmatpush1.bf16.msra.mxu0 0
          %1868 = vmatprep.subr.bf16.mxu0 0
          %1869 = vmatpush1.bf16.msra.mxu0 0
          %1870 = vmatprep.subr.bf16.mxu0 0
          %1871 = vmatpush1.bf16.msra.mxu0 0
          %1872 = vmatprep.subr.bf16.mxu0 0
          %1873 = vmatpush1.bf16.msra.mxu0 0
          %1874 = vmatprep.subr.bf16.mxu0 0
          %1875 = vmatpush1.bf16.msra.mxu0 0
          %1876 = vmatprep.subr.bf16.mxu0 0
          %1877 = vmatpush1.bf16.msra.mxu0 0
          %1878 = vmatprep.subr.bf16.mxu0 0
          %1879 = vmatpush1.bf16.msra.mxu0 0
          %1880 = vmatprep.subr.bf16.mxu0 0
          %1881 = vmatpush1.bf16.msra.mxu0 %v1861
          %1882 = vmatprep.subr.bf16.mxu0 0
          %1883 = vmatpush2.bf16.msra.mxu0 0
          %1884 = vmatprep.subr.bf16.mxu0 0
          %1885 = vmatpush2.bf16.msra.mxu0 0
          %1886 = vmatprep.subr.bf16.mxu0 0
          %1887 = vmatpush2.bf16.msra.mxu0 0
          %1888 = vmatprep.subr.bf16.mxu0 0
          %1889 = vmatpush2.bf16.msra.mxu0 0
          %1890 = vmatprep.subr.bf16.mxu0 0
          %1891 = vmatpush2.bf16.msra.mxu0 0
          %1892 = vmatprep.subr.bf16.mxu0 0
          %1893 = vmatpush2.bf16.msra.mxu0 0
          %1894 = vmatprep.subr.bf16.mxu0 0
          %1895 = vmatpush2.bf16.msra.mxu0 0
          %1896 = vmatprep.subr.bf16.mxu0 0
          %1897 = vmatpush2.bf16.msra.mxu0 0
          %1898 = vmatprep.mubr.bf16.mxu0 0
          %1899 = vmatmul.mubr.bf16.gmra.mxu0 %v1864
          %v1900 = vpop.f32.mrf.mxu0
          %v1901 = vadd.f32 0.0, %v1900
          %v1902 = vpop.f32.mrf.mxu0
          %v1903 = vpop.f32.mrf.mxu0
          %v1904 = vadd.f32 0.0, %v1903
          %v1905 = vpop.f32.mrf.mxu0
          %1906 = vdwg.mxu0
          %1908 = vrot.lane.b32.xlu0 %v1764, 120
          %v1909 = vpop.permute.xlu0 %1908
          %v1912 = vsel %vm1177, %v1858, 0
          %1914 = vmatprep.subr.bf16.mxu0 0
          %1915 = vmatpush1.bf16.msra.mxu0 0
          %1916 = vmatprep.subr.bf16.mxu0 0
          %1917 = vmatpush1.bf16.msra.mxu0 0
          %1918 = vmatprep.subr.bf16.mxu0 0
          %1919 = vmatpush1.bf16.msra.mxu0 0
          %1920 = vmatprep.subr.bf16.mxu0 0
          %1921 = vmatpush1.bf16.msra.mxu0 0
          %1922 = vmatprep.subr.bf16.mxu0 0
          %1923 = vmatpush1.bf16.msra.mxu0 0
          %1924 = vmatprep.subr.bf16.mxu0 0
          %1925 = vmatpush1.bf16.msra.mxu0 0
          %1926 = vmatprep.subr.bf16.mxu0 0
          %1927 = vmatpush1.bf16.msra.mxu0 0
          %1928 = vmatprep.subr.bf16.mxu0 0
          %1929 = vmatpush1.bf16.msra.mxu0 %v1909
          %1930 = vmatprep.subr.bf16.mxu0 0
          %1931 = vmatpush2.bf16.msra.mxu0 0
          %1932 = vmatprep.subr.bf16.mxu0 0
          %1933 = vmatpush2.bf16.msra.mxu0 0
          %1934 = vmatprep.subr.bf16.mxu0 0
          %1935 = vmatpush2.bf16.msra.mxu0 0
          %1936 = vmatprep.subr.bf16.mxu0 0
          %1937 = vmatpush2.bf16.msra.mxu0 0
          %1938 = vmatprep.subr.bf16.mxu0 0
          %1939 = vmatpush2.bf16.msra.mxu0 0
          %1940 = vmatprep.subr.bf16.mxu0 0
          %1941 = vmatpush2.bf16.msra.mxu0 0
          %1942 = vmatprep.subr.bf16.mxu0 0
          %1943 = vmatpush2.bf16.msra.mxu0 0
          %1944 = vmatprep.subr.bf16.mxu0 0
          %1945 = vmatpush2.bf16.msra.mxu0 0
          %1946 = vmatprep.mubr.bf16.mxu0 0
          %1947 = vmatmul.mubr.bf16.gmra.mxu0 %v1912
          %v1948 = vpop.f32.mrf.mxu0
          %v1949 = vadd.f32 0.0, %v1948
          %v1950 = vpop.f32.mrf.mxu0
          %v1951 = vpop.f32.mrf.mxu0
          %v1952 = vadd.f32 0.0, %v1951
          %v1953 = vpop.f32.mrf.mxu0
          %1954 = vdwg.mxu0
          %v1955 = vpack.c.bf16 %v1904, %v1901
          %v1956 = vpack.c.bf16 %v1952, %v1949
          %v1958 = vsel %vm1082, %v1955, 0
          %v1961 = vsel %vm1082, %v1956, 0
          %vm1963 = vcmask 1043456
          %v1965 = vsel %vm1963, %v1760, 0
          %1967 = vmatprep.subr.bf16.mxu0 0
          %1968 = vmatpush1.bf16.msra.mxu0 0
          %1969 = vmatprep.subr.bf16.mxu0 0
          %1970 = vmatpush1.bf16.msra.mxu0 0
          %1971 = vmatprep.subr.bf16.mxu0 0
          %1972 = vmatpush1.bf16.msra.mxu0 0
          %1973 = vmatprep.subr.bf16.mxu0 0
          %1974 = vmatpush1.bf16.msra.mxu0 0
          %1975 = vmatprep.subr.bf16.mxu0 0
          %1976 = vmatpush1.bf16.msra.mxu0 0
          %1977 = vmatprep.subr.bf16.mxu0 0
          %1978 = vmatpush1.bf16.msra.mxu0 0
          %1979 = vmatprep.subr.bf16.mxu0 0
          %1980 = vmatpush1.bf16.msra.mxu0 0
          %1981 = vmatprep.subr.bf16.mxu0 0
          %1982 = vmatpush1.bf16.msra.mxu0 %v1965
          %1983 = vmatprep.subr.bf16.mxu0 0
          %1984 = vmatpush2.bf16.msra.mxu0 0
          %1985 = vmatprep.subr.bf16.mxu0 0
          %1986 = vmatpush2.bf16.msra.mxu0 0
          %1987 = vmatprep.subr.bf16.mxu0 0
          %1988 = vmatpush2.bf16.msra.mxu0 0
          %1989 = vmatprep.subr.bf16.mxu0 0
          %1990 = vmatpush2.bf16.msra.mxu0 0
          %1991 = vmatprep.subr.bf16.mxu0 0
          %1992 = vmatpush2.bf16.msra.mxu0 0
          %1993 = vmatprep.subr.bf16.mxu0 0
          %1994 = vmatpush2.bf16.msra.mxu0 0
          %1995 = vmatprep.subr.bf16.mxu0 0
          %1996 = vmatpush2.bf16.msra.mxu0 0
          %1997 = vmatprep.subr.bf16.mxu0 0
          %1998 = vmatpush2.bf16.msra.mxu0 0
          %1999 = vmatprep.mubr.bf16.mxu0 0
          %2000 = vmatmul.mubr.bf16.gmra.mxu0 %v1958
          %v2001 = vpop.f32.mrf.mxu0
          %v2002 = vadd.f32 0.0, %v2001
          %v2003 = vpop.f32.mrf.mxu0
          %v2004 = vpop.f32.mrf.mxu0
          %v2005 = vadd.f32 0.0, %v2004
          %v2006 = vpop.f32.mrf.mxu0
          %2007 = vmatprep.mubr.bf16.mxu0 0
          %2008 = vmatmul.mubr.bf16.gmra.mxu0 %v1961
          %v2009 = vpop.f32.mrf.mxu0
          %v2010 = vadd.f32 0.0, %v2009
          %v2011 = vpop.f32.mrf.mxu0
          %v2012 = vpop.f32.mrf.mxu0
          %v2013 = vadd.f32 0.0, %v2012
          %v2014 = vpop.f32.mrf.mxu0
          %2015 = vdwg.mxu0
          %v2017 = vsel %vm1082, %v1855, 0
          %v2020 = vsel %vm1082, %v1856, 0
          %v2023 = vsel %vm1963, %v1759, 0
          %2025 = vmatprep.subr.bf16.mxu0 0
          %2026 = vmatpush1.bf16.msra.mxu0 0
          %2027 = vmatprep.subr.bf16.mxu0 0
          %2028 = vmatpush1.bf16.msra.mxu0 0
          %2029 = vmatprep.subr.bf16.mxu0 0
          %2030 = vmatpush1.bf16.msra.mxu0 0
          %2031 = vmatprep.subr.bf16.mxu0 0
          %2032 = vmatpush1.bf16.msra.mxu0 0
          %2033 = vmatprep.subr.bf16.mxu0 0
          %2034 = vmatpush1.bf16.msra.mxu0 0
          %2035 = vmatprep.subr.bf16.mxu0 0
          %2036 = vmatpush1.bf16.msra.mxu0 0
          %2037 = vmatprep.subr.bf16.mxu0 0
          %2038 = vmatpush1.bf16.msra.mxu0 0
          %2039 = vmatprep.subr.bf16.mxu0 0
          %2040 = vmatpush1.bf16.msra.mxu0 %v2023
          %2041 = vmatprep.subr.bf16.mxu0 0
          %2042 = vmatpush2.bf16.msra.mxu0 0
          %2043 = vmatprep.subr.bf16.mxu0 0
          %2044 = vmatpush2.bf16.msra.mxu0 0
          %2045 = vmatprep.subr.bf16.mxu0 0
          %2046 = vmatpush2.bf16.msra.mxu0 0
          %2047 = vmatprep.subr.bf16.mxu0 0
          %2048 = vmatpush2.bf16.msra.mxu0 0
          %2049 = vmatprep.subr.bf16.mxu0 0
          %2050 = vmatpush2.bf16.msra.mxu0 0
          %2051 = vmatprep.subr.bf16.mxu0 0
          %2052 = vmatpush2.bf16.msra.mxu0 0
          %2053 = vmatprep.subr.bf16.mxu0 0
          %2054 = vmatpush2.bf16.msra.mxu0 0
          %2055 = vmatprep.subr.bf16.mxu0 0
          %2056 = vmatpush2.bf16.msra.mxu0 0
          %2057 = vmatprep.mubr.bf16.mxu0 0
          %2058 = vmatmul.mubr.bf16.gmra.mxu0 %v2017
          %v2059 = vpop.f32.mrf.mxu0
          %v2060 = vadd.f32 %v2002, %v2059
          %v2061 = vpop.f32.mrf.mxu0
          %v2062 = vpop.f32.mrf.mxu0
          %v2063 = vadd.f32 %v2005, %v2062
          %v2064 = vpop.f32.mrf.mxu0
          %2065 = vmatprep.mubr.bf16.mxu0 0
          %2066 = vmatmul.mubr.bf16.gmra.mxu0 %v2020
          %v2067 = vpop.f32.mrf.mxu0
          %v2068 = vadd.f32 %v2010, %v2067
          %v2069 = vpop.f32.mrf.mxu0
          %v2070 = vpop.f32.mrf.mxu0
          %v2071 = vadd.f32 %v2013, %v2070
          %v2072 = vpop.f32.mrf.mxu0
          %2073 = vdwg.mxu0
          %v2074 = vpack.c.bf16 %v1524, %v1523
          %v2075 = vpack.c.bf16 %v1526, %v1525
          %2076 = vrot.lane.b32.xlu0 %v1763, 112
          %v2077 = vpop.permute.xlu0 %2076
          %v2080 = vsel %vm1177, %v2074, 0
          %2082 = vmatprep.subr.bf16.mxu0 0
          %2083 = vmatpush1.bf16.msra.mxu0 0
          %2084 = vmatprep.subr.bf16.mxu0 0
          %2085 = vmatpush1.bf16.msra.mxu0 0
          %2086 = vmatprep.subr.bf16.mxu0 0
          %2087 = vmatpush1.bf16.msra.mxu0 0
          %2088 = vmatprep.subr.bf16.mxu0 0
          %2089 = vmatpush1.bf16.msra.mxu0 0
          %2090 = vmatprep.subr.bf16.mxu0 0
          %2091 = vmatpush1.bf16.msra.mxu0 0
          %2092 = vmatprep.subr.bf16.mxu0 0
          %2093 = vmatpush1.bf16.msra.mxu0 0
          %2094 = vmatprep.subr.bf16.mxu0 0
          %2095 = vmatpush1.bf16.msra.mxu0 0
          %2096 = vmatprep.subr.bf16.mxu0 0
          %2097 = vmatpush1.bf16.msra.mxu0 %v2077
          %2098 = vmatprep.subr.bf16.mxu0 0
          %2099 = vmatpush2.bf16.msra.mxu0 0
          %2100 = vmatprep.subr.bf16.mxu0 0
          %2101 = vmatpush2.bf16.msra.mxu0 0
          %2102 = vmatprep.subr.bf16.mxu0 0
          %2103 = vmatpush2.bf16.msra.mxu0 0
          %2104 = vmatprep.subr.bf16.mxu0 0
          %2105 = vmatpush2.bf16.msra.mxu0 0
          %2106 = vmatprep.subr.bf16.mxu0 0
          %2107 = vmatpush2.bf16.msra.mxu0 0
          %2108 = vmatprep.subr.bf16.mxu0 0
          %2109 = vmatpush2.bf16.msra.mxu0 0
          %2110 = vmatprep.subr.bf16.mxu0 0
          %2111 = vmatpush2.bf16.msra.mxu0 0
          %2112 = vmatprep.subr.bf16.mxu0 0
          %2113 = vmatpush2.bf16.msra.mxu0 0
          %2114 = vmatprep.mubr.bf16.mxu0 0
          %2115 = vmatmul.mubr.bf16.gmra.mxu0 %v2080
          %v2116 = vpop.f32.mrf.mxu0
          %v2117 = vadd.f32 0.0, %v2116
          %v2118 = vpop.f32.mrf.mxu0
          %v2119 = vpop.f32.mrf.mxu0
          %v2120 = vadd.f32 0.0, %v2119
          %v2121 = vpop.f32.mrf.mxu0
          %2122 = vdwg.mxu0
          %2123 = vrot.lane.b32.xlu0 %v1764, 112
          %v2124 = vpop.permute.xlu0 %2123
          %v2127 = vsel %vm1177, %v2075, 0
          %2129 = vmatprep.subr.bf16.mxu0 0
          %2130 = vmatpush1.bf16.msra.mxu0 0
          %2131 = vmatprep.subr.bf16.mxu0 0
          %2132 = vmatpush1.bf16.msra.mxu0 0
          %2133 = vmatprep.subr.bf16.mxu0 0
          %2134 = vmatpush1.bf16.msra.mxu0 0
          %2135 = vmatprep.subr.bf16.mxu0 0
          %2136 = vmatpush1.bf16.msra.mxu0 0
          %2137 = vmatprep.subr.bf16.mxu0 0
          %2138 = vmatpush1.bf16.msra.mxu0 0
          %2139 = vmatprep.subr.bf16.mxu0 0
          %2140 = vmatpush1.bf16.msra.mxu0 0
          %2141 = vmatprep.subr.bf16.mxu0 0
          %2142 = vmatpush1.bf16.msra.mxu0 0
          %2143 = vmatprep.subr.bf16.mxu0 0
          %2144 = vmatpush1.bf16.msra.mxu0 %v2124
          %2145 = vmatprep.subr.bf16.mxu0 0
          %2146 = vmatpush2.bf16.msra.mxu0 0
          %2147 = vmatprep.subr.bf16.mxu0 0
          %2148 = vmatpush2.bf16.msra.mxu0 0
          %2149 = vmatprep.subr.bf16.mxu0 0
          %2150 = vmatpush2.bf16.msra.mxu0 0
          %2151 = vmatprep.subr.bf16.mxu0 0
          %2152 = vmatpush2.bf16.msra.mxu0 0
          %2153 = vmatprep.subr.bf16.mxu0 0
          %2154 = vmatpush2.bf16.msra.mxu0 0
          %2155 = vmatprep.subr.bf16.mxu0 0
          %2156 = vmatpush2.bf16.msra.mxu0 0
          %2157 = vmatprep.subr.bf16.mxu0 0
          %2158 = vmatpush2.bf16.msra.mxu0 0
          %2159 = vmatprep.subr.bf16.mxu0 0
          %2160 = vmatpush2.bf16.msra.mxu0 0
          %2161 = vmatprep.mubr.bf16.mxu0 0
          %2162 = vmatmul.mubr.bf16.gmra.mxu0 %v2127
          %v2163 = vpop.f32.mrf.mxu0
          %v2164 = vadd.f32 0.0, %v2163
          %v2165 = vpop.f32.mrf.mxu0
          %v2166 = vpop.f32.mrf.mxu0
          %v2167 = vadd.f32 0.0, %v2166
          %v2168 = vpop.f32.mrf.mxu0
          %2169 = vdwg.mxu0
          %v2170 = vpack.c.bf16 %v2120, %v2117
          %v2171 = vpack.c.bf16 %v2167, %v2164
          %v2173 = vsel %vm1082, %v2170, 0
          %v2176 = vsel %vm1082, %v2171, 0
          %v2179 = vsel %vm1963, %v1761, 0
          %2181 = vmatprep.subr.bf16.mxu0 0
          %2182 = vmatpush1.bf16.msra.mxu0 0
          %2183 = vmatprep.subr.bf16.mxu0 0
          %2184 = vmatpush1.bf16.msra.mxu0 0
          %2185 = vmatprep.subr.bf16.mxu0 0
          %2186 = vmatpush1.bf16.msra.mxu0 0
          %2187 = vmatprep.subr.bf16.mxu0 0
          %2188 = vmatpush1.bf16.msra.mxu0 0
          %2189 = vmatprep.subr.bf16.mxu0 0
          %2190 = vmatpush1.bf16.msra.mxu0 0
          %2191 = vmatprep.subr.bf16.mxu0 0
          %2192 = vmatpush1.bf16.msra.mxu0 0
          %2193 = vmatprep.subr.bf16.mxu0 0
          %2194 = vmatpush1.bf16.msra.mxu0 0
          %2195 = vmatprep.subr.bf16.mxu0 0
          %2196 = vmatpush1.bf16.msra.mxu0 %v2179
          %2197 = vmatprep.subr.bf16.mxu0 0
          %2198 = vmatpush2.bf16.msra.mxu0 0
          %2199 = vmatprep.subr.bf16.mxu0 0
          %2200 = vmatpush2.bf16.msra.mxu0 0
          %2201 = vmatprep.subr.bf16.mxu0 0
          %2202 = vmatpush2.bf16.msra.mxu0 0
          %2203 = vmatprep.subr.bf16.mxu0 0
          %2204 = vmatpush2.bf16.msra.mxu0 0
          %2205 = vmatprep.subr.bf16.mxu0 0
          %2206 = vmatpush2.bf16.msra.mxu0 0
          %2207 = vmatprep.subr.bf16.mxu0 0
          %2208 = vmatpush2.bf16.msra.mxu0 0
          %2209 = vmatprep.subr.bf16.mxu0 0
          %2210 = vmatpush2.bf16.msra.mxu0 0
          %2211 = vmatprep.subr.bf16.mxu0 0
          %2212 = vmatpush2.bf16.msra.mxu0 0
          %2213 = vmatprep.mubr.bf16.mxu0 0
          %2214 = vmatmul.mubr.bf16.gmra.mxu0 %v2173
          %v2215 = vpop.f32.mrf.mxu0
          %v2216 = vadd.f32 0.0, %v2215
          %v2217 = vpop.f32.mrf.mxu0
          %v2218 = vpop.f32.mrf.mxu0
          %v2219 = vadd.f32 0.0, %v2218
          %v2220 = vpop.f32.mrf.mxu0
          %2221 = vmatprep.mubr.bf16.mxu0 0
          %2222 = vmatmul.mubr.bf16.gmra.mxu0 %v2176
          %v2223 = vpop.f32.mrf.mxu0
          %v2224 = vadd.f32 0.0, %v2223
          %v2225 = vpop.f32.mrf.mxu0
          %v2226 = vpop.f32.mrf.mxu0
          %v2227 = vadd.f32 0.0, %v2226
          %v2228 = vpop.f32.mrf.mxu0
          %2229 = vdwg.mxu0
          %v2230 = vadd.f32 %v2060, %v2216
          %v2231 = vadd.f32 %v2063, %v2219
          %v2232 = vadd.f32 %v2068, %v2224
          %v2233 = vadd.f32 %v2071, %v2227
          %v2234 = vpack.c.bf16 %v1675, %v1674
          %v2235 = vpack.c.bf16 %v1677, %v1676
          %2236 = vrot.lane.b32.xlu0 %v1763, 104
          %v2237 = vpop.permute.xlu0 %2236
          %v2240 = vsel %vm1177, %v2234, 0
          %2242 = vmatprep.subr.bf16.mxu0 0
          %2243 = vmatpush1.bf16.msra.mxu0 0
          %2244 = vmatprep.subr.bf16.mxu0 0
          %2245 = vmatpush1.bf16.msra.mxu0 0
          %2246 = vmatprep.subr.bf16.mxu0 0
          %2247 = vmatpush1.bf16.msra.mxu0 0
          %2248 = vmatprep.subr.bf16.mxu0 0
          %2249 = vmatpush1.bf16.msra.mxu0 0
          %2250 = vmatprep.subr.bf16.mxu0 0
          %2251 = vmatpush1.bf16.msra.mxu0 0
          %2252 = vmatprep.subr.bf16.mxu0 0
          %2253 = vmatpush1.bf16.msra.mxu0 0
          %2254 = vmatprep.subr.bf16.mxu0 0
          %2255 = vmatpush1.bf16.msra.mxu0 0
          %2256 = vmatprep.subr.bf16.mxu0 0
          %2257 = vmatpush1.bf16.msra.mxu0 %v2237
          %2258 = vmatprep.subr.bf16.mxu0 0
          %2259 = vmatpush2.bf16.msra.mxu0 0
          %2260 = vmatprep.subr.bf16.mxu0 0
          %2261 = vmatpush2.bf16.msra.mxu0 0
          %2262 = vmatprep.subr.bf16.mxu0 0
          %2263 = vmatpush2.bf16.msra.mxu0 0
          %2264 = vmatprep.subr.bf16.mxu0 0
          %2265 = vmatpush2.bf16.msra.mxu0 0
          %2266 = vmatprep.subr.bf16.mxu0 0
          %2267 = vmatpush2.bf16.msra.mxu0 0
          %2268 = vmatprep.subr.bf16.mxu0 0
          %2269 = vmatpush2.bf16.msra.mxu0 0
          %2270 = vmatprep.subr.bf16.mxu0 0
          %2271 = vmatpush2.bf16.msra.mxu0 0
          %2272 = vmatprep.subr.bf16.mxu0 0
          %2273 = vmatpush2.bf16.msra.mxu0 0
          %2274 = vmatprep.mubr.bf16.mxu0 0
          %2275 = vmatmul.mubr.bf16.gmra.mxu0 %v2240
          %v2276 = vpop.f32.mrf.mxu0
          %v2277 = vadd.f32 0.0, %v2276
          %v2278 = vpop.f32.mrf.mxu0
          %v2279 = vpop.f32.mrf.mxu0
          %v2280 = vadd.f32 0.0, %v2279
          %v2281 = vpop.f32.mrf.mxu0
          %2282 = vdwg.mxu0
          %2283 = vrot.lane.b32.xlu0 %v1764, 104
          %v2284 = vpop.permute.xlu0 %2283
          %v2287 = vsel %vm1177, %v2235, 0
          %2289 = vmatprep.subr.bf16.mxu0 0
          %2290 = vmatpush1.bf16.msra.mxu0 0
          %2291 = vmatprep.subr.bf16.mxu0 0
          %2292 = vmatpush1.bf16.msra.mxu0 0
          %2293 = vmatprep.subr.bf16.mxu0 0
          %2294 = vmatpush1.bf16.msra.mxu0 0
          %2295 = vmatprep.subr.bf16.mxu0 0
          %2296 = vmatpush1.bf16.msra.mxu0 0
          %2297 = vmatprep.subr.bf16.mxu0 0
          %2298 = vmatpush1.bf16.msra.mxu0 0
          %2299 = vmatprep.subr.bf16.mxu0 0
          %2300 = vmatpush1.bf16.msra.mxu0 0
          %2301 = vmatprep.subr.bf16.mxu0 0
          %2302 = vmatpush1.bf16.msra.mxu0 0
          %2303 = vmatprep.subr.bf16.mxu0 0
          %2304 = vmatpush1.bf16.msra.mxu0 %v2284
          %2305 = vmatprep.subr.bf16.mxu0 0
          %2306 = vmatpush2.bf16.msra.mxu0 0
          %2307 = vmatprep.subr.bf16.mxu0 0
          %2308 = vmatpush2.bf16.msra.mxu0 0
          %2309 = vmatprep.subr.bf16.mxu0 0
          %2310 = vmatpush2.bf16.msra.mxu0 0
          %2311 = vmatprep.subr.bf16.mxu0 0
          %2312 = vmatpush2.bf16.msra.mxu0 0
          %2313 = vmatprep.subr.bf16.mxu0 0
          %2314 = vmatpush2.bf16.msra.mxu0 0
          %2315 = vmatprep.subr.bf16.mxu0 0
          %2316 = vmatpush2.bf16.msra.mxu0 0
          %2317 = vmatprep.subr.bf16.mxu0 0
          %2318 = vmatpush2.bf16.msra.mxu0 0
          %2319 = vmatprep.subr.bf16.mxu0 0
          %2320 = vmatpush2.bf16.msra.mxu0 0
          %2321 = vmatprep.mubr.bf16.mxu0 0
          %2322 = vmatmul.mubr.bf16.gmra.mxu0 %v2287
          %v2323 = vpop.f32.mrf.mxu0
          %v2324 = vadd.f32 0.0, %v2323
          %v2325 = vpop.f32.mrf.mxu0
          %v2326 = vpop.f32.mrf.mxu0
          %v2327 = vadd.f32 0.0, %v2326
          %v2328 = vpop.f32.mrf.mxu0
          %2329 = vdwg.mxu0
          %v2330 = vpack.c.bf16 %v2280, %v2277
          %v2331 = vpack.c.bf16 %v2327, %v2324
          %v2333 = vsel %vm1082, %v2330, 0
          %v2336 = vsel %vm1082, %v2331, 0
          %v2339 = vsel %vm1963, %v1762, 0
          %2341 = vmatprep.subr.bf16.mxu0 0
          %2342 = vmatpush1.bf16.msra.mxu0 0
          %2343 = vmatprep.subr.bf16.mxu0 0
          %2344 = vmatpush1.bf16.msra.mxu0 0
          %2345 = vmatprep.subr.bf16.mxu0 0
          %2346 = vmatpush1.bf16.msra.mxu0 0
          %2347 = vmatprep.subr.bf16.mxu0 0
          %2348 = vmatpush1.bf16.msra.mxu0 0
          %2349 = vmatprep.subr.bf16.mxu0 0
          %2350 = vmatpush1.bf16.msra.mxu0 0
          %2351 = vmatprep.subr.bf16.mxu0 0
          %2352 = vmatpush1.bf16.msra.mxu0 0
          %2353 = vmatprep.subr.bf16.mxu0 0
          %2354 = vmatpush1.bf16.msra.mxu0 0
          %2355 = vmatprep.subr.bf16.mxu0 0
          %2356 = vmatpush1.bf16.msra.mxu0 %v2339
          %2357 = vmatprep.subr.bf16.mxu0 0
          %2358 = vmatpush2.bf16.msra.mxu0 0
          %2359 = vmatprep.subr.bf16.mxu0 0
          %2360 = vmatpush2.bf16.msra.mxu0 0
          %2361 = vmatprep.subr.bf16.mxu0 0
          %2362 = vmatpush2.bf16.msra.mxu0 0
          %2363 = vmatprep.subr.bf16.mxu0 0
          %2364 = vmatpush2.bf16.msra.mxu0 0
          %2365 = vmatprep.subr.bf16.mxu0 0
          %2366 = vmatpush2.bf16.msra.mxu0 0
          %2367 = vmatprep.subr.bf16.mxu0 0
          %2368 = vmatpush2.bf16.msra.mxu0 0
          %2369 = vmatprep.subr.bf16.mxu0 0
          %2370 = vmatpush2.bf16.msra.mxu0 0
          %2371 = vmatprep.subr.bf16.mxu0 0
          %2372 = vmatpush2.bf16.msra.mxu0 0
          %2373 = vmatprep.mubr.bf16.mxu0 0
          %2374 = vmatmul.mubr.bf16.gmra.mxu0 %v2333
          %v2375 = vpop.f32.mrf.mxu0
          %v2376 = vadd.f32 0.0, %v2375
          %v2377 = vpop.f32.mrf.mxu0
          %v2378 = vpop.f32.mrf.mxu0
          %v2379 = vadd.f32 0.0, %v2378
          %v2380 = vpop.f32.mrf.mxu0
          %2381 = vmatprep.mubr.bf16.mxu0 0
          %2382 = vmatmul.mubr.bf16.gmra.mxu0 %v2336
          %v2383 = vpop.f32.mrf.mxu0
          %v2384 = vadd.f32 0.0, %v2383
          %v2385 = vpop.f32.mrf.mxu0
          %v2386 = vpop.f32.mrf.mxu0
          %v2387 = vadd.f32 0.0, %v2386
          %v2388 = vpop.f32.mrf.mxu0
          %2389 = vdwg.mxu0
          %v2390 = vadd.f32 %v2230, %v2376
          %v2391 = vadd.f32 %v2231, %v2379
          %v2392 = vadd.f32 %v2232, %v2384
          %v2393 = vadd.f32 %v2233, %v2387
          %v2394 = vld [vmem:[%s890] sm:$0x1]
          %v2396 = vlaneseq
          %v2397 = vshrl.u32 %v2396, 7
          %v2398 = vsub.s32 0, %v2397
          %v2399 = vrot.slane %v2394, %v2398
          %v2401 = vadd.f32 %v2390, %v2399
          %v2402 = vadd.f32 %v2391, %v2399
          %v2403 = vadd.f32 %v2392, %v2399
          %v2404 = vadd.f32 %v2393, %v2399
          %v2405 = vadd.f32 %v2401, %v917
          %v2406 = vadd.f32 %v2402, %v918
          %v2407 = vadd.f32 %v2403, %v919
          %v2408 = vadd.f32 %v2404, %v920
          %v2409 = vld [vmem:[%s893] sm:$0x1]
          %v2410 = vld [vmem:[%s896] sm:$0x1]
          %v2411 = vsel %vm946, %v2405, 0.0
          %2412 = vadd.xlane.f32.xlu0 %v2411
          %v2413 = vpop.xlane.xlu0 %2412
          %v2414 = vsel %vm946, %v2406, 0.0
          %2415 = vadd.xlane.f32.xlu0 %v2414
          %v2416 = vpop.xlane.xlu0 %2415
          %v2417 = vsel %vm946, %v2407, 0.0
          %2418 = vadd.xlane.f32.xlu0 %v2417
          %v2419 = vpop.xlane.xlu0 %2418
          %v2420 = vsel %vm946, %v2408, 0.0
          %2421 = vadd.xlane.f32.xlu0 %v2420
          %v2422 = vpop.xlane.xlu0 %2421
          %v2423 = vrcp.pop 32.0
          %v2424 = vmul.f32 %v2413, %v2423
          %v2425 = vmul.f32 %v2416, %v2423
          %v2426 = vmul.f32 %v2419, %v2423
          %v2427 = vmul.f32 %v2422, %v2423
          %v2428 = vsub.f32 %v2405, %v2424
          %v2429 = vsub.f32 %v2406, %v2425
          %v2430 = vsub.f32 %v2407, %v2426
          %v2431 = vsub.f32 %v2408, %v2427
          %v2432 = vmul.f32 %v2428, %v2428
          %v2433 = vmul.f32 %v2429, %v2429
          %v2434 = vmul.f32 %v2430, %v2430
          %v2435 = vmul.f32 %v2431, %v2431
          %v2436 = vsel %vm946, %v2432, 0.0
          %2437 = vadd.xlane.f32.xlu0 %v2436
          %v2438 = vpop.xlane.xlu0 %2437
          %v2439 = vsel %vm946, %v2433, 0.0
          %2440 = vadd.xlane.f32.xlu0 %v2439
          %v2441 = vpop.xlane.xlu0 %2440
          %v2442 = vsel %vm946, %v2434, 0.0
          %2443 = vadd.xlane.f32.xlu0 %v2442
          %v2444 = vpop.xlane.xlu0 %2443
          %v2445 = vsel %vm946, %v2435, 0.0
          %2446 = vadd.xlane.f32.xlu0 %v2445
          %v2447 = vpop.xlane.xlu0 %2446
          %v2448 = vmul.f32 %v2438, %v2423
          %v2449 = vmul.f32 %v2441, %v2423
          %v2450 = vmul.f32 %v2444, %v2423
          %v2451 = vmul.f32 %v2447, %v2423
          %v2452 = vadd.f32 %v2448, 1e-05
          %v2453 = vadd.f32 %v2449, 1e-05
          %v2454 = vadd.f32 %v2450, 1e-05
          %v2455 = vadd.f32 %v2451, 1e-05
          %v2456 = vrsqrt.pop %v2452
          %v2457 = vrsqrt.pop %v2453
          %v2458 = vrsqrt.pop %v2454
          %v2459 = vrsqrt.pop %v2455
          %v2460 = vmul.f32 %v2428, %v2456
          %v2461 = vmul.f32 %v2429, %v2457
          %v2462 = vmul.f32 %v2430, %v2458
          %v2463 = vmul.f32 %v2431, %v2459
          %v2465 = vlaneseq
          %v2466 = vshrl.u32 %v2465, 7
          %v2467 = vsub.s32 0, %v2466
          %v2468 = vrot.slane %v2409, %v2467
          %v2470 = vmul.f32 %v2460, %v2468
          %v2471 = vmul.f32 %v2461, %v2468
          %v2472 = vmul.f32 %v2462, %v2468
          %v2473 = vmul.f32 %v2463, %v2468
          %v2475 = vlaneseq
          %v2476 = vshrl.u32 %v2475, 7
          %v2477 = vsub.s32 0, %v2476
          %v2478 = vrot.slane %v2410, %v2477
          %v2480 = vadd.f32 %v2470, %v2478
          %v2481 = vadd.f32 %v2471, %v2478
          %v2482 = vadd.f32 %v2472, %v2478
          %v2483 = vadd.f32 %v2473, %v2478
          %v2484 = vpack.c.bf16 %v2481, %v2480
          %v2485 = vpack.c.bf16 %v2483, %v2482
          %v2486 = vld [vmem:[%s748] sm:$0xf]
          %v2487 = vld [vmem:[%s748 + $0x4] sm:$0xf]
          %v2488 = vld [vmem:[%s748 + $0x8] sm:$0xf]
          %v2489 = vld [vmem:[%s748 + $0xc] sm:$0xf]
          %v2490 = vld [vmem:[%s899] sm:$0x1]
          %v2492 = vlaneseq
          %v2493 = vshrl.u32 %v2492, 7
          %v2494 = vsub.s32 0, %v2493
          %v2495 = vrot.slane %v2490, %v2494
          %v2501 = vunpack.c.l.b16 %v2486
          %v2502 = vunpack.c.l.b16 %v2487
          %v2503 = vunpack.c.l.b16 %v2488
          %v2504 = vunpack.c.l.b16 %v2489
          %v2505 = vpack.c.b16 %v2502, %v2501
          %v2506 = vpack.c.b16 %v2504, %v2503
          %v2510 = vsel %vm946, %v2484, 0
          %v2513 = vsel %vm946, %v2485, 0
          %2515 = vmatprep.subr.bf16.mxu0 0
          %2516 = vmatpush1.bf16.msra.mxu0 0
          %2517 = vmatprep.subr.bf16.mxu0 0
          %2518 = vmatpush1.bf16.msra.mxu0 0
          %2519 = vmatprep.subr.bf16.mxu0 0
          %2520 = vmatpush1.bf16.msra.mxu0 0
          %2521 = vmatprep.subr.bf16.mxu0 0
          %2522 = vmatpush1.bf16.msra.mxu0 0
          %2523 = vmatprep.subr.bf16.mxu0 0
          %2524 = vmatpush1.bf16.msra.mxu0 0
          %2525 = vmatprep.subr.bf16.mxu0 0
          %2526 = vmatpush1.bf16.msra.mxu0 0
          %2527 = vmatprep.subr.bf16.mxu0 0
          %2528 = vmatpush1.bf16.msra.mxu0 %v2506
          %2529 = vmatprep.subr.bf16.mxu0 0
          %2530 = vmatpush1.bf16.msra.mxu0 %v2505
          %2531 = vmatprep.subr.bf16.mxu0 0
          %2532 = vmatpush2.bf16.msra.mxu0 0
          %2533 = vmatprep.subr.bf16.mxu0 0
          %2534 = vmatpush2.bf16.msra.mxu0 0
          %2535 = vmatprep.subr.bf16.mxu0 0
          %2536 = vmatpush2.bf16.msra.mxu0 0
          %2537 = vmatprep.subr.bf16.mxu0 0
          %2538 = vmatpush2.bf16.msra.mxu0 0
          %2539 = vmatprep.subr.bf16.mxu0 0
          %2540 = vmatpush2.bf16.msra.mxu0 0
          %2541 = vmatprep.subr.bf16.mxu0 0
          %2542 = vmatpush2.bf16.msra.mxu0 0
          %2543 = vmatprep.subr.bf16.mxu0 0
          %2544 = vmatpush2.bf16.msra.mxu0 0
          %2545 = vmatprep.subr.bf16.mxu0 0
          %2546 = vmatpush2.bf16.msra.mxu0 0
          %2547 = vmatprep.mubr.bf16.mxu0 0
          %2548 = vmatmul.mubr.bf16.gmra.mxu0 %v2510
          %v2549 = vpop.f32.mrf.mxu0
          %v2550 = vadd.f32 %v2495, %v2549
          %v2551 = vpop.f32.mrf.mxu0
          %v2552 = vpop.f32.mrf.mxu0
          %v2553 = vadd.f32 %v2495, %v2552
          %v2554 = vpop.f32.mrf.mxu0
          %2555 = vmatprep.mubr.bf16.mxu0 0
          %2556 = vmatmul.mubr.bf16.gmra.mxu0 %v2513
          %v2557 = vpop.f32.mrf.mxu0
          %v2558 = vadd.f32 %v2495, %v2557
          %v2559 = vpop.f32.mrf.mxu0
          %v2560 = vpop.f32.mrf.mxu0
          %v2561 = vadd.f32 %v2495, %v2560
          %v2562 = vpop.f32.mrf.mxu0
          %2563 = vdwg.mxu0
          %v2564 = vmax.f32 %v2550, 0.0
          %v2565 = vmax.f32 %v2553, 0.0
          %v2566 = vmax.f32 %v2558, 0.0
          %v2567 = vmax.f32 %v2561, 0.0
          %v2568 = vpack.c.bf16 %v2565, %v2564
          %v2569 = vpack.c.bf16 %v2567, %v2566
          %v2570 = vld [vmem:[%s904] sm:$0xf]
          %v2571 = vld [vmem:[%s904 + $0x4] sm:$0xf]
          %v2572 = vld [vmem:[%s904 + $0x8] sm:$0xf]
          %v2573 = vld [vmem:[%s904 + $0xc] sm:$0xf]
          %v2574 = vld [vmem:[%s904 + $0x10] sm:$0xf]
          %v2575 = vld [vmem:[%s904 + $0x14] sm:$0xf]
          %v2576 = vld [vmem:[%s904 + $0x18] sm:$0xf]
          %v2577 = vld [vmem:[%s904 + $0x1c] sm:$0xf]
          %v2578 = vld [vmem:[%s907] sm:$0x1]
          %v2580 = vlaneseq
          %v2581 = vshrl.u32 %v2580, 7
          %v2582 = vsub.s32 0, %v2581
          %v2583 = vrot.slane %v2578, %v2582
          %v2593 = vunpack.c.l.b16 %v2570
          %v2594 = vunpack.c.l.b16 %v2571
          %v2595 = vunpack.c.l.b16 %v2572
          %v2596 = vunpack.c.l.b16 %v2573
          %v2597 = vunpack.c.l.b16 %v2574
          %v2598 = vunpack.c.l.b16 %v2575
          %v2599 = vunpack.c.l.b16 %v2576
          %v2600 = vunpack.c.l.b16 %v2577
          %v2601 = vpack.c.b16 %v2594, %v2593
          %v2602 = vpack.c.b16 %v2596, %v2595
          %v2603 = vpack.c.b16 %v2598, %v2597
          %v2604 = vpack.c.b16 %v2600, %v2599
          %vm2609 = vcmask 523264
          %v2611 = vsel %vm2609, %v2568, 0
          %v2614 = vsel %vm2609, %v2569, 0
          %2616 = vmatprep.subr.bf16.mxu0 0
          %2617 = vmatpush1.bf16.msra.mxu0 0
          %2618 = vmatprep.subr.bf16.mxu0 0
          %2619 = vmatpush1.bf16.msra.mxu0 0
          %2620 = vmatprep.subr.bf16.mxu0 0
          %2621 = vmatpush1.bf16.msra.mxu0 0
          %2622 = vmatprep.subr.bf16.mxu0 0
          %2623 = vmatpush1.bf16.msra.mxu0 0
          %2624 = vmatprep.subr.bf16.mxu0 0
          %2625 = vmatpush1.bf16.msra.mxu0 %v2604
          %2626 = vmatprep.subr.bf16.mxu0 0
          %2627 = vmatpush1.bf16.msra.mxu0 %v2603
          %2628 = vmatprep.subr.bf16.mxu0 0
          %2629 = vmatpush1.bf16.msra.mxu0 %v2602
          %2630 = vmatprep.subr.bf16.mxu0 0
          %2631 = vmatpush1.bf16.msra.mxu0 %v2601
          %2632 = vmatprep.subr.bf16.mxu0 0
          %2633 = vmatpush2.bf16.msra.mxu0 0
          %2634 = vmatprep.subr.bf16.mxu0 0
          %2635 = vmatpush2.bf16.msra.mxu0 0
          %2636 = vmatprep.subr.bf16.mxu0 0
          %2637 = vmatpush2.bf16.msra.mxu0 0
          %2638 = vmatprep.subr.bf16.mxu0 0
          %2639 = vmatpush2.bf16.msra.mxu0 0
          %2640 = vmatprep.subr.bf16.mxu0 0
          %2641 = vmatpush2.bf16.msra.mxu0 0
          %2642 = vmatprep.subr.bf16.mxu0 0
          %2643 = vmatpush2.bf16.msra.mxu0 0
          %2644 = vmatprep.subr.bf16.mxu0 0
          %2645 = vmatpush2.bf16.msra.mxu0 0
          %2646 = vmatprep.subr.bf16.mxu0 0
          %2647 = vmatpush2.bf16.msra.mxu0 0
          %2648 = vmatprep.mubr.bf16.mxu0 0
          %2649 = vmatmul.mubr.bf16.gmra.mxu0 %v2611
          %v2650 = vpop.f32.mrf.mxu0
          %v2651 = vadd.f32 %v2583, %v2650
          %v2652 = vpop.f32.mrf.mxu0
          %v2653 = vpop.f32.mrf.mxu0
          %v2654 = vadd.f32 %v2583, %v2653
          %v2655 = vpop.f32.mrf.mxu0
          %2656 = vmatprep.mubr.bf16.mxu0 0
          %2657 = vmatmul.mubr.bf16.gmra.mxu0 %v2614
          %v2658 = vpop.f32.mrf.mxu0
          %v2659 = vadd.f32 %v2583, %v2658
          %v2660 = vpop.f32.mrf.mxu0
          %v2661 = vpop.f32.mrf.mxu0
          %v2662 = vadd.f32 %v2583, %v2661
          %v2663 = vpop.f32.mrf.mxu0
          %2664 = vdwg.mxu0
          %v2665 = vadd.f32 %v2651, %v2480
          %v2666 = vadd.f32 %v2654, %v2481
          %v2667 = vadd.f32 %v2659, %v2482
          %v2668 = vadd.f32 %v2662, %v2483
          %v2669 = vld [vmem:[%s910] sm:$0x1]
          %v2670 = vld [vmem:[%s913] sm:$0x1]
          %v2671 = vsel %vm946, %v2665, 0.0
          %2672 = vadd.xlane.f32.xlu0 %v2671
          %v2673 = vpop.xlane.xlu0 %2672
          %v2674 = vsel %vm946, %v2666, 0.0
          %2675 = vadd.xlane.f32.xlu0 %v2674
          %v2676 = vpop.xlane.xlu0 %2675
          %v2677 = vsel %vm946, %v2667, 0.0
          %2678 = vadd.xlane.f32.xlu0 %v2677
          %v2679 = vpop.xlane.xlu0 %2678
          %v2680 = vsel %vm946, %v2668, 0.0
          %2681 = vadd.xlane.f32.xlu0 %v2680
          %v2682 = vpop.xlane.xlu0 %2681
          %v2683 = vmul.f32 %v2673, %v2423
          %v2684 = vmul.f32 %v2676, %v2423
          %v2685 = vmul.f32 %v2679, %v2423
          %v2686 = vmul.f32 %v2682, %v2423
          %v2687 = vsub.f32 %v2665, %v2683
          %v2688 = vsub.f32 %v2666, %v2684
          %v2689 = vsub.f32 %v2667, %v2685
          %v2690 = vsub.f32 %v2668, %v2686
          %v2691 = vmul.f32 %v2687, %v2687
          %v2692 = vmul.f32 %v2688, %v2688
          %v2693 = vmul.f32 %v2689, %v2689
          %v2694 = vmul.f32 %v2690, %v2690
          %v2695 = vsel %vm946, %v2691, 0.0
          %2696 = vadd.xlane.f32.xlu0 %v2695
          %v2697 = vpop.xlane.xlu0 %2696
          %v2698 = vsel %vm946, %v2692, 0.0
          %2699 = vadd.xlane.f32.xlu0 %v2698
          %v2700 = vpop.xlane.xlu0 %2699
          %v2701 = vsel %vm946, %v2693, 0.0
          %2702 = vadd.xlane.f32.xlu0 %v2701
          %v2703 = vpop.xlane.xlu0 %2702
          %v2704 = vsel %vm946, %v2694, 0.0
          %2705 = vadd.xlane.f32.xlu0 %v2704
          %v2706 = vpop.xlane.xlu0 %2705
          %v2707 = vmul.f32 %v2697, %v2423
          %v2708 = vmul.f32 %v2700, %v2423
          %v2709 = vmul.f32 %v2703, %v2423
          %v2710 = vmul.f32 %v2706, %v2423
          %v2711 = vadd.f32 %v2707, 1e-05
          %v2712 = vadd.f32 %v2708, 1e-05
          %v2713 = vadd.f32 %v2709, 1e-05
          %v2714 = vadd.f32 %v2710, 1e-05
          %v2715 = vrsqrt.pop %v2711
          %v2716 = vrsqrt.pop %v2712
          %v2717 = vrsqrt.pop %v2713
          %v2718 = vrsqrt.pop %v2714
          %v2719 = vmul.f32 %v2687, %v2715
          %v2720 = vmul.f32 %v2688, %v2716
          %v2721 = vmul.f32 %v2689, %v2717
          %v2722 = vmul.f32 %v2690, %v2718
          %v2724 = vlaneseq
          %v2725 = vshrl.u32 %v2724, 7
          %v2726 = vsub.s32 0, %v2725
          %v2727 = vrot.slane %v2669, %v2726
          %v2729 = vmul.f32 %v2719, %v2727
          %v2730 = vmul.f32 %v2720, %v2727
          %v2731 = vmul.f32 %v2721, %v2727
          %v2732 = vmul.f32 %v2722, %v2727
          %v2734 = vlaneseq
          %v2735 = vshrl.u32 %v2734, 7
          %v2736 = vsub.s32 0, %v2735
          %v2737 = vrot.slane %v2670, %v2736
          %v2739 = vadd.f32 %v2729, %v2737
          %v2740 = vadd.f32 %v2730, %v2737
          %v2741 = vadd.f32 %v2731, %v2737
          %v2742 = vadd.f32 %v2732, %v2737
          %2743 = vst.msk [vmem:[#allocation8] sm:$0xff] %vm946, %v2739
          %2744 = vst.msk [vmem:[#allocation8 + $0x8] sm:$0xff] %vm946, %v2740
          %2745 = vst.msk [vmem:[#allocation8 + $0x10] sm:$0xff] %vm946, %v2741
          %2746 = vst.msk [vmem:[#allocation8 + $0x18] sm:$0xff] %vm946, %v2742
        $region104: #{tpu_custom_call.1} parent=87 // pred_fallthru
          _
        %s2747 = sand.u32 %s530, 1
        %s2748 = scalar_lea.sflag [#allocation10], %s2747
        %s2749 = sand.u32 %s530, 1
        %s2750 = smul.addr %s2749, 128
        %s2751 = scalar_lea.vmem [#allocation9], %s2750
        // Predicated region
        $region105: #{tpu_custom_call.1} parent=87 // pred_check
          %p2752 = pneg %p512
        $region106: #{tpu_custom_call.1} parent=87 // pred_check_branch
          %2754 = sbr.rel (%p2752) target = $region108
        $region107: #{tpu_custom_call.1} parent=87 // pred_region
          %s2755 = smul.u32 2, %s45
          %s2757 = ssub.s32 512, 512
          %2758 = vsyncadd [#allocation4], %s2757
          %s2759 = smul.addr %s2755, 2
          %s2760 = smul.addr %s2759, 128
          %s2761 = scalar_lea.hbm %s17, %s2760
          %s2762 = sshll.u32 [#allocation8], 4
          %s2763 = int_to_ptr.vmem [resolvable:$true] %s2762
          %2768 = dma.vmem_to_hbm [thread:$0]  %s2763, 512, %s2761, [#allocation4], 128, 128, 8
        $region108: #{tpu_custom_call.1} parent=87 // pred_fallthru
          _
        // Predicated region
        $region109: #{tpu_custom_call.1} parent=87 // pred_check
          %p2769 = pneg %p540
        $region110: #{tpu_custom_call.1} parent=87 // pred_check_branch
          %2771 = sbr.rel (%p2769) target = $region112
        $region111: #{tpu_custom_call.1} parent=87 // pred_region
          %s2772 = smul.u32 2, %s45
          %s2774 = ssub.s32 2048, 2048
          %2775 = vsyncadd %s2748, %s2774
          %s2776 = smul.addr %s2772, 8
          %s2777 = smul.addr %s44, 16
          %s2778 = sadd.s32 %s2776, %s2777
          %s2779 = smul.addr %s2778, 128
          %s2780 = scalar_lea.hbm %s18, %s2779
          %s2781 = sshll.u32 %s2751, 4
          %s2782 = int_to_ptr.vmem [resolvable:$true] %s2781
          %2787 = dma.vmem_to_hbm [thread:$0]  %s2782, 2048, %s2780, %s2748, 128, 128, 8
        $region112: #{tpu_custom_call.1} parent=87 // pred_fallthru
          _
        // Predicated region
        $region113: #{tpu_custom_call.1} parent=87 // pred_check
          %p2788 = pneg %p512
        $region114: #{tpu_custom_call.1} parent=87 // pred_check_branch
          %2790 = sbr.rel (%p2788) target = $region116
        $region115: #{tpu_custom_call.1} parent=87 // pred_region
          %2791 = dma.done [#allocation4], 512
        $region116: #{tpu_custom_call.1} parent=87 // pred_fallthru
          _
      $region88: #{tpu_custom_call.1} parent=5 // pred_fallthru
        _
      %p2792 = scmp.le.s32.totalorder 2, %s35
      // Predicated region
      $region117: #{tpu_custom_call.1} parent=5 // pred_check
        %p2793 = pneg %p2792
      $region118: #{tpu_custom_call.1} parent=5 // pred_check_branch
        %2795 = sbr.rel (%p2793) target = $region120
      $region119: #{tpu_custom_call.1} parent=5 // pred_region
        %s2796 = ssub.s32 %s35, 2
        // Predicated region
        $region121: #{tpu_custom_call.1} parent=119 // pred_check
          %p2797 = pneg %p546
        $region122: #{tpu_custom_call.1} parent=119 // pred_check_branch
          %2799 = sbr.rel (%p2797) target = $region124
        $region123: #{tpu_custom_call.1} parent=119 // pred_region
          %s2800 = sand.u32 %s531, 1
          %s2801 = scalar_lea.sflag [#allocation10], %s2800
          %s2802 = sand.u32 %s531, 1
          %s2803 = smul.addr %s2802, 128
          %s2804 = scalar_lea.vmem [#allocation9], %s2803
          %2805 = dma.done %s2801, 2048
        $region124: #{tpu_custom_call.1} parent=119 // pred_fallthru
          _
      $region120: #{tpu_custom_call.1} parent=5 // pred_fallthru
        _
    $region6: #{tpu_custom_call.1} parent=1 // loop_footer
      %s39 = sadd.s32 1, %s35
    $region7: #{tpu_custom_call.1} parent=1 // loop_footer_branch
      %34 = sbr.rel target = $region3
    $region8: #{tpu_custom_call.1} parent=1 // loop_exit
      _
    %2806 = vsyncpa [#allocation3], 1
    %s2807 = scalar_lea.sflag [#allocation3], 1
    %2808 = vsyncpa %s2807, 1
    %2809 = vsyncpa [#allocation6], 1
    %s2810 = scalar_lea.sflag [#allocation6], 1
    %2811 = vsyncpa %s2810, 1
    %2812 = vsyncpa [#allocation4], 1
    %s2813 = scalar_lea.sflag [#allocation4], 1
    %2814 = vsyncpa %s2813, 1
    %2815 = vsyncpa [#allocation10], 1
    %s2816 = scalar_lea.sflag [#allocation10], 1
    %2817 = vsyncpa %s2816, 1

</llo_original>
